<compile_context>
chip_gen: v7x
topology: tpu7x:2x2x1
jax: 0.10.0
libtpu: 0.0.40
codegen_flags: <defaults>
</compile_context>

<pallas_src>
import jax
import jax.numpy as jnp
from jax.experimental import pallas as pl
from jax.experimental.pallas import tpu as pltpu


def attcnn_kernel(cols_ref, w1_ref, b1_ref, pa_ref, w2k_ref, b2_ref,
                  sw1_ref, sb1_ref, sw2_ref, sb2_ref,
                  o_ref, pad_ref, hm_ref):
    Hb, Wb, C1 = pad_ref.shape            # (H+2, W+8, C1) conv2 input buffer
    _, Ho, Wo, C2 = o_ref.shape
    H, W = 2 * Ho, 2 * Wo

    # ---- conv1 + bias + PReLU: one matmul over the (H, Wb) padded output grid ----
    y1 = jnp.dot(cols_ref[0], w1_ref[...], preferred_element_type=jnp.float32)
    y1 = y1 + b1_ref[...]
    alpha = pa_ref[0, 0]                                   # PReLU weight (SMEM scalar)
    y1 = jnp.where(y1 > 0.0, y1, y1 * alpha)

    # Zero the horizontal halo columns (wp == 0 or wp > W) so pad_ref carries
    # conv2's 'SAME' zero padding without masked window stores.
    y1 = y1.reshape(H, Wb, C1)
    wp = jax.lax.broadcasted_iota(jnp.int32, (H, Wb, C1), 1)
    y1 = jnp.where((wp >= 1) & (wp <= W), y1, 0.0)

    # Full-width, unmasked stores: interior rows + the two zero halo rows.
    pad_ref[1:H + 1, :, :] = y1.astype(pad_ref.dtype)
    zero_row = jnp.zeros((1, Wb, C1), pad_ref.dtype)
    pad_ref[0:1, :, :] = zero_row
    pad_ref[Hb - 1:Hb, :, :] = zero_row

    # ---- conv2: 3 matmuls (one per kx tap column), each contracting K = 3*C1 ----
    acc2 = None
    for kx in range(3):
        patch = jnp.concatenate(
            [pad_ref[ky:ky + H, kx:kx + W, :] for ky in range(3)],
            axis=-1).reshape(H * W, 3 * C1)
        part = jnp.dot(patch, w2k_ref[kx], preferred_element_type=jnp.float32)
        acc2 = part if acc2 is None else acc2 + part
    acc2 = acc2 + b2_ref[...]

    # ---- maxpool 2x2 stride 2 ----
    y2 = acc2.reshape(H, W, C2)
    hmax = jnp.max(y2.reshape(Ho, 2, W, C2), axis=1)       # row pairs: major-dim split
    hm_ref[...] = hmax
    pooled = jnp.maximum(hm_ref[:, pl.ds(0, Wo, stride=2), :],   # column pairs via
                         hm_ref[:, pl.ds(1, Wo, stride=2), :])   # sublane-strided loads
    pooled_flat = pooled.reshape(Ho * Wo, C2)

    # ---- squeeze-excite: GAP -> 1x1 conv -> ReLU -> 1x1 conv -> sigmoid ----
    s = jnp.sum(pooled_flat, axis=0, keepdims=True) * (1.0 / (Ho * Wo))
    z1 = jnp.maximum(
        jnp.dot(s, sw1_ref[...], preferred_element_type=jnp.float32) + sb1_ref[...],
        0.0)
    z2 = jax.nn.sigmoid(
        jnp.dot(z1, sw2_ref[...], preferred_element_type=jnp.float32) + sb2_ref[...])

    # ---- channel re-weighting; lane-dense (C2 = 128) output store ----
    o_ref[0] = (pooled_flat * z2).reshape(Ho, Wo, C2)


def attcnn_forward(x_nchw, params):
    (w1, b1, pa, w2, b2, sw1, sb1, sw2, sb2) = params
    B, Cin, H, W = x_nchw.shape
    assert H % 2 == 0 and W % 2 == 0, "2x2/2 maxpool assumes even spatial dims"
    C1, C2, Cr = w1.shape[3], w2.shape[3], sw1.shape[1]
    Ho, Wo = H // 2, W // 2
    Wb = W + 8                       # conv2 buffer width: halo + data, kept 8-aligned
    Kp = ((9 * Cin + 7) // 8) * 8    # conv1 im2col K (27) padded to 32

    x = jnp.transpose(x_nchw, (0, 2, 3, 1)).astype(jnp.float32)   # -> NHWC

    # conv1 im2col over the (H, Wb) padded output grid:
    #   cols[b, h*Wb + wp, (ky*3+kx)*Cin + ci] = x[b, h+ky-1, (wp-1)+kx-1, ci]
    xp = jnp.pad(x, ((0, 0), (1, 1), (2, Wb - W), (0, 0)))
    taps = [xp[:, ky:ky + H, kx:kx + Wb, :] for ky in range(3) for kx in range(3)]
    cols = jnp.concatenate(taps, axis=-1).reshape(B, H * Wb, 9 * Cin)
    cols = jnp.pad(cols, ((0, 0), (0, 0), (0, Kp - 9 * Cin)))

    # MXU operands in bf16; accumulation and all elementwise math stay f32.
    cols_bf = cols.astype(jnp.bfloat16)
    w1_mat = jnp.pad(w1.reshape(9 * Cin, C1),
                     ((0, Kp - 9 * Cin), (0, 0))).astype(jnp.bfloat16)
    # conv2 weights grouped per kx tap column: w2_kx[kx, ky*C1 + ci, co]
    w2_kx = jnp.transpose(w2, (1, 0, 2, 3)).reshape(3, 3 * C1, C2).astype(jnp.bfloat16)

    out_nhwc = pl.pallas_call(
        attcnn_kernel,
        out_shape=jax.ShapeDtypeStruct((B, Ho, Wo, C2), jnp.float32),
        grid_spec=pltpu.PrefetchScalarGridSpec(
            num_scalar_prefetch=0,
            grid=(B,),
            in_specs=[
                pl.BlockSpec((1, H * Wb, Kp), lambda b: (b, 0, 0)),
                pl.BlockSpec((Kp, C1), lambda b: (0, 0)),
                pl.BlockSpec((1, C1), lambda b: (0, 0)),
                pl.BlockSpec(memory_space=pltpu.MemorySpace.SMEM),   # PReLU alpha
                pl.BlockSpec((3, 3 * C1, C2), lambda b: (0, 0, 0)),
                pl.BlockSpec((1, C2), lambda b: (0, 0)),
                pl.BlockSpec((C2, Cr), lambda b: (0, 0)),
                pl.BlockSpec((1, Cr), lambda b: (0, 0)),
                pl.BlockSpec((Cr, C2), lambda b: (0, 0)),
                pl.BlockSpec((1, C2), lambda b: (0, 0)),
            ],
            out_specs=pl.BlockSpec((1, Ho, Wo, C2), lambda b: (b, 0, 0, 0)),
            scratch_shapes=[
                pltpu.VMEM((H + 2, Wb, C1), jnp.bfloat16),   # zero-padded conv1 output
                pltpu.VMEM((Ho, W, C2), jnp.float32),        # row-pooled conv2 output
            ],
        ),
        # batch items are independent -> parallel lets v7x's two TCs split the grid
        compiler_params=pltpu.CompilerParams(dimension_semantics=("parallel",)),
    )(cols_bf, w1_mat, b1, pa, w2_kx, b2, sw1, sb1, sw2, sb2)

    return jnp.transpose(out_nhwc, (0, 3, 1, 2))   # back to NCHW


def init_params(key):
    Cin, C1, C2, Cr = 3, 64, 128, 128 // 16
    ks = jax.random.split(key, 8)
    w1 = jax.random.normal(ks[0], (3, 3, Cin, C1), jnp.float32) * 0.10
    b1 = jax.random.normal(ks[1], (1, C1), jnp.float32) * 0.05
    pa = jnp.full((1, 1), 0.25, jnp.float32)          # PReLU default init
    w2 = jax.random.normal(ks[2], (3, 3, C1, C2), jnp.float32) * 0.05
    b2 = jax.random.normal(ks[3], (1, C2), jnp.float32) * 0.05
    sw1 = jax.random.normal(ks[4], (C2, Cr), jnp.float32) * 0.10
    sb1 = jax.random.normal(ks[5], (1, Cr), jnp.float32) * 0.05
    sw2 = jax.random.normal(ks[6], (Cr, C2), jnp.float32) * 0.10
    sb2 = jax.random.normal(ks[7], (1, C2), jnp.float32) * 0.05
    return (w1, b1, pa, w2, b2, sw1, sb1, sw2, sb2)


def attcnn_reference(x_nchw, params):
    """Pure-JAX reference matching the PyTorch forward (NCHW)."""
    (w1, b1, pa, w2, b2, sw1, sb1, sw2, sb2) = params
    w1_oihw = jnp.transpose(w1, (3, 2, 0, 1))
    w2_oihw = jnp.transpose(w2, (3, 2, 0, 1))
    y = jax.lax.conv_general_dilated(x_nchw, w1_oihw, (1, 1), "SAME")
    y = y + b1.reshape(1, -1, 1, 1)
    y = jnp.where(y > 0, y, y * pa.reshape(()))
    y = jax.lax.conv_general_dilated(y, w2_oihw, (1, 1), "SAME")
    y = y + b2.reshape(1, -1, 1, 1)
    y = jax.lax.reduce_window(y, -jnp.inf, jax.lax.max,
                              (1, 1, 2, 2), (1, 1, 2, 2), "VALID")
    s = jnp.mean(y, axis=(2, 3))
    z1 = jnp.maximum(s @ sw1 + sb1, 0.0)
    z2 = jax.nn.sigmoid(z1 @ sw2 + sb2)
    return y * z2[:, :, None, None]


if __name__ == "__main__":
    key = jax.random.PRNGKey(0)
    kx_, kp_ = jax.random.split(key)
    params = init_params(kp_)
    x = jax.random.normal(kx_, (2, 3, 16, 16), jnp.float32)   # NCHW, like PyTorch

    out = attcnn_forward(x, params)
    out = jax.block_until_ready(out)

    ref = attcnn_reference(x, params)
    assert out.shape == (2, 128, 8, 8), out.shape
    max_err = float(jnp.max(jnp.abs(out - ref)))
    # slack for bf16 MXU operands vs XLA f32 conv accumulation
    assert max_err < 5e-2, f"max abs err too large: {max_err}"
    print("KERNEL_OK")
</pallas_src>

<mosaic_0001>
module attributes {stable_mosaic.version = 11 : i64} {
  func.func @attcnn_kernel(%arg0: i32, %arg1: memref<1x384x32xbf16, #tpu.memory_space<vmem>>, %arg2: memref<32x64xbf16, #tpu.memory_space<vmem>>, %arg3: memref<1x64xf32, #tpu.memory_space<vmem>>, %arg4: memref<1x1xf32, #tpu.memory_space<smem>>, %arg5: memref<3x192x128xbf16, #tpu.memory_space<vmem>>, %arg6: memref<1x128xf32, #tpu.memory_space<vmem>>, %arg7: memref<128x8xf32, #tpu.memory_space<vmem>>, %arg8: memref<1x8xf32, #tpu.memory_space<vmem>>, %arg9: memref<8x128xf32, #tpu.memory_space<vmem>>, %arg10: memref<1x128xf32, #tpu.memory_space<vmem>>, %arg11: memref<1x8x8x128xf32, #tpu.memory_space<vmem>>, %arg12: memref<18x24x64xbf16, #tpu.memory_space<vmem>>, %arg13: memref<8x16x128xf32, #tpu.memory_space<vmem>>) attributes {dimension_semantics = [#tpu.dimension_semantics<parallel>], iteration_bounds = array<i64: 2>, scalar_prefetch = 0 : i64, scratch_operands = 2 : i64, tpu.core_type = #tpu.core_type<tc>, window_params = [{transform_indices = @transform_0, window_bounds = array<i64: 1, 384, 32>}, {pipeline_mode = #tpu.pipeline_mode<synchronous>, transform_indices = @transform_1, window_bounds = array<i64: 32, 64>}, {pipeline_mode = #tpu.pipeline_mode<synchronous>, transform_indices = @transform_2, window_bounds = array<i64: 1, 64>}, {transform_indices = @transform_3, window_bounds = array<i64: 1, 1>}, {pipeline_mode = #tpu.pipeline_mode<synchronous>, transform_indices = @transform_4, window_bounds = array<i64: 3, 192, 128>}, {pipeline_mode = #tpu.pipeline_mode<synchronous>, transform_indices = @transform_5, window_bounds = array<i64: 1, 128>}, {pipeline_mode = #tpu.pipeline_mode<synchronous>, transform_indices = @transform_6, window_bounds = array<i64: 128, 8>}, {pipeline_mode = #tpu.pipeline_mode<synchronous>, transform_indices = @transform_7, window_bounds = array<i64: 1, 8>}, {pipeline_mode = #tpu.pipeline_mode<synchronous>, transform_indices = @transform_8, window_bounds = array<i64: 8, 128>}, {pipeline_mode = #tpu.pipeline_mode<synchronous>, transform_indices = @transform_9, window_bounds = array<i64: 1, 128>}, {transform_indices = @transform_10, window_bounds = array<i64: 1, 8, 8, 128>}]} {
    %c0 = arith.constant 0 : index
    %c0_0 = arith.constant 0 : index
    %c0_1 = arith.constant 0 : index
    %0 = vector.load %arg1[%c0, %c0_0, %c0_1] : memref<1x384x32xbf16, #tpu.memory_space<vmem>>, vector<1x384x32xbf16>
    %1 = vector.shape_cast %0 : vector<1x384x32xbf16> to vector<384x32xbf16>
    %c0_2 = arith.constant 0 : index
    %c0_3 = arith.constant 0 : index
    %2 = vector.load %arg2[%c0_2, %c0_3] : memref<32x64xbf16, #tpu.memory_space<vmem>>, vector<32x64xbf16>
    %cst = arith.constant dense<0.000000e+00> : vector<384x64xf32>
    %3 = tpu.matmul %1, %2, %cst {dimension_numbers = #tpu.dot_dimension_numbers<[1], [0], [0], [1], [0, 0, 1, 1], [], []>} : vector<384x32xbf16>, vector<32x64xbf16>, vector<384x64xf32> -> vector<384x64xf32>
    %c0_4 = arith.constant 0 : index
    %c0_5 = arith.constant 0 : index
    %4 = vector.load %arg3[%c0_4, %c0_5] : memref<1x64xf32, #tpu.memory_space<vmem>>, vector<1x64xf32>
    %5 = vector.broadcast %4 : vector<1x64xf32> to vector<384x64xf32>
    %6 = arith.addf %3, %5 : vector<384x64xf32>
    %c0_6 = arith.constant 0 : index
    %c0_7 = arith.constant 0 : index
    %7 = memref.load %arg4[%c0_6, %c0_7] : memref<1x1xf32, #tpu.memory_space<smem>>
    %cst_8 = arith.constant 0.000000e+00 : f32
    %8 = vector.broadcast %cst_8 : f32 to vector<384x64xf32>
    %9 = arith.cmpf ogt, %6, %8 : vector<384x64xf32>
    %10 = vector.broadcast %7 : f32 to vector<384x64xf32>
    %11 = arith.mulf %6, %10 : vector<384x64xf32>
    %12 = arith.select %9, %6, %11 : vector<384x64xi1>, vector<384x64xf32>
    %13 = vector.shape_cast %12 : vector<384x64xf32> to vector<16x24x64xf32>
    %14 = tpu.iota {dimensions = array<i32: 1>} : vector<16x24x64xi32>
    %c1_i32 = arith.constant 1 : i32
    %15 = vector.broadcast %c1_i32 : i32 to vector<16x24x64xi32>
    %16 = arith.cmpi sge, %14, %15 : vector<16x24x64xi32>
    %c16_i32 = arith.constant 16 : i32
    %17 = vector.broadcast %c16_i32 : i32 to vector<16x24x64xi32>
    %18 = arith.cmpi sle, %14, %17 : vector<16x24x64xi32>
    %19 = arith.andi %16, %18 : vector<16x24x64xi1>
    %cst_9 = arith.constant 0.000000e+00 : f32
    %20 = vector.broadcast %cst_9 : f32 to vector<16x24x64xf32>
    %21 = arith.select %19, %13, %20 : vector<16x24x64xi1>, vector<16x24x64xf32>
    %22 = arith.truncf %21 : vector<16x24x64xf32> to vector<16x24x64xbf16>
    %c1 = arith.constant 1 : index
    %c0_10 = arith.constant 0 : index
    %c0_11 = arith.constant 0 : index
    %23 = vector.load %arg12[%c1, %c0_10, %c0_11] : memref<18x24x64xbf16, #tpu.memory_space<vmem>>, vector<16x24x64xbf16>
    tpu.vector_store %arg12[%c1, %c0_10, %c0_11], %22 {strides = array<i32>} : memref<18x24x64xbf16, #tpu.memory_space<vmem>>, vector<16x24x64xbf16>,
    %cst_12 = arith.constant 0.000000e+00 : bf16
    %24 = vector.broadcast %cst_12 : bf16 to vector<1x24x64xbf16>
    %c0_13 = arith.constant 0 : index
    %c0_14 = arith.constant 0 : index
    %c0_15 = arith.constant 0 : index
    %25 = vector.load %arg12[%c0_13, %c0_14, %c0_15] : memref<18x24x64xbf16, #tpu.memory_space<vmem>>, vector<1x24x64xbf16>
    tpu.vector_store %arg12[%c0_13, %c0_14, %c0_15], %24 {strides = array<i32>} : memref<18x24x64xbf16, #tpu.memory_space<vmem>>, vector<1x24x64xbf16>,
    %c17 = arith.constant 17 : index
    %c0_16 = arith.constant 0 : index
    %c0_17 = arith.constant 0 : index
    %26 = vector.load %arg12[%c17, %c0_16, %c0_17] : memref<18x24x64xbf16, #tpu.memory_space<vmem>>, vector<1x24x64xbf16>
    tpu.vector_store %arg12[%c17, %c0_16, %c0_17], %24 {strides = array<i32>} : memref<18x24x64xbf16, #tpu.memory_space<vmem>>, vector<1x24x64xbf16>,
    %c0_18 = arith.constant 0 : index
    %c0_19 = arith.constant 0 : index
    %c0_20 = arith.constant 0 : index
    %27 = vector.load %arg12[%c0_18, %c0_19, %c0_20] : memref<18x24x64xbf16, #tpu.memory_space<vmem>>, vector<16x16x64xbf16>
    %c1_21 = arith.constant 1 : index
    %c0_22 = arith.constant 0 : index
    %c0_23 = arith.constant 0 : index
    %28 = vector.load %arg12[%c1_21, %c0_22, %c0_23] : memref<18x24x64xbf16, #tpu.memory_space<vmem>>, vector<16x16x64xbf16>
    %c2 = arith.constant 2 : index
    %c0_24 = arith.constant 0 : index
    %c0_25 = arith.constant 0 : index
    %29 = vector.load %arg12[%c2, %c0_24, %c0_25] : memref<18x24x64xbf16, #tpu.memory_space<vmem>>, vector<16x16x64xbf16>
    %30 = tpu.concatenate %27, %28, %29 in 2 : vector<16x16x64xbf16>, vector<16x16x64xbf16>, vector<16x16x64xbf16> -> vector<16x16x192xbf16>
    %31 = vector.shape_cast %30 : vector<16x16x192xbf16> to vector<256x192xbf16>
    %c0_26 = arith.constant 0 : index
    %c0_27 = arith.constant 0 : index
    %c0_28 = arith.constant 0 : index
    %32 = vector.load %arg5[%c0_26, %c0_27, %c0_28] : memref<3x192x128xbf16, #tpu.memory_space<vmem>>, vector<1x192x128xbf16>
    %33 = vector.shape_cast %32 : vector<1x192x128xbf16> to vector<192x128xbf16>
    %cst_29 = arith.constant dense<0.000000e+00> : vector<256x128xf32>
    %34 = tpu.matmul %31, %33, %cst_29 {dimension_numbers = #tpu.dot_dimension_numbers<[1], [0], [0], [1], [0, 0, 1, 1], [], []>} : vector<256x192xbf16>, vector<192x128xbf16>, vector<256x128xf32> -> vector<256x128xf32>
    %c0_30 = arith.constant 0 : index
    %c1_31 = arith.constant 1 : index
    %c0_32 = arith.constant 0 : index
    %35 = vector.load %arg12[%c0_30, %c1_31, %c0_32] : memref<18x24x64xbf16, #tpu.memory_space<vmem>>, vector<16x16x64xbf16>
    %c1_33 = arith.constant 1 : index
    %c1_34 = arith.constant 1 : index
    %c0_35 = arith.constant 0 : index
    %36 = vector.load %arg12[%c1_33, %c1_34, %c0_35] : memref<18x24x64xbf16, #tpu.memory_space<vmem>>, vector<16x16x64xbf16>
    %c2_36 = arith.constant 2 : index
    %c1_37 = arith.constant 1 : index
    %c0_38 = arith.constant 0 : index
    %37 = vector.load %arg12[%c2_36, %c1_37, %c0_38] : memref<18x24x64xbf16, #tpu.memory_space<vmem>>, vector<16x16x64xbf16>
    %38 = tpu.concatenate %35, %36, %37 in 2 : vector<16x16x64xbf16>, vector<16x16x64xbf16>, vector<16x16x64xbf16> -> vector<16x16x192xbf16>
    %39 = vector.shape_cast %38 : vector<16x16x192xbf16> to vector<256x192xbf16>
    %c1_39 = arith.constant 1 : index
    %c0_40 = arith.constant 0 : index
    %c0_41 = arith.constant 0 : index
    %40 = vector.load %arg5[%c1_39, %c0_40, %c0_41] : memref<3x192x128xbf16, #tpu.memory_space<vmem>>, vector<1x192x128xbf16>
    %41 = vector.shape_cast %40 : vector<1x192x128xbf16> to vector<192x128xbf16>
    %cst_42 = arith.constant dense<0.000000e+00> : vector<256x128xf32>
    %42 = tpu.matmul %39, %41, %cst_42 {dimension_numbers = #tpu.dot_dimension_numbers<[1], [0], [0], [1], [0, 0, 1, 1], [], []>} : vector<256x192xbf16>, vector<192x128xbf16>, vector<256x128xf32> -> vector<256x128xf32>
    %43 = arith.addf %34, %42 : vector<256x128xf32>
    %c0_43 = arith.constant 0 : index
    %c2_44 = arith.constant 2 : index
    %c0_45 = arith.constant 0 : index
    %44 = vector.load %arg12[%c0_43, %c2_44, %c0_45] : memref<18x24x64xbf16, #tpu.memory_space<vmem>>, vector<16x16x64xbf16>
    %c1_46 = arith.constant 1 : index
    %c2_47 = arith.constant 2 : index
    %c0_48 = arith.constant 0 : index
    %45 = vector.load %arg12[%c1_46, %c2_47, %c0_48] : memref<18x24x64xbf16, #tpu.memory_space<vmem>>, vector<16x16x64xbf16>
    %c2_49 = arith.constant 2 : index
    %c2_50 = arith.constant 2 : index
    %c0_51 = arith.constant 0 : index
    %46 = vector.load %arg12[%c2_49, %c2_50, %c0_51] : memref<18x24x64xbf16, #tpu.memory_space<vmem>>, vector<16x16x64xbf16>
    %47 = tpu.concatenate %44, %45, %46 in 2 : vector<16x16x64xbf16>, vector<16x16x64xbf16>, vector<16x16x64xbf16> -> vector<16x16x192xbf16>
    %48 = vector.shape_cast %47 : vector<16x16x192xbf16> to vector<256x192xbf16>
    %c2_52 = arith.constant 2 : index
    %c0_53 = arith.constant 0 : index
    %c0_54 = arith.constant 0 : index
    %49 = vector.load %arg5[%c2_52, %c0_53, %c0_54] : memref<3x192x128xbf16, #tpu.memory_space<vmem>>, vector<1x192x128xbf16>
    %50 = vector.shape_cast %49 : vector<1x192x128xbf16> to vector<192x128xbf16>
    %cst_55 = arith.constant dense<0.000000e+00> : vector<256x128xf32>
    %51 = tpu.matmul %48, %50, %cst_55 {dimension_numbers = #tpu.dot_dimension_numbers<[1], [0], [0], [1], [0, 0, 1, 1], [], []>} : vector<256x192xbf16>, vector<192x128xbf16>, vector<256x128xf32> -> vector<256x128xf32>
    %52 = arith.addf %43, %51 : vector<256x128xf32>
    %c0_56 = arith.constant 0 : index
    %c0_57 = arith.constant 0 : index
    %53 = vector.load %arg6[%c0_56, %c0_57] : memref<1x128xf32, #tpu.memory_space<vmem>>, vector<1x128xf32>
    %54 = vector.broadcast %53 : vector<1x128xf32> to vector<256x128xf32>
    %55 = arith.addf %52, %54 : vector<256x128xf32>
    %56 = vector.shape_cast %55 : vector<256x128xf32> to vector<16x16x128xf32>
    %57 = vector.shape_cast %56 : vector<16x16x128xf32> to vector<8x2x16x128xf32>
    %cst_58 = arith.constant dense<0xFF800000> : vector<8x16x128xf32>
    %58 = vector.multi_reduction <maximumf>, %57, %cst_58 [1] : vector<8x2x16x128xf32> to vector<8x16x128xf32>
    %c0_59 = arith.constant 0 : index
    %c0_60 = arith.constant 0 : index
    %c0_61 = arith.constant 0 : index
    %59 = vector.load %arg13[%c0_59, %c0_60, %c0_61] : memref<8x16x128xf32, #tpu.memory_space<vmem>>, vector<8x16x128xf32>
    tpu.vector_store %arg13[%c0_59, %c0_60, %c0_61], %58 {strides = array<i32>} : memref<8x16x128xf32, #tpu.memory_space<vmem>>, vector<8x16x128xf32>,
    %c0_62 = arith.constant 0 : index
    %c0_63 = arith.constant 0 : index
    %c0_64 = arith.constant 0 : index
    %60 = tpu.strided_load %arg13[%c0_62, %c0_63, %c0_64] {strides = array<i32: 1, 2, 1>} : memref<8x16x128xf32, #tpu.memory_space<vmem>>, vector<8x8x128xf32>
    %c0_65 = arith.constant 0 : index
    %c1_66 = arith.constant 1 : index
    %c0_67 = arith.constant 0 : index
    %61 = tpu.strided_load %arg13[%c0_65, %c1_66, %c0_67] {strides = array<i32: 1, 2, 1>} : memref<8x16x128xf32, #tpu.memory_space<vmem>>, vector<8x8x128xf32>
    %62 = arith.maximumf %60, %61 : vector<8x8x128xf32>
    %63 = vector.shape_cast %62 : vector<8x8x128xf32> to vector<64x128xf32>
    %cst_68 = arith.constant dense<0.000000e+00> : vector<128xf32>
    %64 = vector.multi_reduction <add>, %63, %cst_68 [0] : vector<64x128xf32> to vector<128xf32>
    %65 = vector.shape_cast %64 : vector<128xf32> to vector<1x128xf32>
    %cst_69 = arith.constant 1.562500e-02 : f32
    %66 = vector.broadcast %cst_69 : f32 to vector<1x128xf32>
    %67 = arith.mulf %65, %66 : vector<1x128xf32>
    %c0_70 = arith.constant 0 : index
    %c0_71 = arith.constant 0 : index
    %68 = vector.load %arg7[%c0_70, %c0_71] : memref<128x8xf32, #tpu.memory_space<vmem>>, vector<128x8xf32>
    %cst_72 = arith.constant dense<0.000000e+00> : vector<1x8xf32>
    %69 = tpu.matmul %67, %68, %cst_72 {dimension_numbers = #tpu.dot_dimension_numbers<[1], [0], [0], [1], [0, 0, 1, 1], [], []>} : vector<1x128xf32>, vector<128x8xf32>, vector<1x8xf32> -> vector<1x8xf32>
    %c0_73 = arith.constant 0 : index
    %c0_74 = arith.constant 0 : index
    %70 = vector.load %arg8[%c0_73, %c0_74] : memref<1x8xf32, #tpu.memory_space<vmem>>, vector<1x8xf32>
    %71 = arith.addf %69, %70 : vector<1x8xf32>
    %cst_75 = arith.constant 0.000000e+00 : f32
    %72 = vector.broadcast %cst_75 : f32 to vector<1x8xf32>
    %73 = arith.maximumf %71, %72 : vector<1x8xf32>
    %c0_76 = arith.constant 0 : index
    %c0_77 = arith.constant 0 : index
    %74 = vector.load %arg9[%c0_76, %c0_77] : memref<8x128xf32, #tpu.memory_space<vmem>>, vector<8x128xf32>
    %cst_78 = arith.constant dense<0.000000e+00> : vector<1x128xf32>
    %75 = tpu.matmul %73, %74, %cst_78 {dimension_numbers = #tpu.dot_dimension_numbers<[1], [0], [0], [1], [0, 0, 1, 1], [], []>} : vector<1x8xf32>, vector<8x128xf32>, vector<1x128xf32> -> vector<1x128xf32>
    %c0_79 = arith.constant 0 : index
    %c0_80 = arith.constant 0 : index
    %76 = vector.load %arg10[%c0_79, %c0_80] : memref<1x128xf32, #tpu.memory_space<vmem>>, vector<1x128xf32>
    %77 = arith.addf %75, %76 : vector<1x128xf32>
    %78 = arith.negf %77 : vector<1x128xf32>
    %79 = math.exp %78 : vector<1x128xf32>
    %cst_81 = arith.constant 1.000000e+00 : f32
    %80 = vector.broadcast %cst_81 : f32 to vector<1x128xf32>
    %81 = arith.addf %80, %79 : vector<1x128xf32>
    %82 = arith.divf %80, %81 : vector<1x128xf32>
    %83 = vector.broadcast %82 : vector<1x128xf32> to vector<64x128xf32>
    %84 = arith.mulf %63, %83 : vector<64x128xf32>
    %85 = vector.shape_cast %84 : vector<64x128xf32> to vector<8x8x128xf32>
    %c0_82 = arith.constant 0 : index
    %c0_83 = arith.constant 0 : index
    %c0_84 = arith.constant 0 : index
    %c0_85 = arith.constant 0 : index
    %86 = vector.load %arg11[%c0_82, %c0_83, %c0_84, %c0_85] : memref<1x8x8x128xf32, #tpu.memory_space<vmem>>, vector<1x8x8x128xf32>
    %87 = vector.shape_cast %86 : vector<1x8x8x128xf32> to vector<8x8x128xf32>
    %88 = vector.shape_cast %85 : vector<8x8x128xf32> to vector<1x8x8x128xf32>
    tpu.vector_store %arg11[%c0_82, %c0_83, %c0_84, %c0_85], %88 {strides = array<i32>} : memref<1x8x8x128xf32, #tpu.memory_space<vmem>>, vector<1x8x8x128xf32>,
    return
  }
  func.func @transform_0(%arg0: i32) -> (i32, i32, i32) {
    %c0_i32 = arith.constant 0 : i32
    %c0_i32_0 = arith.constant 0 : i32
    %c0_i32_1 = arith.constant 0 : i32
    return %arg0, %c0_i32, %c0_i32_0 : i32, i32, i32
  }
  func.func @transform_1(%arg0: i32) -> (i32, i32) {
    %c0_i32 = arith.constant 0 : i32
    %c0_i32_0 = arith.constant 0 : i32
    %c0_i32_1 = arith.constant 0 : i32
    return %c0_i32, %c0_i32_0 : i32, i32
  }
  func.func @transform_2(%arg0: i32) -> (i32, i32) {
    %c0_i32 = arith.constant 0 : i32
    %c0_i32_0 = arith.constant 0 : i32
    %c0_i32_1 = arith.constant 0 : i32
    return %c0_i32, %c0_i32_0 : i32, i32
  }
  func.func @transform_3(%arg0: i32) -> (i32, i32) {
    %c0_i32 = arith.constant 0 : i32
    %c0_i32_0 = arith.constant 0 : i32
    %c0_i32_1 = arith.constant 0 : i32
    return %c0_i32, %c0_i32_0 : i32, i32
  }
  func.func @transform_4(%arg0: i32) -> (i32, i32, i32) {
    %c0_i32 = arith.constant 0 : i32
    %c0_i32_0 = arith.constant 0 : i32
    %c0_i32_1 = arith.constant 0 : i32
    %c0_i32_2 = arith.constant 0 : i32
    return %c0_i32, %c0_i32_0, %c0_i32_1 : i32, i32, i32
  }
  func.func @transform_5(%arg0: i32) -> (i32, i32) {
    %c0_i32 = arith.constant 0 : i32
    %c0_i32_0 = arith.constant 0 : i32
    %c0_i32_1 = arith.constant 0 : i32
    return %c0_i32, %c0_i32_0 : i32, i32
  }
  func.func @transform_6(%arg0: i32) -> (i32, i32) {
    %c0_i32 = arith.constant 0 : i32
    %c0_i32_0 = arith.constant 0 : i32
    %c0_i32_1 = arith.constant 0 : i32
    return %c0_i32, %c0_i32_0 : i32, i32
  }
  func.func @transform_7(%arg0: i32) -> (i32, i32) {
    %c0_i32 = arith.constant 0 : i32
    %c0_i32_0 = arith.constant 0 : i32
    %c0_i32_1 = arith.constant 0 : i32
    return %c0_i32, %c0_i32_0 : i32, i32
  }
  func.func @transform_8(%arg0: i32) -> (i32, i32) {
    %c0_i32 = arith.constant 0 : i32
    %c0_i32_0 = arith.constant 0 : i32
    %c0_i32_1 = arith.constant 0 : i32
    return %c0_i32, %c0_i32_0 : i32, i32
  }
  func.func @transform_9(%arg0: i32) -> (i32, i32) {
    %c0_i32 = arith.constant 0 : i32
    %c0_i32_0 = arith.constant 0 : i32
    %c0_i32_1 = arith.constant 0 : i32
    return %c0_i32, %c0_i32_0 : i32, i32
  }
  func.func @transform_10(%arg0: i32) -> (i32, i32, i32, i32) {
    %c0_i32 = arith.constant 0 : i32
    %c0_i32_0 = arith.constant 0 : i32
    %c0_i32_1 = arith.constant 0 : i32
    %c0_i32_2 = arith.constant 0 : i32
    return %arg0, %c0_i32, %c0_i32_0, %c0_i32_1 : i32, i32, i32, i32
  }
}

</mosaic_0001>

<llo_original>
// kernel: tpu_custom_call.1
$region0: #{tpu_custom_call.1}
  #allocation0 [shape = 'u32[]', space=smem, size = 0x4, offset = 0x4, fixed_abs, tag = 'smem constant byte address 0x4 - core index']
  #allocation1 [shape = 'u32[144,128]{1,0:T(1,128)}', space=vmem, size = 0x12000, scoped, tag = 'internal scratch']
  #allocation2 [shape = 'bf16[18,24,64]{2,1,0:T(8,128)(2,1)}', space=vmem, size = 0x1b000, scoped, tag = 'scratch operand']
  #allocation3 [shape = 'f32[8,16,128]{2,1,0:T(8,128)}', space=vmem, size = 0x10000, scoped, tag = 'scratch operand']
  #allocation4 [shape = 'f32[1,1]{1,0:T(1,128)S(6)}', space=smem, size = 0x200, scoped, tag = 'scoped memory for tpu_custom_call.1']
  %s0 = inlined_call_operand.vmem [shape: bf16[2,384,32], index: 0, kind: input, shape index: {}]
  %s1 = inlined_call_operand.vmem [shape: bf16[32,64], index: 1, kind: input, shape index: {}]
  %s2 = inlined_call_operand.vmem [shape: f32[1,64], index: 2, kind: input, shape index: {}]
  %s3 = inlined_call_operand.<no memory space> [shape: f32[1,1], index: 3, kind: input, shape index: {}]
  %s4 = inlined_call_operand.vmem [shape: bf16[3,192,128], index: 4, kind: input, shape index: {}]
  %s5 = inlined_call_operand.vmem [shape: f32[1,128], index: 5, kind: input, shape index: {}]
  %s6 = inlined_call_operand.vmem [shape: f32[128,8], index: 6, kind: input, shape index: {}]
  %s7 = inlined_call_operand.vmem [shape: f32[1,8], index: 7, kind: input, shape index: {}]
  %s8 = inlined_call_operand.vmem [shape: f32[8,128], index: 8, kind: input, shape index: {}]
  %s9 = inlined_call_operand.vmem [shape: f32[1,128], index: 9, kind: input, shape index: {}]
  %s10 = inlined_call_operand.hbm [shape: f32[2,8,8,128], index: 10, kind: output, shape index: {}]
  %s11 = sld [smem:[#allocation0]]
  $region73: #{tpu_custom_call.1} parent=0
    _
  %s13 = ssub.s32 1, %s11
  %s14 = scalar_select 0, %s13, %s11
  %15 = sst [smem:[#allocation4]] %s3
  $region1: #{tpu_custom_call.1} parent=0
    #allocation5 [shape = 'u8[65536]{0}', space=vmem, size = 0x10000, scoped, tag = 'output window, operand 0']
    #allocation6 [shape = 's32[2]{0}', space=sflag, size = 0x8, scoped, tag = 'scoped memory for tpu_custom_call.1']
    %16 = vsyncpa [#allocation6], 0
    %s17 = scalar_lea.sflag [#allocation6], 1
    %18 = vsyncpa %s17, 0
    loop: start=0, step=1, limit=4
    $region2: #{tpu_custom_call.1} parent=1 // loop_pre_header
      _
    $region3: #{tpu_custom_call.1} parent=1 // loop_header
      %s20 = sphi 0, %s24
      %p21 = scmp.ge.s32.totalorder %s20, 4
      %s30 = sphi 0, %s32
      %s33 = sphi 0, %s30
      %s34 = sphi 0, %s33
      %s50 = sphi 0, %s34
      %s54 = sphi 0, %s54
      %s56 = sphi 0, %s54
      %s57 = sphi 0, %s56
      %s71 = sphi 0, %s57
      %s75 = sphi 0, %s75
      %s77 = sphi 0, %s75
      %s78 = sphi 0, %s77
      %s92 = sphi 0, %s78
      %s96 = sphi 0, %s96
      %s98 = sphi 0, %s96
      %s99 = sphi 0, %s98
      %s113 = sphi 0, %s99
      %s117 = sphi 0, %s117
      %s119 = sphi 0, %s117
      %s120 = sphi 0, %s119
      %s134 = sphi 0, %s120
      %s138 = sphi 0, %s138
      %s140 = sphi 0, %s138
      %s141 = sphi 0, %s140
      %s155 = sphi 0, %s141
      %s159 = sphi 0, %s159
      %s161 = sphi 0, %s159
      %s162 = sphi 0, %s161
      %s176 = sphi 0, %s162
      %s180 = sphi 0, %s180
      %s182 = sphi 0, %s180
      %s183 = sphi 0, %s182
      %s197 = sphi 0, %s183
      %s201 = sphi 0, %s201
      %s203 = sphi 0, %s201
      %s204 = sphi 0, %s203
      %s218 = sphi 0, %s204
      %s222 = sphi 0, %s222
      %s224 = sphi 0, %s222
      %s225 = sphi 0, %s224
      %s239 = sphi 0, %s225
      %s245 = sphi 0, %s247
      %s248 = sphi 0, %s245
      %s249 = sphi 0, %s248
      %s265 = sphi 0, %s249
    $region4: #{tpu_custom_call.1} parent=1 // loop_header_branch
      %23 = sbr.rel (%p21) target = $region8
    $region5: #{tpu_custom_call.1} parent=1 // loop_body
      %s25 = ssub.s32 %s20, 1
      %s26 = ssub.s32 %s20, 2
      %s27 = sadd.s32 %s20, 1
      %s28 = ssub.s32 %s20, %s27
      %p29 = scmp.eq.s32.totalorder %s28, 0
      %s31 = sadd.s32 %s30, 1
      %s32 = scalar_select %p29, %s30, %s31
      %p35 = pneg %p29
      %p36 = scmp.eq.s32.totalorder %s20, 1
      %p37 = por %p35, %p36
      %p38 = scmp.ne.s32.totalorder %s30, %s33
      %p39 = scmp.eq.s32.totalorder %s20, 0
      %p40 = por %p38, %p39
      %p41 = scmp.ne.s32.totalorder %s30, %s33
      %p42 = scmp.eq.s32.totalorder %s25, 1
      %p43 = por %p41, %p42
      %p44 = scmp.ne.s32.totalorder %s33, %s34
      %p45 = scmp.eq.s32.totalorder %s25, 0
      %p46 = por %p44, %p45
      %p47 = scmp.ne.s32.totalorder %s33, %s34
      %p48 = scmp.eq.s32.totalorder %s26, 1
      %p49 = por %p47, %p48
      %p51 = scmp.ne.s32.totalorder %s34, %s50
      %p52 = scmp.eq.s32.totalorder %s26, 0
      %p53 = por %p51, %p52
      %s55 = sadd.s32 %s54, 1
      %p58 = scmp.eq.s32.totalorder %s20, 1
      %p59 = scmp.ne.s32.totalorder %s54, %s56
      %p60 = scmp.eq.s32.totalorder %s20, 0
      %p61 = por %p59, %p60
      %p62 = scmp.ne.s32.totalorder %s54, %s56
      %p63 = scmp.eq.s32.totalorder %s25, 1
      %p64 = por %p62, %p63
      %p65 = scmp.ne.s32.totalorder %s56, %s57
      %p66 = scmp.eq.s32.totalorder %s25, 0
      %p67 = por %p65, %p66
      %p68 = scmp.ne.s32.totalorder %s56, %s57
      %p69 = scmp.eq.s32.totalorder %s26, 1
      %p70 = por %p68, %p69
      %p72 = scmp.ne.s32.totalorder %s57, %s71
      %p73 = scmp.eq.s32.totalorder %s26, 0
      %p74 = por %p72, %p73
      %s76 = sadd.s32 %s75, 1
      %p79 = scmp.eq.s32.totalorder %s20, 1
      %p80 = scmp.ne.s32.totalorder %s75, %s77
      %p81 = scmp.eq.s32.totalorder %s20, 0
      %p82 = por %p80, %p81
      %p83 = scmp.ne.s32.totalorder %s75, %s77
      %p84 = scmp.eq.s32.totalorder %s25, 1
      %p85 = por %p83, %p84
      %p86 = scmp.ne.s32.totalorder %s77, %s78
      %p87 = scmp.eq.s32.totalorder %s25, 0
      %p88 = por %p86, %p87
      %p89 = scmp.ne.s32.totalorder %s77, %s78
      %p90 = scmp.eq.s32.totalorder %s26, 1
      %p91 = por %p89, %p90
      %p93 = scmp.ne.s32.totalorder %s78, %s92
      %p94 = scmp.eq.s32.totalorder %s26, 0
      %p95 = por %p93, %p94
      %s97 = sadd.s32 %s96, 1
      %p100 = scmp.eq.s32.totalorder %s20, 1
      %p101 = scmp.ne.s32.totalorder %s96, %s98
      %p102 = scmp.eq.s32.totalorder %s20, 0
      %p103 = por %p101, %p102
      %p104 = scmp.ne.s32.totalorder %s96, %s98
      %p105 = scmp.eq.s32.totalorder %s25, 1
      %p106 = por %p104, %p105
      %p107 = scmp.ne.s32.totalorder %s98, %s99
      %p108 = scmp.eq.s32.totalorder %s25, 0
      %p109 = por %p107, %p108
      %p110 = scmp.ne.s32.totalorder %s98, %s99
      %p111 = scmp.eq.s32.totalorder %s26, 1
      %p112 = por %p110, %p111
      %p114 = scmp.ne.s32.totalorder %s99, %s113
      %p115 = scmp.eq.s32.totalorder %s26, 0
      %p116 = por %p114, %p115
      %s118 = sadd.s32 %s117, 1
      %p121 = scmp.eq.s32.totalorder %s20, 1
      %p122 = scmp.ne.s32.totalorder %s117, %s119
      %p123 = scmp.eq.s32.totalorder %s20, 0
      %p124 = por %p122, %p123
      %p125 = scmp.ne.s32.totalorder %s117, %s119
      %p126 = scmp.eq.s32.totalorder %s25, 1
      %p127 = por %p125, %p126
      %p128 = scmp.ne.s32.totalorder %s119, %s120
      %p129 = scmp.eq.s32.totalorder %s25, 0
      %p130 = por %p128, %p129
      %p131 = scmp.ne.s32.totalorder %s119, %s120
      %p132 = scmp.eq.s32.totalorder %s26, 1
      %p133 = por %p131, %p132
      %p135 = scmp.ne.s32.totalorder %s120, %s134
      %p136 = scmp.eq.s32.totalorder %s26, 0
      %p137 = por %p135, %p136
      %s139 = sadd.s32 %s138, 1
      %p142 = scmp.eq.s32.totalorder %s20, 1
      %p143 = scmp.ne.s32.totalorder %s138, %s140
      %p144 = scmp.eq.s32.totalorder %s20, 0
      %p145 = por %p143, %p144
      %p146 = scmp.ne.s32.totalorder %s138, %s140
      %p147 = scmp.eq.s32.totalorder %s25, 1
      %p148 = por %p146, %p147
      %p149 = scmp.ne.s32.totalorder %s140, %s141
      %p150 = scmp.eq.s32.totalorder %s25, 0
      %p151 = por %p149, %p150
      %p152 = scmp.ne.s32.totalorder %s140, %s141
      %p153 = scmp.eq.s32.totalorder %s26, 1
      %p154 = por %p152, %p153
      %p156 = scmp.ne.s32.totalorder %s141, %s155
      %p157 = scmp.eq.s32.totalorder %s26, 0
      %p158 = por %p156, %p157
      %s160 = sadd.s32 %s159, 1
      %p163 = scmp.eq.s32.totalorder %s20, 1
      %p164 = scmp.ne.s32.totalorder %s159, %s161
      %p165 = scmp.eq.s32.totalorder %s20, 0
      %p166 = por %p164, %p165
      %p167 = scmp.ne.s32.totalorder %s159, %s161
      %p168 = scmp.eq.s32.totalorder %s25, 1
      %p169 = por %p167, %p168
      %p170 = scmp.ne.s32.totalorder %s161, %s162
      %p171 = scmp.eq.s32.totalorder %s25, 0
      %p172 = por %p170, %p171
      %p173 = scmp.ne.s32.totalorder %s161, %s162
      %p174 = scmp.eq.s32.totalorder %s26, 1
      %p175 = por %p173, %p174
      %p177 = scmp.ne.s32.totalorder %s162, %s176
      %p178 = scmp.eq.s32.totalorder %s26, 0
      %p179 = por %p177, %p178
      %s181 = sadd.s32 %s180, 1
      %p184 = scmp.eq.s32.totalorder %s20, 1
      %p185 = scmp.ne.s32.totalorder %s180, %s182
      %p186 = scmp.eq.s32.totalorder %s20, 0
      %p187 = por %p185, %p186
      %p188 = scmp.ne.s32.totalorder %s180, %s182
      %p189 = scmp.eq.s32.totalorder %s25, 1
      %p190 = por %p188, %p189
      %p191 = scmp.ne.s32.totalorder %s182, %s183
      %p192 = scmp.eq.s32.totalorder %s25, 0
      %p193 = por %p191, %p192
      %p194 = scmp.ne.s32.totalorder %s182, %s183
      %p195 = scmp.eq.s32.totalorder %s26, 1
      %p196 = por %p194, %p195
      %p198 = scmp.ne.s32.totalorder %s183, %s197
      %p199 = scmp.eq.s32.totalorder %s26, 0
      %p200 = por %p198, %p199
      %s202 = sadd.s32 %s201, 1
      %p205 = scmp.eq.s32.totalorder %s20, 1
      %p206 = scmp.ne.s32.totalorder %s201, %s203
      %p207 = scmp.eq.s32.totalorder %s20, 0
      %p208 = por %p206, %p207
      %p209 = scmp.ne.s32.totalorder %s201, %s203
      %p210 = scmp.eq.s32.totalorder %s25, 1
      %p211 = por %p209, %p210
      %p212 = scmp.ne.s32.totalorder %s203, %s204
      %p213 = scmp.eq.s32.totalorder %s25, 0
      %p214 = por %p212, %p213
      %p215 = scmp.ne.s32.totalorder %s203, %s204
      %p216 = scmp.eq.s32.totalorder %s26, 1
      %p217 = por %p215, %p216
      %p219 = scmp.ne.s32.totalorder %s204, %s218
      %p220 = scmp.eq.s32.totalorder %s26, 0
      %p221 = por %p219, %p220
      %s223 = sadd.s32 %s222, 1
      %p226 = scmp.eq.s32.totalorder %s20, 1
      %p227 = scmp.ne.s32.totalorder %s222, %s224
      %p228 = scmp.eq.s32.totalorder %s20, 0
      %p229 = por %p227, %p228
      %p230 = scmp.ne.s32.totalorder %s222, %s224
      %p231 = scmp.eq.s32.totalorder %s25, 1
      %p232 = por %p230, %p231
      %p233 = scmp.ne.s32.totalorder %s224, %s225
      %p234 = scmp.eq.s32.totalorder %s25, 0
      %p235 = por %p233, %p234
      %p236 = scmp.ne.s32.totalorder %s224, %s225
      %p237 = scmp.eq.s32.totalorder %s26, 1
      %p238 = por %p236, %p237
      %p240 = scmp.ne.s32.totalorder %s225, %s239
      %p241 = scmp.eq.s32.totalorder %s26, 0
      %p242 = por %p240, %p241
      %s243 = ssub.s32 %s20, %s27
      %p244 = scmp.eq.s32.totalorder %s243, 0
      %s246 = sadd.s32 %s245, 1
      %s247 = scalar_select %p244, %s245, %s246
      %p250 = pneg %p244
      %p251 = scmp.eq.s32.totalorder %s20, 1
      %p252 = por %p250, %p251
      %p253 = scmp.ne.s32.totalorder %s245, %s248
      %p254 = scmp.eq.s32.totalorder %s20, 0
      %p255 = por %p253, %p254
      %p256 = scmp.ne.s32.totalorder %s245, %s248
      %p257 = scmp.eq.s32.totalorder %s25, 1
      %p258 = por %p256, %p257
      %p259 = scmp.ne.s32.totalorder %s248, %s249
      %p260 = scmp.eq.s32.totalorder %s25, 0
      %p261 = por %p259, %p260
      %p262 = scmp.ne.s32.totalorder %s248, %s249
      %p263 = scmp.eq.s32.totalorder %s26, 1
      %p264 = por %p262, %p263
      %p266 = scmp.ne.s32.totalorder %s249, %s265
      %p267 = scmp.eq.s32.totalorder %s26, 0
      %p268 = por %p266, %p267
      %p269 = scmp.le.s32.totalorder 1, %s20
      %p270 = scmp.lt.s32.totalorder %s20, 3
      %p271 = pnand %p269, %p270
      %p272 = pneg %p271
      // Predicated region
      $region9: #{tpu_custom_call.1} parent=5 // pred_check
        _
      $region10: #{tpu_custom_call.1} parent=5 // pred_check_branch
        %274 = sbr.rel (%p271) target = $region12
      $region11: #{tpu_custom_call.1} parent=5 // pred_region
        %s275 = ssub.s32 %s20, 1
        // Predicated region
        $region13: #{tpu_custom_call.1} parent=11 // pred_check
          %p276 = pneg %p67
        $region14: #{tpu_custom_call.1} parent=11 // pred_check_branch
          %278 = sbr.rel (%p276) target = $region16
        $region15: #{tpu_custom_call.1} parent=11 // pred_region
          _
        $region16: #{tpu_custom_call.1} parent=11 // pred_fallthru
          _
        // Predicated region
        $region17: #{tpu_custom_call.1} parent=11 // pred_check
          %p279 = pneg %p88
        $region18: #{tpu_custom_call.1} parent=11 // pred_check_branch
          %281 = sbr.rel (%p279) target = $region20
        $region19: #{tpu_custom_call.1} parent=11 // pred_region
          _
        $region20: #{tpu_custom_call.1} parent=11 // pred_fallthru
          _
        // Predicated region
        $region21: #{tpu_custom_call.1} parent=11 // pred_check
          %p282 = pneg %p109
        $region22: #{tpu_custom_call.1} parent=11 // pred_check_branch
          %284 = sbr.rel (%p282) target = $region24
        $region23: #{tpu_custom_call.1} parent=11 // pred_region
          _
        $region24: #{tpu_custom_call.1} parent=11 // pred_fallthru
          _
        // Predicated region
        $region25: #{tpu_custom_call.1} parent=11 // pred_check
          %p285 = pneg %p130
        $region26: #{tpu_custom_call.1} parent=11 // pred_check_branch
          %287 = sbr.rel (%p285) target = $region28
        $region27: #{tpu_custom_call.1} parent=11 // pred_region
          _
        $region28: #{tpu_custom_call.1} parent=11 // pred_fallthru
          _
        // Predicated region
        $region29: #{tpu_custom_call.1} parent=11 // pred_check
          %p288 = pneg %p151
        $region30: #{tpu_custom_call.1} parent=11 // pred_check_branch
          %290 = sbr.rel (%p288) target = $region32
        $region31: #{tpu_custom_call.1} parent=11 // pred_region
          _
        $region32: #{tpu_custom_call.1} parent=11 // pred_fallthru
          _
        // Predicated region
        $region33: #{tpu_custom_call.1} parent=11 // pred_check
          %p291 = pneg %p172
        $region34: #{tpu_custom_call.1} parent=11 // pred_check_branch
          %293 = sbr.rel (%p291) target = $region36
        $region35: #{tpu_custom_call.1} parent=11 // pred_region
          _
        $region36: #{tpu_custom_call.1} parent=11 // pred_fallthru
          _
        // Predicated region
        $region37: #{tpu_custom_call.1} parent=11 // pred_check
          %p294 = pneg %p193
        $region38: #{tpu_custom_call.1} parent=11 // pred_check_branch
          %296 = sbr.rel (%p294) target = $region40
        $region39: #{tpu_custom_call.1} parent=11 // pred_region
          _
        $region40: #{tpu_custom_call.1} parent=11 // pred_fallthru
          _
        // Predicated region
        $region41: #{tpu_custom_call.1} parent=11 // pred_check
          %p297 = pneg %p214
        $region42: #{tpu_custom_call.1} parent=11 // pred_check_branch
          %299 = sbr.rel (%p297) target = $region44
        $region43: #{tpu_custom_call.1} parent=11 // pred_region
          _
        $region44: #{tpu_custom_call.1} parent=11 // pred_fallthru
          _
        // Predicated region
        $region45: #{tpu_custom_call.1} parent=11 // pred_check
          %p300 = pneg %p235
        $region46: #{tpu_custom_call.1} parent=11 // pred_check_branch
          %302 = sbr.rel (%p300) target = $region48
        $region47: #{tpu_custom_call.1} parent=11 // pred_region
          _
        $region48: #{tpu_custom_call.1} parent=11 // pred_fallthru
          _
      $region12: #{tpu_custom_call.1} parent=5 // pred_fallthru
        _
      %p303 = scmp.lt.s32.totalorder %s20, 2
      // Predicated region
      $region49: #{tpu_custom_call.1} parent=5 // pred_check
        %p304 = pneg %p303
      $region50: #{tpu_custom_call.1} parent=5 // pred_check_branch
        %306 = sbr.rel (%p304) target = $region52
      $region51: #{tpu_custom_call.1} parent=5 // pred_region
        // Predicated region
        $region53: #{tpu_custom_call.1} parent=51 // pred_check
          %p307 = pneg %p40
        $region54: #{tpu_custom_call.1} parent=51 // pred_check_branch
          %309 = sbr.rel (%p307) target = $region56
        $region55: #{tpu_custom_call.1} parent=51 // pred_region
          %p310 = scmp.lt.s32.totalorder %s20, 1
          %s311 = scalar_select %p310, %s20, 1
          %s312 = smul.addr %s311, 48
          %s313 = smul.addr %s312, 4
          %s314 = scalar_lea.vmem %s0, %s313
        $region56: #{tpu_custom_call.1} parent=51 // pred_fallthru
          _
      $region52: #{tpu_custom_call.1} parent=5 // pred_fallthru
        _
      %p315 = scmp.le.s32.totalorder 1, %s20
      %p316 = scmp.lt.s32.totalorder %s20, 3
      %p317 = pnand %p315, %p316
      %p318 = pneg %p317
      // Predicated region
      $region57: #{tpu_custom_call.1} parent=5 // pred_check
        _
      $region58: #{tpu_custom_call.1} parent=5 // pred_check_branch
        %320 = sbr.rel (%p317) target = $region60
      $region59: #{tpu_custom_call.1} parent=5 // pred_region
        %s321 = ssub.s32 %s20, 1
        %p322 = scmp.lt.s32.totalorder %s25, 1
        %s323 = scalar_select %p322, %s25, 1
        %s324 = smul.addr %s323, 48
        %s325 = smul.addr %s324, 4
        %s326 = scalar_lea.vmem %s0, %s325
        %p327 = pneg %p46
        %p328 = pneg %p43
        %p329 = pneg %p67
        %p330 = pneg %p64
        %p331 = pneg %p88
        %p332 = pneg %p85
        %p333 = pneg %p109
        %p334 = pneg %p106
        %p335 = pneg %p130
        %p336 = pneg %p127
        %p337 = pneg %p151
        %p338 = pneg %p148
        %p339 = pneg %p172
        %p340 = pneg %p169
        %p341 = pneg %p193
        %p342 = pneg %p190
        %p343 = pneg %p214
        %p344 = pneg %p211
        %p345 = pneg %p235
        %p346 = pneg %p232
        %p347 = pneg %p261
        %p348 = pneg %p258
        %s349 = sand.u32 %s248, 1
        %s350 = scalar_lea.sflag [#allocation6], %s349
        %s351 = sand.u32 %s248, 1
        %s352 = smul.addr %s351, 64
        %s353 = scalar_lea.vmem [#allocation5], %s352
        %p354 = scmp.lt.s32.totalorder %s25, 1
        %s355 = scalar_select %p354, %s25, 1
        %s356 = smul.addr %s355, 48
        %s357 = smul.addr %s356, 4
        %s358 = scalar_lea.vmem %s0, %s357
        %v360 = vld [vmem:[%s358] sm:$0xf]
        %v361 = vld [vmem:[%s358 + $0x4] sm:$0xf]
        %v362 = vld [vmem:[%s358 + $0x8] sm:$0xf]
        %v363 = vld [vmem:[%s358 + $0xc] sm:$0xf]
        %v364 = vld [vmem:[%s358 + $0x10] sm:$0xf]
        %v365 = vld [vmem:[%s358 + $0x14] sm:$0xf]
        %v366 = vld [vmem:[%s358 + $0x18] sm:$0xf]
        %v367 = vld [vmem:[%s358 + $0x1c] sm:$0xf]
        %v368 = vld [vmem:[%s358 + $0x20] sm:$0xf]
        %v369 = vld [vmem:[%s358 + $0x24] sm:$0xf]
        %v370 = vld [vmem:[%s358 + $0x28] sm:$0xf]
        %v371 = vld [vmem:[%s358 + $0x2c] sm:$0xf]
        %v372 = vld [vmem:[%s358 + $0x30] sm:$0xf]
        %v373 = vld [vmem:[%s358 + $0x34] sm:$0xf]
        %v374 = vld [vmem:[%s358 + $0x38] sm:$0xf]
        %v375 = vld [vmem:[%s358 + $0x3c] sm:$0xf]
        %v376 = vld [vmem:[%s358 + $0x40] sm:$0xf]
        %v377 = vld [vmem:[%s358 + $0x44] sm:$0xf]
        %v378 = vld [vmem:[%s358 + $0x48] sm:$0xf]
        %v379 = vld [vmem:[%s358 + $0x4c] sm:$0xf]
        %v380 = vld [vmem:[%s358 + $0x50] sm:$0xf]
        %v381 = vld [vmem:[%s358 + $0x54] sm:$0xf]
        %v382 = vld [vmem:[%s358 + $0x58] sm:$0xf]
        %v383 = vld [vmem:[%s358 + $0x5c] sm:$0xf]
        %v384 = vld [vmem:[%s358 + $0x60] sm:$0xf]
        %v385 = vld [vmem:[%s358 + $0x64] sm:$0xf]
        %v386 = vld [vmem:[%s358 + $0x68] sm:$0xf]
        %v387 = vld [vmem:[%s358 + $0x6c] sm:$0xf]
        %v388 = vld [vmem:[%s358 + $0x70] sm:$0xf]
        %v389 = vld [vmem:[%s358 + $0x74] sm:$0xf]
        %v390 = vld [vmem:[%s358 + $0x78] sm:$0xf]
        %v391 = vld [vmem:[%s358 + $0x7c] sm:$0xf]
        %v392 = vld [vmem:[%s358 + $0x80] sm:$0xf]
        %v393 = vld [vmem:[%s358 + $0x84] sm:$0xf]
        %v394 = vld [vmem:[%s358 + $0x88] sm:$0xf]
        %v395 = vld [vmem:[%s358 + $0x8c] sm:$0xf]
        %v396 = vld [vmem:[%s358 + $0x90] sm:$0xf]
        %v397 = vld [vmem:[%s358 + $0x94] sm:$0xf]
        %v398 = vld [vmem:[%s358 + $0x98] sm:$0xf]
        %v399 = vld [vmem:[%s358 + $0x9c] sm:$0xf]
        %v400 = vld [vmem:[%s358 + $0xa0] sm:$0xf]
        %v401 = vld [vmem:[%s358 + $0xa4] sm:$0xf]
        %v402 = vld [vmem:[%s358 + $0xa8] sm:$0xf]
        %v403 = vld [vmem:[%s358 + $0xac] sm:$0xf]
        %v404 = vld [vmem:[%s358 + $0xb0] sm:$0xf]
        %v405 = vld [vmem:[%s358 + $0xb4] sm:$0xf]
        %v406 = vld [vmem:[%s358 + $0xb8] sm:$0xf]
        %v407 = vld [vmem:[%s358 + $0xbc] sm:$0xf]
        %v408 = vld [vmem:[%s1] sm:$0xf]
        %v409 = vld [vmem:[%s1 + $0x4] sm:$0xf]
        %v410 = vld [vmem:[%s1 + $0x8] sm:$0xf]
        %v411 = vld [vmem:[%s1 + $0xc] sm:$0xf]
        %v412 = vld [vmem:[%s2] sm:$0x1]
        %v414 = vlaneseq
        %v415 = vshrl.u32 %v414, 7
        %v416 = vsub.s32 0, %v415
        %v417 = vrot.slane %v412, %v416
        %v467 = vunpack.c.l.b16 %v360
        %v468 = vunpack.c.l.b16 %v361
        %v469 = vunpack.c.l.b16 %v362
        %v470 = vunpack.c.l.b16 %v363
        %v471 = vunpack.c.l.b16 %v364
        %v472 = vunpack.c.l.b16 %v365
        %v473 = vunpack.c.l.b16 %v366
        %v474 = vunpack.c.l.b16 %v367
        %v475 = vunpack.c.l.b16 %v368
        %v476 = vunpack.c.l.b16 %v369
        %v477 = vunpack.c.l.b16 %v370
        %v478 = vunpack.c.l.b16 %v371
        %v479 = vunpack.c.l.b16 %v372
        %v480 = vunpack.c.l.b16 %v373
        %v481 = vunpack.c.l.b16 %v374
        %v482 = vunpack.c.l.b16 %v375
        %v483 = vunpack.c.l.b16 %v376
        %v484 = vunpack.c.l.b16 %v377
        %v485 = vunpack.c.l.b16 %v378
        %v486 = vunpack.c.l.b16 %v379
        %v487 = vunpack.c.l.b16 %v380
        %v488 = vunpack.c.l.b16 %v381
        %v489 = vunpack.c.l.b16 %v382
        %v490 = vunpack.c.l.b16 %v383
        %v491 = vunpack.c.l.b16 %v384
        %v492 = vunpack.c.l.b16 %v385
        %v493 = vunpack.c.l.b16 %v386
        %v494 = vunpack.c.l.b16 %v387
        %v495 = vunpack.c.l.b16 %v388
        %v496 = vunpack.c.l.b16 %v389
        %v497 = vunpack.c.l.b16 %v390
        %v498 = vunpack.c.l.b16 %v391
        %v499 = vunpack.c.l.b16 %v392
        %v500 = vunpack.c.l.b16 %v393
        %v501 = vunpack.c.l.b16 %v394
        %v502 = vunpack.c.l.b16 %v395
        %v503 = vunpack.c.l.b16 %v396
        %v504 = vunpack.c.l.b16 %v397
        %v505 = vunpack.c.l.b16 %v398
        %v506 = vunpack.c.l.b16 %v399
        %v507 = vunpack.c.l.b16 %v400
        %v508 = vunpack.c.l.b16 %v401
        %v509 = vunpack.c.l.b16 %v402
        %v510 = vunpack.c.l.b16 %v403
        %v511 = vunpack.c.l.b16 %v404
        %v512 = vunpack.c.l.b16 %v405
        %v513 = vunpack.c.l.b16 %v406
        %v514 = vunpack.c.l.b16 %v407
        %v515 = vpack.c.b16 %v468, %v467
        %v516 = vpack.c.b16 %v470, %v469
        %v517 = vpack.c.b16 %v472, %v471
        %v518 = vpack.c.b16 %v474, %v473
        %v519 = vpack.c.b16 %v476, %v475
        %v520 = vpack.c.b16 %v478, %v477
        %v521 = vpack.c.b16 %v480, %v479
        %v522 = vpack.c.b16 %v482, %v481
        %v523 = vpack.c.b16 %v484, %v483
        %v524 = vpack.c.b16 %v486, %v485
        %v525 = vpack.c.b16 %v488, %v487
        %v526 = vpack.c.b16 %v490, %v489
        %v527 = vpack.c.b16 %v492, %v491
        %v528 = vpack.c.b16 %v494, %v493
        %v529 = vpack.c.b16 %v496, %v495
        %v530 = vpack.c.b16 %v498, %v497
        %v531 = vpack.c.b16 %v500, %v499
        %v532 = vpack.c.b16 %v502, %v501
        %v533 = vpack.c.b16 %v504, %v503
        %v534 = vpack.c.b16 %v506, %v505
        %v535 = vpack.c.b16 %v508, %v507
        %v536 = vpack.c.b16 %v510, %v509
        %v537 = vpack.c.b16 %v512, %v511
        %v538 = vpack.c.b16 %v514, %v513
        %v543 = vunpack.c.l.b16 %v408
        %v544 = vunpack.c.l.b16 %v409
        %v545 = vunpack.c.l.b16 %v410
        %v546 = vunpack.c.l.b16 %v411
        %v547 = vpack.c.b16 %v544, %v543
        %v548 = vpack.c.b16 %v546, %v545
        %vm551 = vcmask 261120
        %v553 = vsel %vm551, %v515, 0
        %v556 = vsel %vm551, %v516, 0
        %v559 = vsel %vm551, %v517, 0
        %v562 = vsel %vm551, %v518, 0
        %v565 = vsel %vm551, %v519, 0
        %v568 = vsel %vm551, %v520, 0
        %v571 = vsel %vm551, %v521, 0
        %v574 = vsel %vm551, %v522, 0
        %v577 = vsel %vm551, %v523, 0
        %v580 = vsel %vm551, %v524, 0
        %v583 = vsel %vm551, %v525, 0
        %v586 = vsel %vm551, %v526, 0
        %v589 = vsel %vm551, %v527, 0
        %v592 = vsel %vm551, %v528, 0
        %v595 = vsel %vm551, %v529, 0
        %v598 = vsel %vm551, %v530, 0
        %v601 = vsel %vm551, %v531, 0
        %v604 = vsel %vm551, %v532, 0
        %v607 = vsel %vm551, %v533, 0
        %v610 = vsel %vm551, %v534, 0
        %v613 = vsel %vm551, %v535, 0
        %v616 = vsel %vm551, %v536, 0
        %v619 = vsel %vm551, %v537, 0
        %v622 = vsel %vm551, %v538, 0
        %624 = vmatprep.subr.bf16.mxu0 0
        %625 = vmatpush1.bf16.msra.mxu0 %v547
        %626 = vmatprep.subr.bf16.mxu0 0
        %627 = vmatpush1.bf16.msra.mxu0 %v548
        %628 = vmatprep.subr.bf16.mxu0 0
        %629 = vmatpush1.bf16.msra.mxu0 0
        %630 = vmatprep.subr.bf16.mxu0 0
        %631 = vmatpush1.bf16.msra.mxu0 0
        %632 = vmatprep.subr.bf16.mxu0 0
        %633 = vmatpush1.bf16.msra.mxu0 0
        %634 = vmatprep.subr.bf16.mxu0 0
        %635 = vmatpush1.bf16.msra.mxu0 0
        %636 = vmatprep.subr.bf16.mxu0 0
        %637 = vmatpush1.bf16.msra.mxu0 0
        %638 = vmatprep.subr.bf16.mxu0 0
        %639 = vmatpush1.bf16.msra.mxu0 0
        %640 = vmatprep.subr.bf16.mxu0 0
        %641 = vmatpush1.bf16.msra.mxu0 0
        %642 = vmatprep.subr.bf16.mxu0 0
        %643 = vmatpush1.bf16.msra.mxu0 0
        %644 = vmatprep.subr.bf16.mxu0 0
        %645 = vmatpush1.bf16.msra.mxu0 0
        %646 = vmatprep.subr.bf16.mxu0 0
        %647 = vmatpush1.bf16.msra.mxu0 0
        %648 = vmatprep.subr.bf16.mxu0 0
        %649 = vmatpush1.bf16.msra.mxu0 0
        %650 = vmatprep.subr.bf16.mxu0 0
        %651 = vmatpush1.bf16.msra.mxu0 0
        %652 = vmatprep.subr.bf16.mxu0 0
        %653 = vmatpush1.bf16.msra.mxu0 0
        %654 = vmatprep.subr.bf16.mxu0 0
        %655 = vmatpush1.bf16.msra.mxu0 0
        %656 = vmatprep.mubr.bf16.mxu0 0
        %657 = vmatmul.mubr.bf16.gmra.mrb[0].mxu0 %v553
        %v658 = vpop.f32.mrb[0].mxu0
        %v659 = vadd.f32 %v417, %v658
        %v660 = vpop.f32.mrb[0].mxu0
        %v661 = vpop.f32.mrb[0].mxu0
        %v662 = vadd.f32 %v417, %v661
        %v663 = vpop.f32.mrb[0].mxu0
        %664 = vmatprep.mubr.bf16.mxu0 0
        %665 = vmatmul.mubr.bf16.gmra.mrb[0].mxu0 %v556
        %v666 = vpop.f32.mrb[0].mxu0
        %v667 = vadd.f32 %v417, %v666
        %v668 = vpop.f32.mrb[0].mxu0
        %v669 = vpop.f32.mrb[0].mxu0
        %v670 = vadd.f32 %v417, %v669
        %v671 = vpop.f32.mrb[0].mxu0
        %672 = vmatprep.mubr.bf16.mxu0 0
        %673 = vmatmul.mubr.bf16.gmra.mrb[0].mxu0 %v559
        %v674 = vpop.f32.mrb[0].mxu0
        %v675 = vadd.f32 %v417, %v674
        %v676 = vpop.f32.mrb[0].mxu0
        %v677 = vpop.f32.mrb[0].mxu0
        %v678 = vadd.f32 %v417, %v677
        %v679 = vpop.f32.mrb[0].mxu0
        %680 = vmatprep.mubr.bf16.mxu0 0
        %681 = vmatmul.mubr.bf16.gmra.mrb[0].mxu0 %v562
        %v682 = vpop.f32.mrb[0].mxu0
        %v683 = vadd.f32 %v417, %v682
        %v684 = vpop.f32.mrb[0].mxu0
        %v685 = vpop.f32.mrb[0].mxu0
        %v686 = vadd.f32 %v417, %v685
        %v687 = vpop.f32.mrb[0].mxu0
        %688 = vmatprep.mubr.bf16.mxu0 0
        %689 = vmatmul.mubr.bf16.gmra.mrb[0].mxu0 %v565
        %v690 = vpop.f32.mrb[0].mxu0
        %v691 = vadd.f32 %v417, %v690
        %v692 = vpop.f32.mrb[0].mxu0
        %v693 = vpop.f32.mrb[0].mxu0
        %v694 = vadd.f32 %v417, %v693
        %v695 = vpop.f32.mrb[0].mxu0
        %696 = vmatprep.mubr.bf16.mxu0 0
        %697 = vmatmul.mubr.bf16.gmra.mrb[0].mxu0 %v568
        %v698 = vpop.f32.mrb[0].mxu0
        %v699 = vadd.f32 %v417, %v698
        %v700 = vpop.f32.mrb[0].mxu0
        %v701 = vpop.f32.mrb[0].mxu0
        %v702 = vadd.f32 %v417, %v701
        %v703 = vpop.f32.mrb[0].mxu0
        %704 = vmatprep.mubr.bf16.mxu0 0
        %705 = vmatmul.mubr.bf16.gmra.mrb[0].mxu0 %v571
        %v706 = vpop.f32.mrb[0].mxu0
        %v707 = vadd.f32 %v417, %v706
        %v708 = vpop.f32.mrb[0].mxu0
        %v709 = vpop.f32.mrb[0].mxu0
        %v710 = vadd.f32 %v417, %v709
        %v711 = vpop.f32.mrb[0].mxu0
        %712 = vmatprep.mubr.bf16.mxu0 0
        %713 = vmatmul.mubr.bf16.gmra.mrb[0].mxu0 %v574
        %v714 = vpop.f32.mrb[0].mxu0
        %v715 = vadd.f32 %v417, %v714
        %v716 = vpop.f32.mrb[0].mxu0
        %v717 = vpop.f32.mrb[0].mxu0
        %v718 = vadd.f32 %v417, %v717
        %v719 = vpop.f32.mrb[0].mxu0
        %720 = vmatprep.mubr.bf16.mxu0 0
        %721 = vmatmul.mubr.bf16.gmra.mrb[0].mxu0 %v577
        %v722 = vpop.f32.mrb[0].mxu0
        %v723 = vadd.f32 %v417, %v722
        %v724 = vpop.f32.mrb[0].mxu0
        %v725 = vpop.f32.mrb[0].mxu0
        %v726 = vadd.f32 %v417, %v725
        %v727 = vpop.f32.mrb[0].mxu0
        %728 = vmatprep.mubr.bf16.mxu0 0
        %729 = vmatmul.mubr.bf16.gmra.mrb[0].mxu0 %v580
        %v730 = vpop.f32.mrb[0].mxu0
        %v731 = vadd.f32 %v417, %v730
        %v732 = vpop.f32.mrb[0].mxu0
        %v733 = vpop.f32.mrb[0].mxu0
        %v734 = vadd.f32 %v417, %v733
        %v735 = vpop.f32.mrb[0].mxu0
        %736 = vmatprep.mubr.bf16.mxu0 0
        %737 = vmatmul.mubr.bf16.gmra.mrb[0].mxu0 %v583
        %v738 = vpop.f32.mrb[0].mxu0
        %v739 = vadd.f32 %v417, %v738
        %v740 = vpop.f32.mrb[0].mxu0
        %v741 = vpop.f32.mrb[0].mxu0
        %v742 = vadd.f32 %v417, %v741
        %v743 = vpop.f32.mrb[0].mxu0
        %744 = vmatprep.mubr.bf16.mxu0 0
        %745 = vmatmul.mubr.bf16.gmra.mrb[0].mxu0 %v586
        %v746 = vpop.f32.mrb[0].mxu0
        %v747 = vadd.f32 %v417, %v746
        %v748 = vpop.f32.mrb[0].mxu0
        %v749 = vpop.f32.mrb[0].mxu0
        %v750 = vadd.f32 %v417, %v749
        %v751 = vpop.f32.mrb[0].mxu0
        %752 = vmatprep.mubr.bf16.mxu0 0
        %753 = vmatmul.mubr.bf16.gmra.mrb[0].mxu0 %v589
        %v754 = vpop.f32.mrb[0].mxu0
        %v755 = vadd.f32 %v417, %v754
        %v756 = vpop.f32.mrb[0].mxu0
        %v757 = vpop.f32.mrb[0].mxu0
        %v758 = vadd.f32 %v417, %v757
        %v759 = vpop.f32.mrb[0].mxu0
        %760 = vmatprep.mubr.bf16.mxu0 0
        %761 = vmatmul.mubr.bf16.gmra.mrb[0].mxu0 %v592
        %v762 = vpop.f32.mrb[0].mxu0
        %v763 = vadd.f32 %v417, %v762
        %v764 = vpop.f32.mrb[0].mxu0
        %v765 = vpop.f32.mrb[0].mxu0
        %v766 = vadd.f32 %v417, %v765
        %v767 = vpop.f32.mrb[0].mxu0
        %768 = vmatprep.mubr.bf16.mxu0 0
        %769 = vmatmul.mubr.bf16.gmra.mrb[0].mxu0 %v595
        %v770 = vpop.f32.mrb[0].mxu0
        %v771 = vadd.f32 %v417, %v770
        %v772 = vpop.f32.mrb[0].mxu0
        %v773 = vpop.f32.mrb[0].mxu0
        %v774 = vadd.f32 %v417, %v773
        %v775 = vpop.f32.mrb[0].mxu0
        %776 = vmatprep.mubr.bf16.mxu0 0
        %777 = vmatmul.mubr.bf16.gmra.mrb[0].mxu0 %v598
        %v778 = vpop.f32.mrb[0].mxu0
        %v779 = vadd.f32 %v417, %v778
        %v780 = vpop.f32.mrb[0].mxu0
        %v781 = vpop.f32.mrb[0].mxu0
        %v782 = vadd.f32 %v417, %v781
        %v783 = vpop.f32.mrb[0].mxu0
        %784 = vmatprep.mubr.bf16.mxu0 0
        %785 = vmatmul.mubr.bf16.gmra.mrb[0].mxu0 %v601
        %v786 = vpop.f32.mrb[0].mxu0
        %v787 = vadd.f32 %v417, %v786
        %v788 = vpop.f32.mrb[0].mxu0
        %v789 = vpop.f32.mrb[0].mxu0
        %v790 = vadd.f32 %v417, %v789
        %v791 = vpop.f32.mrb[0].mxu0
        %792 = vmatprep.mubr.bf16.mxu0 0
        %793 = vmatmul.mubr.bf16.gmra.mrb[0].mxu0 %v604
        %v794 = vpop.f32.mrb[0].mxu0
        %v795 = vadd.f32 %v417, %v794
        %v796 = vpop.f32.mrb[0].mxu0
        %v797 = vpop.f32.mrb[0].mxu0
        %v798 = vadd.f32 %v417, %v797
        %v799 = vpop.f32.mrb[0].mxu0
        %800 = vmatprep.mubr.bf16.mxu0 0
        %801 = vmatmul.mubr.bf16.gmra.mrb[0].mxu0 %v607
        %v802 = vpop.f32.mrb[0].mxu0
        %v803 = vadd.f32 %v417, %v802
        %v804 = vpop.f32.mrb[0].mxu0
        %v805 = vpop.f32.mrb[0].mxu0
        %v806 = vadd.f32 %v417, %v805
        %v807 = vpop.f32.mrb[0].mxu0
        %808 = vmatprep.mubr.bf16.mxu0 0
        %809 = vmatmul.mubr.bf16.gmra.mrb[0].mxu0 %v610
        %v810 = vpop.f32.mrb[0].mxu0
        %v811 = vadd.f32 %v417, %v810
        %v812 = vpop.f32.mrb[0].mxu0
        %v813 = vpop.f32.mrb[0].mxu0
        %v814 = vadd.f32 %v417, %v813
        %v815 = vpop.f32.mrb[0].mxu0
        %816 = vmatprep.mubr.bf16.mxu0 0
        %817 = vmatmul.mubr.bf16.gmra.mrb[0].mxu0 %v613
        %v818 = vpop.f32.mrb[0].mxu0
        %v819 = vadd.f32 %v417, %v818
        %v820 = vpop.f32.mrb[0].mxu0
        %v821 = vpop.f32.mrb[0].mxu0
        %v822 = vadd.f32 %v417, %v821
        %v823 = vpop.f32.mrb[0].mxu0
        %824 = vmatprep.mubr.bf16.mxu0 0
        %825 = vmatmul.mubr.bf16.gmra.mrb[0].mxu0 %v616
        %v826 = vpop.f32.mrb[0].mxu0
        %v827 = vadd.f32 %v417, %v826
        %v828 = vpop.f32.mrb[0].mxu0
        %v829 = vpop.f32.mrb[0].mxu0
        %v830 = vadd.f32 %v417, %v829
        %v831 = vpop.f32.mrb[0].mxu0
        %832 = vmatprep.mubr.bf16.mxu0 0
        %833 = vmatmul.mubr.bf16.gmra.mrb[0].mxu0 %v619
        %v834 = vpop.f32.mrb[0].mxu0
        %v835 = vadd.f32 %v417, %v834
        %v836 = vpop.f32.mrb[0].mxu0
        %v837 = vpop.f32.mrb[0].mxu0
        %v838 = vadd.f32 %v417, %v837
        %v839 = vpop.f32.mrb[0].mxu0
        %840 = vmatprep.mubr.bf16.mxu0 0
        %841 = vmatmul.mubr.bf16.gmra.mrb[0].mxu0 %v622
        %v842 = vpop.f32.mrb[0].mxu0
        %v843 = vadd.f32 %v417, %v842
        %v844 = vpop.f32.mrb[0].mxu0
        %v845 = vpop.f32.mrb[0].mxu0
        %v846 = vadd.f32 %v417, %v845
        %v847 = vpop.f32.mrb[0].mxu0
        %848 = vdwg.mxu0
        %s849 = sld [smem:[#allocation4]]
        %vm850 = vcmp.gt.f32.partialorder %v659, 0.0
        %vm851 = vcmp.gt.f32.partialorder %v662, 0.0
        %vm852 = vcmp.gt.f32.partialorder %v667, 0.0
        %vm853 = vcmp.gt.f32.partialorder %v670, 0.0
        %vm854 = vcmp.gt.f32.partialorder %v675, 0.0
        %vm855 = vcmp.gt.f32.partialorder %v678, 0.0
        %vm856 = vcmp.gt.f32.partialorder %v683, 0.0
        %vm857 = vcmp.gt.f32.partialorder %v686, 0.0
        %vm858 = vcmp.gt.f32.partialorder %v691, 0.0
        %vm859 = vcmp.gt.f32.partialorder %v694, 0.0
        %vm860 = vcmp.gt.f32.partialorder %v699, 0.0
        %vm861 = vcmp.gt.f32.partialorder %v702, 0.0
        %vm862 = vcmp.gt.f32.partialorder %v707, 0.0
        %vm863 = vcmp.gt.f32.partialorder %v710, 0.0
        %vm864 = vcmp.gt.f32.partialorder %v715, 0.0
        %vm865 = vcmp.gt.f32.partialorder %v718, 0.0
        %vm866 = vcmp.gt.f32.partialorder %v723, 0.0
        %vm867 = vcmp.gt.f32.partialorder %v726, 0.0
        %vm868 = vcmp.gt.f32.partialorder %v731, 0.0
        %vm869 = vcmp.gt.f32.partialorder %v734, 0.0
        %vm870 = vcmp.gt.f32.partialorder %v739, 0.0
        %vm871 = vcmp.gt.f32.partialorder %v742, 0.0
        %vm872 = vcmp.gt.f32.partialorder %v747, 0.0
        %vm873 = vcmp.gt.f32.partialorder %v750, 0.0
        %vm874 = vcmp.gt.f32.partialorder %v755, 0.0
        %vm875 = vcmp.gt.f32.partialorder %v758, 0.0
        %vm876 = vcmp.gt.f32.partialorder %v763, 0.0
        %vm877 = vcmp.gt.f32.partialorder %v766, 0.0
        %vm878 = vcmp.gt.f32.partialorder %v771, 0.0
        %vm879 = vcmp.gt.f32.partialorder %v774, 0.0
        %vm880 = vcmp.gt.f32.partialorder %v779, 0.0
        %vm881 = vcmp.gt.f32.partialorder %v782, 0.0
        %vm882 = vcmp.gt.f32.partialorder %v787, 0.0
        %vm883 = vcmp.gt.f32.partialorder %v790, 0.0
        %vm884 = vcmp.gt.f32.partialorder %v795, 0.0
        %vm885 = vcmp.gt.f32.partialorder %v798, 0.0
        %vm886 = vcmp.gt.f32.partialorder %v803, 0.0
        %vm887 = vcmp.gt.f32.partialorder %v806, 0.0
        %vm888 = vcmp.gt.f32.partialorder %v811, 0.0
        %vm889 = vcmp.gt.f32.partialorder %v814, 0.0
        %vm890 = vcmp.gt.f32.partialorder %v819, 0.0
        %vm891 = vcmp.gt.f32.partialorder %v822, 0.0
        %vm892 = vcmp.gt.f32.partialorder %v827, 0.0
        %vm893 = vcmp.gt.f32.partialorder %v830, 0.0
        %vm894 = vcmp.gt.f32.partialorder %v835, 0.0
        %vm895 = vcmp.gt.f32.partialorder %v838, 0.0
        %vm896 = vcmp.gt.f32.partialorder %v843, 0.0
        %vm897 = vcmp.gt.f32.partialorder %v846, 0.0
        %v898 = vstv %s849
        %v899 = vmul.f32 %v659, %v898
        %v900 = vmul.f32 %v662, %v898
        %v901 = vmul.f32 %v667, %v898
        %v902 = vmul.f32 %v670, %v898
        %v903 = vmul.f32 %v675, %v898
        %v904 = vmul.f32 %v678, %v898
        %v905 = vmul.f32 %v683, %v898
        %v906 = vmul.f32 %v686, %v898
        %v907 = vmul.f32 %v691, %v898
        %v908 = vmul.f32 %v694, %v898
        %v909 = vmul.f32 %v699, %v898
        %v910 = vmul.f32 %v702, %v898
        %v911 = vmul.f32 %v707, %v898
        %v912 = vmul.f32 %v710, %v898
        %v913 = vmul.f32 %v715, %v898
        %v914 = vmul.f32 %v718, %v898
        %v915 = vmul.f32 %v723, %v898
        %v916 = vmul.f32 %v726, %v898
        %v917 = vmul.f32 %v731, %v898
        %v918 = vmul.f32 %v734, %v898
        %v919 = vmul.f32 %v739, %v898
        %v920 = vmul.f32 %v742, %v898
        %v921 = vmul.f32 %v747, %v898
        %v922 = vmul.f32 %v750, %v898
        %v923 = vmul.f32 %v755, %v898
        %v924 = vmul.f32 %v758, %v898
        %v925 = vmul.f32 %v763, %v898
        %v926 = vmul.f32 %v766, %v898
        %v927 = vmul.f32 %v771, %v898
        %v928 = vmul.f32 %v774, %v898
        %v929 = vmul.f32 %v779, %v898
        %v930 = vmul.f32 %v782, %v898
        %v931 = vmul.f32 %v787, %v898
        %v932 = vmul.f32 %v790, %v898
        %v933 = vmul.f32 %v795, %v898
        %v934 = vmul.f32 %v798, %v898
        %v935 = vmul.f32 %v803, %v898
        %v936 = vmul.f32 %v806, %v898
        %v937 = vmul.f32 %v811, %v898
        %v938 = vmul.f32 %v814, %v898
        %v939 = vmul.f32 %v819, %v898
        %v940 = vmul.f32 %v822, %v898
        %v941 = vmul.f32 %v827, %v898
        %v942 = vmul.f32 %v830, %v898
        %v943 = vmul.f32 %v835, %v898
        %v944 = vmul.f32 %v838, %v898
        %v945 = vmul.f32 %v843, %v898
        %v946 = vmul.f32 %v846, %v898
        %v947 = vsel %vm850, %v659, %v899
        %v948 = vsel %vm851, %v662, %v900
        %v949 = vsel %vm852, %v667, %v901
        %v950 = vsel %vm853, %v670, %v902
        %v951 = vsel %vm854, %v675, %v903
        %v952 = vsel %vm855, %v678, %v904
        %v953 = vsel %vm856, %v683, %v905
        %v954 = vsel %vm857, %v686, %v906
        %v955 = vsel %vm858, %v691, %v907
        %v956 = vsel %vm859, %v694, %v908
        %v957 = vsel %vm860, %v699, %v909
        %v958 = vsel %vm861, %v702, %v910
        %v959 = vsel %vm862, %v707, %v911
        %v960 = vsel %vm863, %v710, %v912
        %v961 = vsel %vm864, %v715, %v913
        %v962 = vsel %vm865, %v718, %v914
        %v963 = vsel %vm866, %v723, %v915
        %v964 = vsel %vm867, %v726, %v916
        %v965 = vsel %vm868, %v731, %v917
        %v966 = vsel %vm869, %v734, %v918
        %v967 = vsel %vm870, %v739, %v919
        %v968 = vsel %vm871, %v742, %v920
        %v969 = vsel %vm872, %v747, %v921
        %v970 = vsel %vm873, %v750, %v922
        %v971 = vsel %vm874, %v755, %v923
        %v972 = vsel %vm875, %v758, %v924
        %v973 = vsel %vm876, %v763, %v925
        %v974 = vsel %vm877, %v766, %v926
        %v975 = vsel %vm878, %v771, %v927
        %v976 = vsel %vm879, %v774, %v928
        %v977 = vsel %vm880, %v779, %v929
        %v978 = vsel %vm881, %v782, %v930
        %v979 = vsel %vm882, %v787, %v931
        %v980 = vsel %vm883, %v790, %v932
        %v981 = vsel %vm884, %v795, %v933
        %v982 = vsel %vm885, %v798, %v934
        %v983 = vsel %vm886, %v803, %v935
        %v984 = vsel %vm887, %v806, %v936
        %v985 = vsel %vm888, %v811, %v937
        %v986 = vsel %vm889, %v814, %v938
        %v987 = vsel %vm890, %v819, %v939
        %v988 = vsel %vm891, %v822, %v940
        %v989 = vsel %vm892, %v827, %v941
        %v990 = vsel %vm893, %v830, %v942
        %v991 = vsel %vm894, %v835, %v943
        %v992 = vsel %vm895, %v838, %v944
        %v993 = vsel %vm896, %v843, %v945
        %v994 = vsel %vm897, %v846, %v946
        %v995 = vlaneseq
        %v996 = vshrl.u32 %v995, 7
        %v997 = vadd.s32 %v996, 8
        %v998 = vadd.s32 %v996, 16
        %vm999 = vcmp.ge.s32.totalorder %v996, 1
        %vm1000 = vcmp.ge.s32.totalorder %v997, 1
        %vm1001 = vcmp.ge.s32.totalorder %v998, 1
        %vm1002 = vcmp.le.s32.totalorder %v996, 16
        %vm1003 = vcmp.le.s32.totalorder %v997, 16
        %vm1004 = vcmp.le.s32.totalorder %v998, 16
        %vm1005 = vmand %vm999, %vm1002
        %vm1006 = vmand %vm1000, %vm1003
        %vm1007 = vmand %vm1001, %vm1004
        %v1008 = vsel %vm1005, %v947, 0.0
        %v1009 = vsel %vm1006, %v948, 0.0
        %v1010 = vsel %vm1007, %v949, 0.0
        %v1011 = vsel %vm1005, %v950, 0.0
        %v1012 = vsel %vm1006, %v951, 0.0
        %v1013 = vsel %vm1007, %v952, 0.0
        %v1014 = vsel %vm1005, %v953, 0.0
        %v1015 = vsel %vm1006, %v954, 0.0
        %v1016 = vsel %vm1007, %v955, 0.0
        %v1017 = vsel %vm1005, %v956, 0.0
        %v1018 = vsel %vm1006, %v957, 0.0
        %v1019 = vsel %vm1007, %v958, 0.0
        %v1020 = vsel %vm1005, %v959, 0.0
        %v1021 = vsel %vm1006, %v960, 0.0
        %v1022 = vsel %vm1007, %v961, 0.0
        %v1023 = vsel %vm1005, %v962, 0.0
        %v1024 = vsel %vm1006, %v963, 0.0
        %v1025 = vsel %vm1007, %v964, 0.0
        %v1026 = vsel %vm1005, %v965, 0.0
        %v1027 = vsel %vm1006, %v966, 0.0
        %v1028 = vsel %vm1007, %v967, 0.0
        %v1029 = vsel %vm1005, %v968, 0.0
        %v1030 = vsel %vm1006, %v969, 0.0
        %v1031 = vsel %vm1007, %v970, 0.0
        %v1032 = vsel %vm1005, %v971, 0.0
        %v1033 = vsel %vm1006, %v972, 0.0
        %v1034 = vsel %vm1007, %v973, 0.0
        %v1035 = vsel %vm1005, %v974, 0.0
        %v1036 = vsel %vm1006, %v975, 0.0
        %v1037 = vsel %vm1007, %v976, 0.0
        %v1038 = vsel %vm1005, %v977, 0.0
        %v1039 = vsel %vm1006, %v978, 0.0
        %v1040 = vsel %vm1007, %v979, 0.0
        %v1041 = vsel %vm1005, %v980, 0.0
        %v1042 = vsel %vm1006, %v981, 0.0
        %v1043 = vsel %vm1007, %v982, 0.0
        %v1044 = vsel %vm1005, %v983, 0.0
        %v1045 = vsel %vm1006, %v984, 0.0
        %v1046 = vsel %vm1007, %v985, 0.0
        %v1047 = vsel %vm1005, %v986, 0.0
        %v1048 = vsel %vm1006, %v987, 0.0
        %v1049 = vsel %vm1007, %v988, 0.0
        %v1050 = vsel %vm1005, %v989, 0.0
        %v1051 = vsel %vm1006, %v990, 0.0
        %v1052 = vsel %vm1007, %v991, 0.0
        %v1053 = vsel %vm1005, %v992, 0.0
        %v1054 = vsel %vm1006, %v993, 0.0
        %v1055 = vsel %vm1007, %v994, 0.0
        %v1056 = vpack.c.bf16 %v1009, %v1008
        %v1057 = vpack.c.bf16 %v1010, %v1010
        %v1058 = vpack.c.bf16 %v1012, %v1011
        %v1059 = vpack.c.bf16 %v1013, %v1013
        %v1060 = vpack.c.bf16 %v1015, %v1014
        %v1061 = vpack.c.bf16 %v1016, %v1016
        %v1062 = vpack.c.bf16 %v1018, %v1017
        %v1063 = vpack.c.bf16 %v1019, %v1019
        %v1064 = vpack.c.bf16 %v1021, %v1020
        %v1065 = vpack.c.bf16 %v1022, %v1022
        %v1066 = vpack.c.bf16 %v1024, %v1023
        %v1067 = vpack.c.bf16 %v1025, %v1025
        %v1068 = vpack.c.bf16 %v1027, %v1026
        %v1069 = vpack.c.bf16 %v1028, %v1028
        %v1070 = vpack.c.bf16 %v1030, %v1029
        %v1071 = vpack.c.bf16 %v1031, %v1031
        %v1072 = vpack.c.bf16 %v1033, %v1032
        %v1073 = vpack.c.bf16 %v1034, %v1034
        %v1074 = vpack.c.bf16 %v1036, %v1035
        %v1075 = vpack.c.bf16 %v1037, %v1037
        %v1076 = vpack.c.bf16 %v1039, %v1038
        %v1077 = vpack.c.bf16 %v1040, %v1040
        %v1078 = vpack.c.bf16 %v1042, %v1041
        %v1079 = vpack.c.bf16 %v1043, %v1043
        %v1080 = vpack.c.bf16 %v1045, %v1044
        %v1081 = vpack.c.bf16 %v1046, %v1046
        %v1082 = vpack.c.bf16 %v1048, %v1047
        %v1083 = vpack.c.bf16 %v1049, %v1049
        %v1084 = vpack.c.bf16 %v1051, %v1050
        %v1085 = vpack.c.bf16 %v1052, %v1052
        %v1086 = vpack.c.bf16 %v1054, %v1053
        %v1087 = vpack.c.bf16 %v1055, %v1055
        %v1120 = vunpack.c.l.b16 %v1056
        %v1121 = vunpack.c.h.b16 %v1056
        %v1122 = vunpack.c.l.b16 %v1057
        %v1123 = vunpack.c.l.b16 %v1058
        %v1124 = vunpack.c.h.b16 %v1058
        %v1125 = vunpack.c.l.b16 %v1059
        %v1126 = vunpack.c.l.b16 %v1060
        %v1127 = vunpack.c.h.b16 %v1060
        %v1128 = vunpack.c.l.b16 %v1061
        %v1129 = vunpack.c.l.b16 %v1062
        %v1130 = vunpack.c.h.b16 %v1062
        %v1131 = vunpack.c.l.b16 %v1063
        %v1132 = vunpack.c.l.b16 %v1064
        %v1133 = vunpack.c.h.b16 %v1064
        %v1134 = vunpack.c.l.b16 %v1065
        %v1135 = vunpack.c.l.b16 %v1066
        %v1136 = vunpack.c.h.b16 %v1066
        %v1137 = vunpack.c.l.b16 %v1067
        %v1138 = vunpack.c.l.b16 %v1068
        %v1139 = vunpack.c.h.b16 %v1068
        %v1140 = vunpack.c.l.b16 %v1069
        %v1141 = vunpack.c.l.b16 %v1070
        %v1142 = vunpack.c.h.b16 %v1070
        %v1143 = vunpack.c.l.b16 %v1071
        %v1144 = vunpack.c.l.b16 %v1072
        %v1145 = vunpack.c.h.b16 %v1072
        %v1146 = vunpack.c.l.b16 %v1073
        %v1147 = vunpack.c.l.b16 %v1074
        %v1148 = vunpack.c.h.b16 %v1074
        %v1149 = vunpack.c.l.b16 %v1075
        %v1150 = vunpack.c.l.b16 %v1076
        %v1151 = vunpack.c.h.b16 %v1076
        %v1152 = vunpack.c.l.b16 %v1077
        %v1153 = vunpack.c.l.b16 %v1078
        %v1154 = vunpack.c.h.b16 %v1078
        %v1155 = vunpack.c.l.b16 %v1079
        %v1156 = vunpack.c.l.b16 %v1080
        %v1157 = vunpack.c.h.b16 %v1080
        %v1158 = vunpack.c.l.b16 %v1081
        %v1159 = vunpack.c.l.b16 %v1082
        %v1160 = vunpack.c.h.b16 %v1082
        %v1161 = vunpack.c.l.b16 %v1083
        %v1162 = vunpack.c.l.b16 %v1084
        %v1163 = vunpack.c.h.b16 %v1084
        %v1164 = vunpack.c.l.b16 %v1085
        %v1165 = vunpack.c.l.b16 %v1086
        %v1166 = vunpack.c.h.b16 %v1086
        %v1167 = vunpack.c.l.b16 %v1087
        %v1168 = vpack.c.b16 %v1120, %v1120
        %v1169 = vpack.c.b16 %v1121, %v1121
        %v1170 = vpack.c.b16 %v1122, %v1122
        %v1171 = vpack.c.b16 %v1123, %v1123
        %v1172 = vpack.c.b16 %v1124, %v1124
        %v1173 = vpack.c.b16 %v1125, %v1125
        %v1174 = vpack.c.b16 %v1126, %v1126
        %v1175 = vpack.c.b16 %v1127, %v1127
        %v1176 = vpack.c.b16 %v1128, %v1128
        %v1177 = vpack.c.b16 %v1129, %v1129
        %v1178 = vpack.c.b16 %v1130, %v1130
        %v1179 = vpack.c.b16 %v1131, %v1131
        %v1180 = vpack.c.b16 %v1132, %v1132
        %v1181 = vpack.c.b16 %v1133, %v1133
        %v1182 = vpack.c.b16 %v1134, %v1134
        %v1183 = vpack.c.b16 %v1135, %v1135
        %v1184 = vpack.c.b16 %v1136, %v1136
        %v1185 = vpack.c.b16 %v1137, %v1137
        %v1186 = vpack.c.b16 %v1138, %v1138
        %v1187 = vpack.c.b16 %v1139, %v1139
        %v1188 = vpack.c.b16 %v1140, %v1140
        %v1189 = vpack.c.b16 %v1141, %v1141
        %v1190 = vpack.c.b16 %v1142, %v1142
        %v1191 = vpack.c.b16 %v1143, %v1143
        %v1192 = vpack.c.b16 %v1144, %v1144
        %v1193 = vpack.c.b16 %v1145, %v1145
        %v1194 = vpack.c.b16 %v1146, %v1146
        %v1195 = vpack.c.b16 %v1147, %v1147
        %v1196 = vpack.c.b16 %v1148, %v1148
        %v1197 = vpack.c.b16 %v1149, %v1149
        %v1198 = vpack.c.b16 %v1150, %v1150
        %v1199 = vpack.c.b16 %v1151, %v1151
        %v1200 = vpack.c.b16 %v1152, %v1152
        %v1201 = vpack.c.b16 %v1153, %v1153
        %v1202 = vpack.c.b16 %v1154, %v1154
        %v1203 = vpack.c.b16 %v1155, %v1155
        %v1204 = vpack.c.b16 %v1156, %v1156
        %v1205 = vpack.c.b16 %v1157, %v1157
        %v1206 = vpack.c.b16 %v1158, %v1158
        %v1207 = vpack.c.b16 %v1159, %v1159
        %v1208 = vpack.c.b16 %v1160, %v1160
        %v1209 = vpack.c.b16 %v1161, %v1161
        %v1210 = vpack.c.b16 %v1162, %v1162
        %v1211 = vpack.c.b16 %v1163, %v1163
        %v1212 = vpack.c.b16 %v1164, %v1164
        %v1213 = vpack.c.b16 %v1165, %v1165
        %v1214 = vpack.c.b16 %v1166, %v1166
        %v1215 = vpack.c.b16 %v1167, %v1167
        %s1264 = scalar_lea.vmem [#allocation2], 12
        %vm1265 = vcmask 519168
        %1266 = vst.msk [vmem:[%s1264] sm:$0xf] %vm1265, %v1168
        %1267 = vst.msk [vmem:[%s1264 + $0x4] sm:$0xf] %vm1265, %v1169
        %1268 = vst.msk [vmem:[%s1264 + $0x8] sm:$0xf] %vm1265, %v1170
        %1269 = vst.msk [vmem:[%s1264 + $0xc] sm:$0xf] %vm1265, %v1171
        %1270 = vst.msk [vmem:[%s1264 + $0x10] sm:$0xf] %vm1265, %v1172
        %1271 = vst.msk [vmem:[%s1264 + $0x14] sm:$0xf] %vm1265, %v1173
        %1272 = vst.msk [vmem:[%s1264 + $0x18] sm:$0xf] %vm1265, %v1174
        %1273 = vst.msk [vmem:[%s1264 + $0x1c] sm:$0xf] %vm1265, %v1175
        %1274 = vst.msk [vmem:[%s1264 + $0x20] sm:$0xf] %vm1265, %v1176
        %1275 = vst.msk [vmem:[%s1264 + $0x24] sm:$0xf] %vm1265, %v1177
        %1276 = vst.msk [vmem:[%s1264 + $0x28] sm:$0xf] %vm1265, %v1178
        %1277 = vst.msk [vmem:[%s1264 + $0x2c] sm:$0xf] %vm1265, %v1179
        %1278 = vst.msk [vmem:[%s1264 + $0x30] sm:$0xf] %vm1265, %v1180
        %1279 = vst.msk [vmem:[%s1264 + $0x34] sm:$0xf] %vm1265, %v1181
        %1280 = vst.msk [vmem:[%s1264 + $0x38] sm:$0xf] %vm1265, %v1182
        %1281 = vst.msk [vmem:[%s1264 + $0x3c] sm:$0xf] %vm1265, %v1183
        %1282 = vst.msk [vmem:[%s1264 + $0x40] sm:$0xf] %vm1265, %v1184
        %1283 = vst.msk [vmem:[%s1264 + $0x44] sm:$0xf] %vm1265, %v1185
        %1284 = vst.msk [vmem:[%s1264 + $0x48] sm:$0xf] %vm1265, %v1186
        %1285 = vst.msk [vmem:[%s1264 + $0x4c] sm:$0xf] %vm1265, %v1187
        %1286 = vst.msk [vmem:[%s1264 + $0x50] sm:$0xf] %vm1265, %v1188
        %1287 = vst.msk [vmem:[%s1264 + $0x54] sm:$0xf] %vm1265, %v1189
        %1288 = vst.msk [vmem:[%s1264 + $0x58] sm:$0xf] %vm1265, %v1190
        %1289 = vst.msk [vmem:[%s1264 + $0x5c] sm:$0xf] %vm1265, %v1191
        %1290 = vst.msk [vmem:[%s1264 + $0x60] sm:$0xf] %vm1265, %v1192
        %1291 = vst.msk [vmem:[%s1264 + $0x64] sm:$0xf] %vm1265, %v1193
        %1292 = vst.msk [vmem:[%s1264 + $0x68] sm:$0xf] %vm1265, %v1194
        %1293 = vst.msk [vmem:[%s1264 + $0x6c] sm:$0xf] %vm1265, %v1195
        %1294 = vst.msk [vmem:[%s1264 + $0x70] sm:$0xf] %vm1265, %v1196
        %1295 = vst.msk [vmem:[%s1264 + $0x74] sm:$0xf] %vm1265, %v1197
        %1296 = vst.msk [vmem:[%s1264 + $0x78] sm:$0xf] %vm1265, %v1198
        %1297 = vst.msk [vmem:[%s1264 + $0x7c] sm:$0xf] %vm1265, %v1199
        %1298 = vst.msk [vmem:[%s1264 + $0x80] sm:$0xf] %vm1265, %v1200
        %1299 = vst.msk [vmem:[%s1264 + $0x84] sm:$0xf] %vm1265, %v1201
        %1300 = vst.msk [vmem:[%s1264 + $0x88] sm:$0xf] %vm1265, %v1202
        %1301 = vst.msk [vmem:[%s1264 + $0x8c] sm:$0xf] %vm1265, %v1203
        %1302 = vst.msk [vmem:[%s1264 + $0x90] sm:$0xf] %vm1265, %v1204
        %1303 = vst.msk [vmem:[%s1264 + $0x94] sm:$0xf] %vm1265, %v1205
        %1304 = vst.msk [vmem:[%s1264 + $0x98] sm:$0xf] %vm1265, %v1206
        %1305 = vst.msk [vmem:[%s1264 + $0x9c] sm:$0xf] %vm1265, %v1207
        %1306 = vst.msk [vmem:[%s1264 + $0xa0] sm:$0xf] %vm1265, %v1208
        %1307 = vst.msk [vmem:[%s1264 + $0xa4] sm:$0xf] %vm1265, %v1209
        %1308 = vst.msk [vmem:[%s1264 + $0xa8] sm:$0xf] %vm1265, %v1210
        %1309 = vst.msk [vmem:[%s1264 + $0xac] sm:$0xf] %vm1265, %v1211
        %1310 = vst.msk [vmem:[%s1264 + $0xb0] sm:$0xf] %vm1265, %v1212
        %1311 = vst.msk [vmem:[%s1264 + $0xb4] sm:$0xf] %vm1265, %v1213
        %1312 = vst.msk [vmem:[%s1264 + $0xb8] sm:$0xf] %vm1265, %v1214
        %1313 = vst.msk [vmem:[%s1264 + $0xbc] sm:$0xf] %vm1265, %v1215
        %1314 = vst.msk [vmem:[#allocation2] sm:$0xf] %vm1265, 0
        %1315 = vst.msk [vmem:[#allocation2 + $0x4] sm:$0xf] %vm1265, 0
        %1316 = vst.msk [vmem:[#allocation2 + $0x8] sm:$0xf] %vm1265, 0
        %s1317 = scalar_lea.vmem [#allocation2], 204
        %1318 = vst.msk [vmem:[%s1317] sm:$0xf] %vm1265, 0
        %1319 = vst.msk [vmem:[%s1317 + $0x4] sm:$0xf] %vm1265, 0
        %1320 = vst.msk [vmem:[%s1317 + $0x8] sm:$0xf] %vm1265, 0
        %v1321 = vld [vmem:[#allocation2] sm:$0xf]
        %v1322 = vld [vmem:[#allocation2 + $0x4] sm:$0xf]
        %v1323 = vld [vmem:[#allocation2 + $0xc] sm:$0xf]
        %v1324 = vld [vmem:[#allocation2 + $0x10] sm:$0xf]
        %v1325 = vld [vmem:[#allocation2 + $0x18] sm:$0xf]
        %v1326 = vld [vmem:[#allocation2 + $0x1c] sm:$0xf]
        %v1327 = vld [vmem:[#allocation2 + $0x24] sm:$0xf]
        %v1328 = vld [vmem:[#allocation2 + $0x28] sm:$0xf]
        %v1329 = vld [vmem:[#allocation2 + $0x30] sm:$0xf]
        %v1330 = vld [vmem:[#allocation2 + $0x34] sm:$0xf]
        %v1331 = vld [vmem:[#allocation2 + $0x3c] sm:$0xf]
        %v1332 = vld [vmem:[#allocation2 + $0x40] sm:$0xf]
        %v1333 = vld [vmem:[#allocation2 + $0x48] sm:$0xf]
        %v1334 = vld [vmem:[#allocation2 + $0x4c] sm:$0xf]
        %v1335 = vld [vmem:[#allocation2 + $0x54] sm:$0xf]
        %v1336 = vld [vmem:[#allocation2 + $0x58] sm:$0xf]
        %v1337 = vld [vmem:[#allocation2 + $0x60] sm:$0xf]
        %v1338 = vld [vmem:[#allocation2 + $0x64] sm:$0xf]
        %v1339 = vld [vmem:[#allocation2 + $0x6c] sm:$0xf]
        %v1340 = vld [vmem:[#allocation2 + $0x70] sm:$0xf]
        %v1341 = vld [vmem:[#allocation2 + $0x78] sm:$0xf]
        %v1342 = vld [vmem:[#allocation2 + $0x7c] sm:$0xf]
        %v1343 = vld [vmem:[#allocation2 + $0x84] sm:$0xf]
        %v1344 = vld [vmem:[#allocation2 + $0x88] sm:$0xf]
        %v1345 = vld [vmem:[#allocation2 + $0x90] sm:$0xf]
        %v1346 = vld [vmem:[#allocation2 + $0x94] sm:$0xf]
        %v1347 = vld [vmem:[#allocation2 + $0x9c] sm:$0xf]
        %v1348 = vld [vmem:[#allocation2 + $0xa0] sm:$0xf]
        %v1349 = vld [vmem:[#allocation2 + $0xa8] sm:$0xf]
        %v1350 = vld [vmem:[#allocation2 + $0xac] sm:$0xf]
        %v1351 = vld [vmem:[#allocation2 + $0xb4] sm:$0xf]
        %v1352 = vld [vmem:[#allocation2 + $0xb8] sm:$0xf]
        %v1353 = vld [vmem:[%s1264] sm:$0xf]
        %v1354 = vld [vmem:[%s1264 + $0x4] sm:$0xf]
        %v1355 = vld [vmem:[%s1264 + $0xc] sm:$0xf]
        %v1356 = vld [vmem:[%s1264 + $0x10] sm:$0xf]
        %v1357 = vld [vmem:[%s1264 + $0x18] sm:$0xf]
        %v1358 = vld [vmem:[%s1264 + $0x1c] sm:$0xf]
        %v1359 = vld [vmem:[%s1264 + $0x24] sm:$0xf]
        %v1360 = vld [vmem:[%s1264 + $0x28] sm:$0xf]
        %v1361 = vld [vmem:[%s1264 + $0x30] sm:$0xf]
        %v1362 = vld [vmem:[%s1264 + $0x34] sm:$0xf]
        %v1363 = vld [vmem:[%s1264 + $0x3c] sm:$0xf]
        %v1364 = vld [vmem:[%s1264 + $0x40] sm:$0xf]
        %v1365 = vld [vmem:[%s1264 + $0x48] sm:$0xf]
        %v1366 = vld [vmem:[%s1264 + $0x4c] sm:$0xf]
        %v1367 = vld [vmem:[%s1264 + $0x54] sm:$0xf]
        %v1368 = vld [vmem:[%s1264 + $0x58] sm:$0xf]
        %v1369 = vld [vmem:[%s1264 + $0x60] sm:$0xf]
        %v1370 = vld [vmem:[%s1264 + $0x64] sm:$0xf]
        %v1371 = vld [vmem:[%s1264 + $0x6c] sm:$0xf]
        %v1372 = vld [vmem:[%s1264 + $0x70] sm:$0xf]
        %v1373 = vld [vmem:[%s1264 + $0x78] sm:$0xf]
        %v1374 = vld [vmem:[%s1264 + $0x7c] sm:$0xf]
        %v1375 = vld [vmem:[%s1264 + $0x84] sm:$0xf]
        %v1376 = vld [vmem:[%s1264 + $0x88] sm:$0xf]
        %v1377 = vld [vmem:[%s1264 + $0x90] sm:$0xf]
        %v1378 = vld [vmem:[%s1264 + $0x94] sm:$0xf]
        %v1379 = vld [vmem:[%s1264 + $0x9c] sm:$0xf]
        %v1380 = vld [vmem:[%s1264 + $0xa0] sm:$0xf]
        %v1381 = vld [vmem:[%s1264 + $0xa8] sm:$0xf]
        %v1382 = vld [vmem:[%s1264 + $0xac] sm:$0xf]
        %v1383 = vld [vmem:[%s1264 + $0xb4] sm:$0xf]
        %v1384 = vld [vmem:[%s1264 + $0xb8] sm:$0xf]
        %s1385 = scalar_lea.vmem [#allocation2], 24
        %v1386 = vld [vmem:[%s1385] sm:$0xf]
        %v1387 = vld [vmem:[%s1385 + $0x4] sm:$0xf]
        %v1388 = vld [vmem:[%s1385 + $0xc] sm:$0xf]
        %v1389 = vld [vmem:[%s1385 + $0x10] sm:$0xf]
        %v1390 = vld [vmem:[%s1385 + $0x18] sm:$0xf]
        %v1391 = vld [vmem:[%s1385 + $0x1c] sm:$0xf]
        %v1392 = vld [vmem:[%s1385 + $0x24] sm:$0xf]
        %v1393 = vld [vmem:[%s1385 + $0x28] sm:$0xf]
        %v1394 = vld [vmem:[%s1385 + $0x30] sm:$0xf]
        %v1395 = vld [vmem:[%s1385 + $0x34] sm:$0xf]
        %v1396 = vld [vmem:[%s1385 + $0x3c] sm:$0xf]
        %v1397 = vld [vmem:[%s1385 + $0x40] sm:$0xf]
        %v1398 = vld [vmem:[%s1385 + $0x48] sm:$0xf]
        %v1399 = vld [vmem:[%s1385 + $0x4c] sm:$0xf]
        %v1400 = vld [vmem:[%s1385 + $0x54] sm:$0xf]
        %v1401 = vld [vmem:[%s1385 + $0x58] sm:$0xf]
        %v1402 = vld [vmem:[%s1385 + $0x60] sm:$0xf]
        %v1403 = vld [vmem:[%s1385 + $0x64] sm:$0xf]
        %v1404 = vld [vmem:[%s1385 + $0x6c] sm:$0xf]
        %v1405 = vld [vmem:[%s1385 + $0x70] sm:$0xf]
        %v1406 = vld [vmem:[%s1385 + $0x78] sm:$0xf]
        %v1407 = vld [vmem:[%s1385 + $0x7c] sm:$0xf]
        %v1408 = vld [vmem:[%s1385 + $0x84] sm:$0xf]
        %v1409 = vld [vmem:[%s1385 + $0x88] sm:$0xf]
        %v1410 = vld [vmem:[%s1385 + $0x90] sm:$0xf]
        %v1411 = vld [vmem:[%s1385 + $0x94] sm:$0xf]
        %v1412 = vld [vmem:[%s1385 + $0x9c] sm:$0xf]
        %v1413 = vld [vmem:[%s1385 + $0xa0] sm:$0xf]
        %v1414 = vld [vmem:[%s1385 + $0xa8] sm:$0xf]
        %v1415 = vld [vmem:[%s1385 + $0xac] sm:$0xf]
        %v1416 = vld [vmem:[%s1385 + $0xb4] sm:$0xf]
        %v1417 = vld [vmem:[%s1385 + $0xb8] sm:$0xf]
        %v1450 = vunpack.c.l.b16 %v1321
        %v1451 = vunpack.c.l.b16 %v1322
        %v1452 = vunpack.c.l.b16 %v1323
        %v1453 = vunpack.c.l.b16 %v1324
        %v1454 = vunpack.c.l.b16 %v1325
        %v1455 = vunpack.c.l.b16 %v1326
        %v1456 = vunpack.c.l.b16 %v1327
        %v1457 = vunpack.c.l.b16 %v1328
        %v1458 = vunpack.c.l.b16 %v1329
        %v1459 = vunpack.c.l.b16 %v1330
        %v1460 = vunpack.c.l.b16 %v1331
        %v1461 = vunpack.c.l.b16 %v1332
        %v1462 = vunpack.c.l.b16 %v1333
        %v1463 = vunpack.c.l.b16 %v1334
        %v1464 = vunpack.c.l.b16 %v1335
        %v1465 = vunpack.c.l.b16 %v1336
        %v1466 = vunpack.c.l.b16 %v1337
        %v1467 = vunpack.c.l.b16 %v1338
        %v1468 = vunpack.c.l.b16 %v1339
        %v1469 = vunpack.c.l.b16 %v1340
        %v1470 = vunpack.c.l.b16 %v1341
        %v1471 = vunpack.c.l.b16 %v1342
        %v1472 = vunpack.c.l.b16 %v1343
        %v1473 = vunpack.c.l.b16 %v1344
        %v1474 = vunpack.c.l.b16 %v1345
        %v1475 = vunpack.c.l.b16 %v1346
        %v1476 = vunpack.c.l.b16 %v1347
        %v1477 = vunpack.c.l.b16 %v1348
        %v1478 = vunpack.c.l.b16 %v1349
        %v1479 = vunpack.c.l.b16 %v1350
        %v1480 = vunpack.c.l.b16 %v1351
        %v1481 = vunpack.c.l.b16 %v1352
        %v1482 = vpack.c.b16 %v1451, %v1450
        %v1483 = vpack.c.b16 %v1453, %v1452
        %v1484 = vpack.c.b16 %v1455, %v1454
        %v1485 = vpack.c.b16 %v1457, %v1456
        %v1486 = vpack.c.b16 %v1459, %v1458
        %v1487 = vpack.c.b16 %v1461, %v1460
        %v1488 = vpack.c.b16 %v1463, %v1462
        %v1489 = vpack.c.b16 %v1465, %v1464
        %v1490 = vpack.c.b16 %v1467, %v1466
        %v1491 = vpack.c.b16 %v1469, %v1468
        %v1492 = vpack.c.b16 %v1471, %v1470
        %v1493 = vpack.c.b16 %v1473, %v1472
        %v1494 = vpack.c.b16 %v1475, %v1474
        %v1495 = vpack.c.b16 %v1477, %v1476
        %v1496 = vpack.c.b16 %v1479, %v1478
        %v1497 = vpack.c.b16 %v1481, %v1480
        %v1530 = vunpack.c.l.b16 %v1353
        %v1531 = vunpack.c.l.b16 %v1354
        %v1532 = vunpack.c.l.b16 %v1355
        %v1533 = vunpack.c.l.b16 %v1356
        %v1534 = vunpack.c.l.b16 %v1357
        %v1535 = vunpack.c.l.b16 %v1358
        %v1536 = vunpack.c.l.b16 %v1359
        %v1537 = vunpack.c.l.b16 %v1360
        %v1538 = vunpack.c.l.b16 %v1361
        %v1539 = vunpack.c.l.b16 %v1362
        %v1540 = vunpack.c.l.b16 %v1363
        %v1541 = vunpack.c.l.b16 %v1364
        %v1542 = vunpack.c.l.b16 %v1365
        %v1543 = vunpack.c.l.b16 %v1366
        %v1544 = vunpack.c.l.b16 %v1367
        %v1545 = vunpack.c.l.b16 %v1368
        %v1546 = vunpack.c.l.b16 %v1369
        %v1547 = vunpack.c.l.b16 %v1370
        %v1548 = vunpack.c.l.b16 %v1371
        %v1549 = vunpack.c.l.b16 %v1372
        %v1550 = vunpack.c.l.b16 %v1373
        %v1551 = vunpack.c.l.b16 %v1374
        %v1552 = vunpack.c.l.b16 %v1375
        %v1553 = vunpack.c.l.b16 %v1376
        %v1554 = vunpack.c.l.b16 %v1377
        %v1555 = vunpack.c.l.b16 %v1378
        %v1556 = vunpack.c.l.b16 %v1379
        %v1557 = vunpack.c.l.b16 %v1380
        %v1558 = vunpack.c.l.b16 %v1381
        %v1559 = vunpack.c.l.b16 %v1382
        %v1560 = vunpack.c.l.b16 %v1383
        %v1561 = vunpack.c.l.b16 %v1384
        %v1562 = vpack.c.b16 %v1531, %v1530
        %v1563 = vpack.c.b16 %v1533, %v1532
        %v1564 = vpack.c.b16 %v1535, %v1534
        %v1565 = vpack.c.b16 %v1537, %v1536
        %v1566 = vpack.c.b16 %v1539, %v1538
        %v1567 = vpack.c.b16 %v1541, %v1540
        %v1568 = vpack.c.b16 %v1543, %v1542
        %v1569 = vpack.c.b16 %v1545, %v1544
        %v1570 = vpack.c.b16 %v1547, %v1546
        %v1571 = vpack.c.b16 %v1549, %v1548
        %v1572 = vpack.c.b16 %v1551, %v1550
        %v1573 = vpack.c.b16 %v1553, %v1552
        %v1574 = vpack.c.b16 %v1555, %v1554
        %v1575 = vpack.c.b16 %v1557, %v1556
        %v1576 = vpack.c.b16 %v1559, %v1558
        %v1577 = vpack.c.b16 %v1561, %v1560
        %1578 = vrot.lane.b32.xlu0 %v1562, 64
        %v1579 = vpop.permute.xlu0 %1578
        %1580 = vrot.lane.b32.xlu0 %v1563, 64
        %v1581 = vpop.permute.xlu0 %1580
        %1582 = vrot.lane.b32.xlu0 %v1564, 64
        %v1583 = vpop.permute.xlu0 %1582
        %1584 = vrot.lane.b32.xlu0 %v1565, 64
        %v1585 = vpop.permute.xlu0 %1584
        %1586 = vrot.lane.b32.xlu0 %v1566, 64
        %v1587 = vpop.permute.xlu0 %1586
        %1588 = vrot.lane.b32.xlu0 %v1567, 64
        %v1589 = vpop.permute.xlu0 %1588
        %1590 = vrot.lane.b32.xlu0 %v1568, 64
        %v1591 = vpop.permute.xlu0 %1590
        %1592 = vrot.lane.b32.xlu0 %v1569, 64
        %v1593 = vpop.permute.xlu0 %1592
        %1594 = vrot.lane.b32.xlu0 %v1570, 64
        %v1595 = vpop.permute.xlu0 %1594
        %1596 = vrot.lane.b32.xlu0 %v1571, 64
        %v1597 = vpop.permute.xlu0 %1596
        %1598 = vrot.lane.b32.xlu0 %v1572, 64
        %v1599 = vpop.permute.xlu0 %1598
        %1600 = vrot.lane.b32.xlu0 %v1573, 64
        %v1601 = vpop.permute.xlu0 %1600
        %1602 = vrot.lane.b32.xlu0 %v1574, 64
        %v1603 = vpop.permute.xlu0 %1602
        %1604 = vrot.lane.b32.xlu0 %v1575, 64
        %v1605 = vpop.permute.xlu0 %1604
        %1606 = vrot.lane.b32.xlu0 %v1576, 64
        %v1607 = vpop.permute.xlu0 %1606
        %1608 = vrot.lane.b32.xlu0 %v1577, 64
        %v1609 = vpop.permute.xlu0 %1608
        %v1642 = vunpack.c.l.b16 %v1386
        %v1643 = vunpack.c.l.b16 %v1387
        %v1644 = vunpack.c.l.b16 %v1388
        %v1645 = vunpack.c.l.b16 %v1389
        %v1646 = vunpack.c.l.b16 %v1390
        %v1647 = vunpack.c.l.b16 %v1391
        %v1648 = vunpack.c.l.b16 %v1392
        %v1649 = vunpack.c.l.b16 %v1393
        %v1650 = vunpack.c.l.b16 %v1394
        %v1651 = vunpack.c.l.b16 %v1395
        %v1652 = vunpack.c.l.b16 %v1396
        %v1653 = vunpack.c.l.b16 %v1397
        %v1654 = vunpack.c.l.b16 %v1398
        %v1655 = vunpack.c.l.b16 %v1399
        %v1656 = vunpack.c.l.b16 %v1400
        %v1657 = vunpack.c.l.b16 %v1401
        %v1658 = vunpack.c.l.b16 %v1402
        %v1659 = vunpack.c.l.b16 %v1403
        %v1660 = vunpack.c.l.b16 %v1404
        %v1661 = vunpack.c.l.b16 %v1405
        %v1662 = vunpack.c.l.b16 %v1406
        %v1663 = vunpack.c.l.b16 %v1407
        %v1664 = vunpack.c.l.b16 %v1408
        %v1665 = vunpack.c.l.b16 %v1409
        %v1666 = vunpack.c.l.b16 %v1410
        %v1667 = vunpack.c.l.b16 %v1411
        %v1668 = vunpack.c.l.b16 %v1412
        %v1669 = vunpack.c.l.b16 %v1413
        %v1670 = vunpack.c.l.b16 %v1414
        %v1671 = vunpack.c.l.b16 %v1415
        %v1672 = vunpack.c.l.b16 %v1416
        %v1673 = vunpack.c.l.b16 %v1417
        %v1674 = vpack.c.b16 %v1643, %v1642
        %v1675 = vpack.c.b16 %v1645, %v1644
        %v1676 = vpack.c.b16 %v1647, %v1646
        %v1677 = vpack.c.b16 %v1649, %v1648
        %v1678 = vpack.c.b16 %v1651, %v1650
        %v1679 = vpack.c.b16 %v1653, %v1652
        %v1680 = vpack.c.b16 %v1655, %v1654
        %v1681 = vpack.c.b16 %v1657, %v1656
        %v1682 = vpack.c.b16 %v1659, %v1658
        %v1683 = vpack.c.b16 %v1661, %v1660
        %v1684 = vpack.c.b16 %v1663, %v1662
        %v1685 = vpack.c.b16 %v1665, %v1664
        %v1686 = vpack.c.b16 %v1667, %v1666
        %v1687 = vpack.c.b16 %v1669, %v1668
        %v1688 = vpack.c.b16 %v1671, %v1670
        %v1689 = vpack.c.b16 %v1673, %v1672
        %vm1690 = vcmask 523264
        %v1693 = vsel %vm1690, %v1482, %v1579
        %v1697 = vsel %vm1690, %v1483, %v1581
        %v1701 = vsel %vm1690, %v1484, %v1583
        %v1705 = vsel %vm1690, %v1485, %v1585
        %v1709 = vsel %vm1690, %v1486, %v1587
        %v1713 = vsel %vm1690, %v1487, %v1589
        %v1717 = vsel %vm1690, %v1488, %v1591
        %v1721 = vsel %vm1690, %v1489, %v1593
        %v1725 = vsel %vm1690, %v1490, %v1595
        %v1729 = vsel %vm1690, %v1491, %v1597
        %v1733 = vsel %vm1690, %v1492, %v1599
        %v1737 = vsel %vm1690, %v1493, %v1601
        %v1741 = vsel %vm1690, %v1494, %v1603
        %v1745 = vsel %vm1690, %v1495, %v1605
        %v1749 = vsel %vm1690, %v1496, %v1607
        %v1753 = vsel %vm1690, %v1497, %v1609
        %v1755 = vld [vmem:[%s4] sm:$0xf]
        %v1756 = vld [vmem:[%s4 + $0x4] sm:$0xf]
        %v1757 = vld [vmem:[%s4 + $0x8] sm:$0xf]
        %v1758 = vld [vmem:[%s4 + $0xc] sm:$0xf]
        %v1759 = vld [vmem:[%s4 + $0x10] sm:$0xf]
        %v1760 = vld [vmem:[%s4 + $0x14] sm:$0xf]
        %v1761 = vld [vmem:[%s4 + $0x18] sm:$0xf]
        %v1762 = vld [vmem:[%s4 + $0x1c] sm:$0xf]
        %v1763 = vld [vmem:[%s4 + $0x20] sm:$0xf]
        %v1764 = vld [vmem:[%s4 + $0x24] sm:$0xf]
        %v1765 = vld [vmem:[%s4 + $0x28] sm:$0xf]
        %v1766 = vld [vmem:[%s4 + $0x2c] sm:$0xf]
        %v1767 = vld [vmem:[%s4 + $0x30] sm:$0xf]
        %v1768 = vld [vmem:[%s4 + $0x34] sm:$0xf]
        %v1769 = vld [vmem:[%s4 + $0x38] sm:$0xf]
        %v1770 = vld [vmem:[%s4 + $0x3c] sm:$0xf]
        %v1771 = vld [vmem:[%s4 + $0x40] sm:$0xf]
        %v1772 = vld [vmem:[%s4 + $0x44] sm:$0xf]
        %v1773 = vld [vmem:[%s4 + $0x48] sm:$0xf]
        %v1774 = vld [vmem:[%s4 + $0x4c] sm:$0xf]
        %v1775 = vld [vmem:[%s4 + $0x50] sm:$0xf]
        %v1776 = vld [vmem:[%s4 + $0x54] sm:$0xf]
        %v1777 = vld [vmem:[%s4 + $0x58] sm:$0xf]
        %v1778 = vld [vmem:[%s4 + $0x5c] sm:$0xf]
        %v1779 = vld [vmem:[#allocation2 + $0x8] sm:$0x1]
        %v1780 = vld [vmem:[#allocation2 + $0x14] sm:$0x1]
        %v1781 = vld [vmem:[#allocation2 + $0x20] sm:$0x1]
        %v1782 = vld [vmem:[#allocation2 + $0x2c] sm:$0x1]
        %v1783 = vld [vmem:[#allocation2 + $0x38] sm:$0x1]
        %v1784 = vld [vmem:[#allocation2 + $0x44] sm:$0x1]
        %v1785 = vld [vmem:[#allocation2 + $0x50] sm:$0x1]
        %v1786 = vld [vmem:[#allocation2 + $0x5c] sm:$0x1]
        %v1787 = vld [vmem:[#allocation2 + $0x68] sm:$0x1]
        %v1788 = vld [vmem:[#allocation2 + $0x74] sm:$0x1]
        %v1789 = vld [vmem:[#allocation2 + $0x80] sm:$0x1]
        %v1790 = vld [vmem:[#allocation2 + $0x8c] sm:$0x1]
        %v1791 = vld [vmem:[#allocation2 + $0x98] sm:$0x1]
        %v1792 = vld [vmem:[#allocation2 + $0xa4] sm:$0x1]
        %v1793 = vld [vmem:[#allocation2 + $0xb0] sm:$0x1]
        %v1794 = vld [vmem:[#allocation2 + $0xbc] sm:$0x1]
        %v1795 = vld [vmem:[%s1264 + $0x8] sm:$0x1]
        %v1796 = vld [vmem:[%s1264 + $0x14] sm:$0x1]
        %v1797 = vld [vmem:[%s1264 + $0x20] sm:$0x1]
        %v1798 = vld [vmem:[%s1264 + $0x2c] sm:$0x1]
        %v1799 = vld [vmem:[%s1264 + $0x38] sm:$0x1]
        %v1800 = vld [vmem:[%s1264 + $0x44] sm:$0x1]
        %v1801 = vld [vmem:[%s1264 + $0x50] sm:$0x1]
        %v1802 = vld [vmem:[%s1264 + $0x5c] sm:$0x1]
        %v1803 = vld [vmem:[%s1264 + $0x68] sm:$0x1]
        %v1804 = vld [vmem:[%s1264 + $0x74] sm:$0x1]
        %v1805 = vld [vmem:[%s1264 + $0x80] sm:$0x1]
        %v1806 = vld [vmem:[%s1264 + $0x8c] sm:$0x1]
        %v1807 = vld [vmem:[%s1264 + $0x98] sm:$0x1]
        %v1808 = vld [vmem:[%s1264 + $0xa4] sm:$0x1]
        %v1809 = vld [vmem:[%s1264 + $0xb0] sm:$0x1]
        %v1810 = vld [vmem:[%s1264 + $0xbc] sm:$0x1]
        %v1811 = vld [vmem:[%s1385 + $0x8] sm:$0x1]
        %v1812 = vld [vmem:[%s1385 + $0x14] sm:$0x1]
        %v1813 = vld [vmem:[%s1385 + $0x20] sm:$0x1]
        %v1814 = vld [vmem:[%s1385 + $0x2c] sm:$0x1]
        %v1815 = vld [vmem:[%s1385 + $0x38] sm:$0x1]
        %v1816 = vld [vmem:[%s1385 + $0x44] sm:$0x1]
        %v1817 = vld [vmem:[%s1385 + $0x50] sm:$0x1]
        %v1818 = vld [vmem:[%s1385 + $0x5c] sm:$0x1]
        %v1819 = vld [vmem:[%s1385 + $0x68] sm:$0x1]
        %v1820 = vld [vmem:[%s1385 + $0x74] sm:$0x1]
        %v1821 = vld [vmem:[%s1385 + $0x80] sm:$0x1]
        %v1822 = vld [vmem:[%s1385 + $0x8c] sm:$0x1]
        %v1823 = vld [vmem:[%s1385 + $0x98] sm:$0x1]
        %v1824 = vld [vmem:[%s1385 + $0xa4] sm:$0x1]
        %v1825 = vld [vmem:[%s1385 + $0xb0] sm:$0x1]
        %v1826 = vld [vmem:[%s1385 + $0xbc] sm:$0x1]
        %v1843 = vunpack.c.l.b16 %v1779
        %v1844 = vunpack.c.l.b16 %v1780
        %v1845 = vunpack.c.l.b16 %v1781
        %v1846 = vunpack.c.l.b16 %v1782
        %v1847 = vunpack.c.l.b16 %v1783
        %v1848 = vunpack.c.l.b16 %v1784
        %v1849 = vunpack.c.l.b16 %v1785
        %v1850 = vunpack.c.l.b16 %v1786
        %v1851 = vunpack.c.l.b16 %v1787
        %v1852 = vunpack.c.l.b16 %v1788
        %v1853 = vunpack.c.l.b16 %v1789
        %v1854 = vunpack.c.l.b16 %v1790
        %v1855 = vunpack.c.l.b16 %v1791
        %v1856 = vunpack.c.l.b16 %v1792
        %v1857 = vunpack.c.l.b16 %v1793
        %v1858 = vunpack.c.l.b16 %v1794
        %v1859 = vpack.c.b16 %v1843, %v1843
        %v1860 = vpack.c.b16 %v1844, %v1844
        %v1861 = vpack.c.b16 %v1845, %v1845
        %v1862 = vpack.c.b16 %v1846, %v1846
        %v1863 = vpack.c.b16 %v1847, %v1847
        %v1864 = vpack.c.b16 %v1848, %v1848
        %v1865 = vpack.c.b16 %v1849, %v1849
        %v1866 = vpack.c.b16 %v1850, %v1850
        %v1867 = vpack.c.b16 %v1851, %v1851
        %v1868 = vpack.c.b16 %v1852, %v1852
        %v1869 = vpack.c.b16 %v1853, %v1853
        %v1870 = vpack.c.b16 %v1854, %v1854
        %v1871 = vpack.c.b16 %v1855, %v1855
        %v1872 = vpack.c.b16 %v1856, %v1856
        %v1873 = vpack.c.b16 %v1857, %v1857
        %v1874 = vpack.c.b16 %v1858, %v1858
        %v1891 = vunpack.c.l.b16 %v1795
        %v1892 = vunpack.c.l.b16 %v1796
        %v1893 = vunpack.c.l.b16 %v1797
        %v1894 = vunpack.c.l.b16 %v1798
        %v1895 = vunpack.c.l.b16 %v1799
        %v1896 = vunpack.c.l.b16 %v1800
        %v1897 = vunpack.c.l.b16 %v1801
        %v1898 = vunpack.c.l.b16 %v1802
        %v1899 = vunpack.c.l.b16 %v1803
        %v1900 = vunpack.c.l.b16 %v1804
        %v1901 = vunpack.c.l.b16 %v1805
        %v1902 = vunpack.c.l.b16 %v1806
        %v1903 = vunpack.c.l.b16 %v1807
        %v1904 = vunpack.c.l.b16 %v1808
        %v1905 = vunpack.c.l.b16 %v1809
        %v1906 = vunpack.c.l.b16 %v1810
        %v1907 = vpack.c.b16 %v1891, %v1891
        %v1908 = vpack.c.b16 %v1892, %v1892
        %v1909 = vpack.c.b16 %v1893, %v1893
        %v1910 = vpack.c.b16 %v1894, %v1894
        %v1911 = vpack.c.b16 %v1895, %v1895
        %v1912 = vpack.c.b16 %v1896, %v1896
        %v1913 = vpack.c.b16 %v1897, %v1897
        %v1914 = vpack.c.b16 %v1898, %v1898
        %v1915 = vpack.c.b16 %v1899, %v1899
        %v1916 = vpack.c.b16 %v1900, %v1900
        %v1917 = vpack.c.b16 %v1901, %v1901
        %v1918 = vpack.c.b16 %v1902, %v1902
        %v1919 = vpack.c.b16 %v1903, %v1903
        %v1920 = vpack.c.b16 %v1904, %v1904
        %v1921 = vpack.c.b16 %v1905, %v1905
        %v1922 = vpack.c.b16 %v1906, %v1906
        %1923 = vrot.lane.b32.xlu0 %v1907, 64
        %v1924 = vpop.permute.xlu0 %1923
        %1925 = vrot.lane.b32.xlu0 %v1908, 64
        %v1926 = vpop.permute.xlu0 %1925
        %1927 = vrot.lane.b32.xlu0 %v1909, 64
        %v1928 = vpop.permute.xlu0 %1927
        %1929 = vrot.lane.b32.xlu0 %v1910, 64
        %v1930 = vpop.permute.xlu0 %1929
        %1931 = vrot.lane.b32.xlu0 %v1911, 64
        %v1932 = vpop.permute.xlu0 %1931
        %1933 = vrot.lane.b32.xlu0 %v1912, 64
        %v1934 = vpop.permute.xlu0 %1933
        %1935 = vrot.lane.b32.xlu0 %v1913, 64
        %v1936 = vpop.permute.xlu0 %1935
        %1937 = vrot.lane.b32.xlu0 %v1914, 64
        %v1938 = vpop.permute.xlu0 %1937
        %1939 = vrot.lane.b32.xlu0 %v1915, 64
        %v1940 = vpop.permute.xlu0 %1939
        %1941 = vrot.lane.b32.xlu0 %v1916, 64
        %v1942 = vpop.permute.xlu0 %1941
        %1943 = vrot.lane.b32.xlu0 %v1917, 64
        %v1944 = vpop.permute.xlu0 %1943
        %1945 = vrot.lane.b32.xlu0 %v1918, 64
        %v1946 = vpop.permute.xlu0 %1945
        %1947 = vrot.lane.b32.xlu0 %v1919, 64
        %v1948 = vpop.permute.xlu0 %1947
        %1949 = vrot.lane.b32.xlu0 %v1920, 64
        %v1950 = vpop.permute.xlu0 %1949
        %1951 = vrot.lane.b32.xlu0 %v1921, 64
        %v1952 = vpop.permute.xlu0 %1951
        %1953 = vrot.lane.b32.xlu0 %v1922, 64
        %v1954 = vpop.permute.xlu0 %1953
        %v1971 = vunpack.c.l.b16 %v1811
        %v1972 = vunpack.c.l.b16 %v1812
        %v1973 = vunpack.c.l.b16 %v1813
        %v1974 = vunpack.c.l.b16 %v1814
        %v1975 = vunpack.c.l.b16 %v1815
        %v1976 = vunpack.c.l.b16 %v1816
        %v1977 = vunpack.c.l.b16 %v1817
        %v1978 = vunpack.c.l.b16 %v1818
        %v1979 = vunpack.c.l.b16 %v1819
        %v1980 = vunpack.c.l.b16 %v1820
        %v1981 = vunpack.c.l.b16 %v1821
        %v1982 = vunpack.c.l.b16 %v1822
        %v1983 = vunpack.c.l.b16 %v1823
        %v1984 = vunpack.c.l.b16 %v1824
        %v1985 = vunpack.c.l.b16 %v1825
        %v1986 = vunpack.c.l.b16 %v1826
        %v1987 = vpack.c.b16 %v1971, %v1971
        %v1988 = vpack.c.b16 %v1972, %v1972
        %v1989 = vpack.c.b16 %v1973, %v1973
        %v1990 = vpack.c.b16 %v1974, %v1974
        %v1991 = vpack.c.b16 %v1975, %v1975
        %v1992 = vpack.c.b16 %v1976, %v1976
        %v1993 = vpack.c.b16 %v1977, %v1977
        %v1994 = vpack.c.b16 %v1978, %v1978
        %v1995 = vpack.c.b16 %v1979, %v1979
        %v1996 = vpack.c.b16 %v1980, %v1980
        %v1997 = vpack.c.b16 %v1981, %v1981
        %v1998 = vpack.c.b16 %v1982, %v1982
        %v1999 = vpack.c.b16 %v1983, %v1983
        %v2000 = vpack.c.b16 %v1984, %v1984
        %v2001 = vpack.c.b16 %v1985, %v1985
        %v2002 = vpack.c.b16 %v1986, %v1986
        %v2005 = vsel %vm1690, %v1859, %v1924
        %v2008 = vsel %vm1690, %v1860, %v1926
        %v2011 = vsel %vm1690, %v1861, %v1928
        %v2014 = vsel %vm1690, %v1862, %v1930
        %v2017 = vsel %vm1690, %v1863, %v1932
        %v2020 = vsel %vm1690, %v1864, %v1934
        %v2023 = vsel %vm1690, %v1865, %v1936
        %v2026 = vsel %vm1690, %v1866, %v1938
        %v2029 = vsel %vm1690, %v1867, %v1940
        %v2032 = vsel %vm1690, %v1868, %v1942
        %v2035 = vsel %vm1690, %v1869, %v1944
        %v2038 = vsel %vm1690, %v1870, %v1946
        %v2041 = vsel %vm1690, %v1871, %v1948
        %v2044 = vsel %vm1690, %v1872, %v1950
        %v2047 = vsel %vm1690, %v1873, %v1952
        %v2050 = vsel %vm1690, %v1874, %v1954
        %vm2051 = vsmask.f32 7424
        %v2052 = vshrl.u32 %v1693, 16
        %v2054 = vshll.u32 %v1693, 16
        %v2056 = vrot.slane %v2054, 1
        %v2057 = vor.u32 %v2052, %v2056
        %v2058 = vshll.u32 %v2005, 16
        %v2060 = vrot.slane %v2058, 1
        %v2061 = vsel %vm2051, %v2057, %v2060
        %v2063 = vshrl.u32 %v1674, 16
        %v2065 = vshll.u32 %v1674, 16
        %v2067 = vrot.slane %v2065, 1
        %v2068 = vor.u32 %v2063, %v2067
        %v2070 = vshll.u32 %v1987, 16
        %v2072 = vrot.slane %v2070, 1
        %v2073 = vsel %vm2051, %v2068, %v2072
        %v2074 = vshrl.u32 %v1697, 16
        %v2076 = vshll.u32 %v1697, 16
        %v2078 = vrot.slane %v2076, 1
        %v2079 = vor.u32 %v2074, %v2078
        %v2080 = vshll.u32 %v2008, 16
        %v2082 = vrot.slane %v2080, 1
        %v2083 = vsel %vm2051, %v2079, %v2082
        %v2085 = vshrl.u32 %v1675, 16
        %v2087 = vshll.u32 %v1675, 16
        %v2089 = vrot.slane %v2087, 1
        %v2090 = vor.u32 %v2085, %v2089
        %v2092 = vshll.u32 %v1988, 16
        %v2094 = vrot.slane %v2092, 1
        %v2095 = vsel %vm2051, %v2090, %v2094
        %v2096 = vshrl.u32 %v1701, 16
        %v2098 = vshll.u32 %v1701, 16
        %v2100 = vrot.slane %v2098, 1
        %v2101 = vor.u32 %v2096, %v2100
        %v2102 = vshll.u32 %v2011, 16
        %v2104 = vrot.slane %v2102, 1
        %v2105 = vsel %vm2051, %v2101, %v2104
        %v2107 = vshrl.u32 %v1676, 16
        %v2109 = vshll.u32 %v1676, 16
        %v2111 = vrot.slane %v2109, 1
        %v2112 = vor.u32 %v2107, %v2111
        %v2114 = vshll.u32 %v1989, 16
        %v2116 = vrot.slane %v2114, 1
        %v2117 = vsel %vm2051, %v2112, %v2116
        %v2118 = vshrl.u32 %v1705, 16
        %v2120 = vshll.u32 %v1705, 16
        %v2122 = vrot.slane %v2120, 1
        %v2123 = vor.u32 %v2118, %v2122
        %v2124 = vshll.u32 %v2014, 16
        %v2126 = vrot.slane %v2124, 1
        %v2127 = vsel %vm2051, %v2123, %v2126
        %v2129 = vshrl.u32 %v1677, 16
        %v2131 = vshll.u32 %v1677, 16
        %v2133 = vrot.slane %v2131, 1
        %v2134 = vor.u32 %v2129, %v2133
        %v2136 = vshll.u32 %v1990, 16
        %v2138 = vrot.slane %v2136, 1
        %v2139 = vsel %vm2051, %v2134, %v2138
        %v2140 = vshrl.u32 %v1709, 16
        %v2142 = vshll.u32 %v1709, 16
        %v2144 = vrot.slane %v2142, 1
        %v2145 = vor.u32 %v2140, %v2144
        %v2146 = vshll.u32 %v2017, 16
        %v2148 = vrot.slane %v2146, 1
        %v2149 = vsel %vm2051, %v2145, %v2148
        %v2151 = vshrl.u32 %v1678, 16
        %v2153 = vshll.u32 %v1678, 16
        %v2155 = vrot.slane %v2153, 1
        %v2156 = vor.u32 %v2151, %v2155
        %v2158 = vshll.u32 %v1991, 16
        %v2160 = vrot.slane %v2158, 1
        %v2161 = vsel %vm2051, %v2156, %v2160
        %v2162 = vshrl.u32 %v1713, 16
        %v2164 = vshll.u32 %v1713, 16
        %v2166 = vrot.slane %v2164, 1
        %v2167 = vor.u32 %v2162, %v2166
        %v2168 = vshll.u32 %v2020, 16
        %v2170 = vrot.slane %v2168, 1
        %v2171 = vsel %vm2051, %v2167, %v2170
        %v2173 = vshrl.u32 %v1679, 16
        %v2175 = vshll.u32 %v1679, 16
        %v2177 = vrot.slane %v2175, 1
        %v2178 = vor.u32 %v2173, %v2177
        %v2180 = vshll.u32 %v1992, 16
        %v2182 = vrot.slane %v2180, 1
        %v2183 = vsel %vm2051, %v2178, %v2182
        %v2184 = vshrl.u32 %v1717, 16
        %v2186 = vshll.u32 %v1717, 16
        %v2188 = vrot.slane %v2186, 1
        %v2189 = vor.u32 %v2184, %v2188
        %v2190 = vshll.u32 %v2023, 16
        %v2192 = vrot.slane %v2190, 1
        %v2193 = vsel %vm2051, %v2189, %v2192
        %v2195 = vshrl.u32 %v1680, 16
        %v2197 = vshll.u32 %v1680, 16
        %v2199 = vrot.slane %v2197, 1
        %v2200 = vor.u32 %v2195, %v2199
        %v2202 = vshll.u32 %v1993, 16
        %v2204 = vrot.slane %v2202, 1
        %v2205 = vsel %vm2051, %v2200, %v2204
        %v2206 = vshrl.u32 %v1721, 16
        %v2208 = vshll.u32 %v1721, 16
        %v2210 = vrot.slane %v2208, 1
        %v2211 = vor.u32 %v2206, %v2210
        %v2212 = vshll.u32 %v2026, 16
        %v2214 = vrot.slane %v2212, 1
        %v2215 = vsel %vm2051, %v2211, %v2214
        %v2217 = vshrl.u32 %v1681, 16
        %v2219 = vshll.u32 %v1681, 16
        %v2221 = vrot.slane %v2219, 1
        %v2222 = vor.u32 %v2217, %v2221
        %v2224 = vshll.u32 %v1994, 16
        %v2226 = vrot.slane %v2224, 1
        %v2227 = vsel %vm2051, %v2222, %v2226
        %v2228 = vshrl.u32 %v1725, 16
        %v2230 = vshll.u32 %v1725, 16
        %v2232 = vrot.slane %v2230, 1
        %v2233 = vor.u32 %v2228, %v2232
        %v2234 = vshll.u32 %v2029, 16
        %v2236 = vrot.slane %v2234, 1
        %v2237 = vsel %vm2051, %v2233, %v2236
        %v2239 = vshrl.u32 %v1682, 16
        %v2241 = vshll.u32 %v1682, 16
        %v2243 = vrot.slane %v2241, 1
        %v2244 = vor.u32 %v2239, %v2243
        %v2246 = vshll.u32 %v1995, 16
        %v2248 = vrot.slane %v2246, 1
        %v2249 = vsel %vm2051, %v2244, %v2248
        %v2250 = vshrl.u32 %v1729, 16
        %v2252 = vshll.u32 %v1729, 16
        %v2254 = vrot.slane %v2252, 1
        %v2255 = vor.u32 %v2250, %v2254
        %v2256 = vshll.u32 %v2032, 16
        %v2258 = vrot.slane %v2256, 1
        %v2259 = vsel %vm2051, %v2255, %v2258
        %v2261 = vshrl.u32 %v1683, 16
        %v2263 = vshll.u32 %v1683, 16
        %v2265 = vrot.slane %v2263, 1
        %v2266 = vor.u32 %v2261, %v2265
        %v2268 = vshll.u32 %v1996, 16
        %v2270 = vrot.slane %v2268, 1
        %v2271 = vsel %vm2051, %v2266, %v2270
        %v2272 = vshrl.u32 %v1733, 16
        %v2274 = vshll.u32 %v1733, 16
        %v2276 = vrot.slane %v2274, 1
        %v2277 = vor.u32 %v2272, %v2276
        %v2278 = vshll.u32 %v2035, 16
        %v2280 = vrot.slane %v2278, 1
        %v2281 = vsel %vm2051, %v2277, %v2280
        %v2283 = vshrl.u32 %v1684, 16
        %v2285 = vshll.u32 %v1684, 16
        %v2287 = vrot.slane %v2285, 1
        %v2288 = vor.u32 %v2283, %v2287
        %v2290 = vshll.u32 %v1997, 16
        %v2292 = vrot.slane %v2290, 1
        %v2293 = vsel %vm2051, %v2288, %v2292
        %v2294 = vshrl.u32 %v1737, 16
        %v2296 = vshll.u32 %v1737, 16
        %v2298 = vrot.slane %v2296, 1
        %v2299 = vor.u32 %v2294, %v2298
        %v2300 = vshll.u32 %v2038, 16
        %v2302 = vrot.slane %v2300, 1
        %v2303 = vsel %vm2051, %v2299, %v2302
        %v2305 = vshrl.u32 %v1685, 16
        %v2307 = vshll.u32 %v1685, 16
        %v2309 = vrot.slane %v2307, 1
        %v2310 = vor.u32 %v2305, %v2309
        %v2312 = vshll.u32 %v1998, 16
        %v2314 = vrot.slane %v2312, 1
        %v2315 = vsel %vm2051, %v2310, %v2314
        %v2316 = vshrl.u32 %v1741, 16
        %v2318 = vshll.u32 %v1741, 16
        %v2320 = vrot.slane %v2318, 1
        %v2321 = vor.u32 %v2316, %v2320
        %v2322 = vshll.u32 %v2041, 16
        %v2324 = vrot.slane %v2322, 1
        %v2325 = vsel %vm2051, %v2321, %v2324
        %v2327 = vshrl.u32 %v1686, 16
        %v2329 = vshll.u32 %v1686, 16
        %v2331 = vrot.slane %v2329, 1
        %v2332 = vor.u32 %v2327, %v2331
        %v2334 = vshll.u32 %v1999, 16
        %v2336 = vrot.slane %v2334, 1
        %v2337 = vsel %vm2051, %v2332, %v2336
        %v2338 = vshrl.u32 %v1745, 16
        %v2340 = vshll.u32 %v1745, 16
        %v2342 = vrot.slane %v2340, 1
        %v2343 = vor.u32 %v2338, %v2342
        %v2344 = vshll.u32 %v2044, 16
        %v2346 = vrot.slane %v2344, 1
        %v2347 = vsel %vm2051, %v2343, %v2346
        %v2349 = vshrl.u32 %v1687, 16
        %v2351 = vshll.u32 %v1687, 16
        %v2353 = vrot.slane %v2351, 1
        %v2354 = vor.u32 %v2349, %v2353
        %v2356 = vshll.u32 %v2000, 16
        %v2358 = vrot.slane %v2356, 1
        %v2359 = vsel %vm2051, %v2354, %v2358
        %v2360 = vshrl.u32 %v1749, 16
        %v2362 = vshll.u32 %v1749, 16
        %v2364 = vrot.slane %v2362, 1
        %v2365 = vor.u32 %v2360, %v2364
        %v2366 = vshll.u32 %v2047, 16
        %v2368 = vrot.slane %v2366, 1
        %v2369 = vsel %vm2051, %v2365, %v2368
        %v2371 = vshrl.u32 %v1688, 16
        %v2373 = vshll.u32 %v1688, 16
        %v2375 = vrot.slane %v2373, 1
        %v2376 = vor.u32 %v2371, %v2375
        %v2378 = vshll.u32 %v2001, 16
        %v2380 = vrot.slane %v2378, 1
        %v2381 = vsel %vm2051, %v2376, %v2380
        %v2382 = vshrl.u32 %v1753, 16
        %v2384 = vshll.u32 %v1753, 16
        %v2386 = vrot.slane %v2384, 1
        %v2387 = vor.u32 %v2382, %v2386
        %v2388 = vshll.u32 %v2050, 16
        %v2390 = vrot.slane %v2388, 1
        %v2391 = vsel %vm2051, %v2387, %v2390
        %v2393 = vshrl.u32 %v1689, 16
        %v2395 = vshll.u32 %v1689, 16
        %v2397 = vrot.slane %v2395, 1
        %v2398 = vor.u32 %v2393, %v2397
        %v2400 = vshll.u32 %v2002, 16
        %v2402 = vrot.slane %v2400, 1
        %v2403 = vsel %vm2051, %v2398, %v2402
        %s2420 = scalar_lea.vmem %s4, 96
        %v2421 = vld [vmem:[%s2420] sm:$0xf]
        %v2422 = vld [vmem:[%s2420 + $0x4] sm:$0xf]
        %v2423 = vld [vmem:[%s2420 + $0x8] sm:$0xf]
        %v2424 = vld [vmem:[%s2420 + $0xc] sm:$0xf]
        %v2425 = vld [vmem:[%s2420 + $0x10] sm:$0xf]
        %v2426 = vld [vmem:[%s2420 + $0x14] sm:$0xf]
        %v2427 = vld [vmem:[%s2420 + $0x18] sm:$0xf]
        %v2428 = vld [vmem:[%s2420 + $0x1c] sm:$0xf]
        %v2429 = vld [vmem:[%s2420 + $0x20] sm:$0xf]
        %v2430 = vld [vmem:[%s2420 + $0x24] sm:$0xf]
        %v2431 = vld [vmem:[%s2420 + $0x28] sm:$0xf]
        %v2432 = vld [vmem:[%s2420 + $0x2c] sm:$0xf]
        %v2433 = vld [vmem:[%s2420 + $0x30] sm:$0xf]
        %v2434 = vld [vmem:[%s2420 + $0x34] sm:$0xf]
        %v2435 = vld [vmem:[%s2420 + $0x38] sm:$0xf]
        %v2436 = vld [vmem:[%s2420 + $0x3c] sm:$0xf]
        %v2437 = vld [vmem:[%s2420 + $0x40] sm:$0xf]
        %v2438 = vld [vmem:[%s2420 + $0x44] sm:$0xf]
        %v2439 = vld [vmem:[%s2420 + $0x48] sm:$0xf]
        %v2440 = vld [vmem:[%s2420 + $0x4c] sm:$0xf]
        %v2441 = vld [vmem:[%s2420 + $0x50] sm:$0xf]
        %v2442 = vld [vmem:[%s2420 + $0x54] sm:$0xf]
        %v2443 = vld [vmem:[%s2420 + $0x58] sm:$0xf]
        %v2444 = vld [vmem:[%s2420 + $0x5c] sm:$0xf]
        %v2469 = vunpack.c.l.b16 %v2421
        %v2470 = vunpack.c.l.b16 %v2422
        %v2471 = vunpack.c.l.b16 %v2423
        %v2472 = vunpack.c.l.b16 %v2424
        %v2473 = vunpack.c.l.b16 %v2425
        %v2474 = vunpack.c.l.b16 %v2426
        %v2475 = vunpack.c.l.b16 %v2427
        %v2476 = vunpack.c.l.b16 %v2428
        %v2477 = vunpack.c.l.b16 %v2429
        %v2478 = vunpack.c.l.b16 %v2430
        %v2479 = vunpack.c.l.b16 %v2431
        %v2480 = vunpack.c.l.b16 %v2432
        %v2481 = vunpack.c.l.b16 %v2433
        %v2482 = vunpack.c.l.b16 %v2434
        %v2483 = vunpack.c.l.b16 %v2435
        %v2484 = vunpack.c.l.b16 %v2436
        %v2485 = vunpack.c.l.b16 %v2437
        %v2486 = vunpack.c.l.b16 %v2438
        %v2487 = vunpack.c.l.b16 %v2439
        %v2488 = vunpack.c.l.b16 %v2440
        %v2489 = vunpack.c.l.b16 %v2441
        %v2490 = vunpack.c.l.b16 %v2442
        %v2491 = vunpack.c.l.b16 %v2443
        %v2492 = vunpack.c.l.b16 %v2444
        %v2493 = vpack.c.b16 %v2470, %v2469
        %v2494 = vpack.c.b16 %v2472, %v2471
        %v2495 = vpack.c.b16 %v2474, %v2473
        %v2496 = vpack.c.b16 %v2476, %v2475
        %v2497 = vpack.c.b16 %v2478, %v2477
        %v2498 = vpack.c.b16 %v2480, %v2479
        %v2499 = vpack.c.b16 %v2482, %v2481
        %v2500 = vpack.c.b16 %v2484, %v2483
        %v2501 = vpack.c.b16 %v2486, %v2485
        %v2502 = vpack.c.b16 %v2488, %v2487
        %v2503 = vpack.c.b16 %v2490, %v2489
        %v2504 = vpack.c.b16 %v2492, %v2491
        %v2518 = vsel %vm1690, %v2073, 0
        %v2521 = vsel %vm1690, %v2095, 0
        %v2524 = vsel %vm1690, %v2117, 0
        %v2527 = vsel %vm1690, %v2139, 0
        %v2530 = vsel %vm1690, %v2161, 0
        %v2533 = vsel %vm1690, %v2183, 0
        %v2536 = vsel %vm1690, %v2205, 0
        %v2539 = vsel %vm1690, %v2227, 0
        %v2542 = vsel %vm1690, %v2249, 0
        %v2545 = vsel %vm1690, %v2271, 0
        %v2548 = vsel %vm1690, %v2293, 0
        %v2551 = vsel %vm1690, %v2315, 0
        %v2554 = vsel %vm1690, %v2337, 0
        %v2557 = vsel %vm1690, %v2359, 0
        %v2560 = vsel %vm1690, %v2381, 0
        %v2563 = vsel %vm1690, %v2403, 0
        %2565 = vmatprep.subr.bf16.mxu0 0
        %2566 = vmatpush1.bf16.msra.mxu0 %v2493
        %2567 = vmatprep.subr.bf16.mxu0 0
        %2568 = vmatpush1.bf16.msra.mxu0 %v2494
        %2569 = vmatprep.subr.bf16.mxu0 0
        %2570 = vmatpush1.bf16.msra.mxu0 %v2495
        %2571 = vmatprep.subr.bf16.mxu0 0
        %2572 = vmatpush1.bf16.msra.mxu0 %v2496
        %2573 = vmatprep.subr.bf16.mxu0 0
        %2574 = vmatpush1.bf16.msra.mxu0 %v2497
        %2575 = vmatprep.subr.bf16.mxu0 0
        %2576 = vmatpush1.bf16.msra.mxu0 %v2498
        %2577 = vmatprep.subr.bf16.mxu0 0
        %2578 = vmatpush1.bf16.msra.mxu0 %v2499
        %2579 = vmatprep.subr.bf16.mxu0 0
        %2580 = vmatpush1.bf16.msra.mxu0 %v2500
        %2581 = vmatprep.subr.bf16.mxu0 0
        %2582 = vmatpush1.bf16.msra.mxu0 %v2501
        %2583 = vmatprep.subr.bf16.mxu0 0
        %2584 = vmatpush1.bf16.msra.mxu0 %v2502
        %2585 = vmatprep.subr.bf16.mxu0 0
        %2586 = vmatpush1.bf16.msra.mxu0 %v2503
        %2587 = vmatprep.subr.bf16.mxu0 0
        %2588 = vmatpush1.bf16.msra.mxu0 %v2504
        %2589 = vmatprep.subr.bf16.mxu0 0
        %2590 = vmatpush1.bf16.msra.mxu0 0
        %2591 = vmatprep.subr.bf16.mxu0 0
        %2592 = vmatpush1.bf16.msra.mxu0 0
        %2593 = vmatprep.subr.bf16.mxu0 0
        %2594 = vmatpush1.bf16.msra.mxu0 0
        %2595 = vmatprep.subr.bf16.mxu0 0
        %2596 = vmatpush1.bf16.msra.mxu0 0
        %2597 = vmatprep.mubr.bf16.mxu0 %v2518
        %2598 = vmatmul.mubr.bf16.gmra.mrb[0].mxu0 %v2061
        %v2599 = vpop.f32.mrb[0].mxu0
        %v2600 = vadd.f32 0.0, %v2599
        %v2601 = vpop.f32.mrb[0].mxu0
        %v2602 = vpop.f32.mrb[0].mxu0
        %v2603 = vadd.f32 0.0, %v2602
        %v2604 = vpop.f32.mrb[0].mxu0
        %2605 = vmatprep.mubr.bf16.mxu0 %v2521
        %2606 = vmatmul.mubr.bf16.gmra.mrb[0].mxu0 %v2083
        %v2607 = vpop.f32.mrb[0].mxu0
        %v2608 = vadd.f32 0.0, %v2607
        %v2609 = vpop.f32.mrb[0].mxu0
        %v2610 = vpop.f32.mrb[0].mxu0
        %v2611 = vadd.f32 0.0, %v2610
        %v2612 = vpop.f32.mrb[0].mxu0
        %2613 = vmatprep.mubr.bf16.mxu0 %v2524
        %2614 = vmatmul.mubr.bf16.gmra.mrb[0].mxu0 %v2105
        %v2615 = vpop.f32.mrb[0].mxu0
        %v2616 = vadd.f32 0.0, %v2615
        %v2617 = vpop.f32.mrb[0].mxu0
        %v2618 = vpop.f32.mrb[0].mxu0
        %v2619 = vadd.f32 0.0, %v2618
        %v2620 = vpop.f32.mrb[0].mxu0
        %2621 = vmatprep.mubr.bf16.mxu0 %v2527
        %2622 = vmatmul.mubr.bf16.gmra.mrb[0].mxu0 %v2127
        %v2623 = vpop.f32.mrb[0].mxu0
        %v2624 = vadd.f32 0.0, %v2623
        %v2625 = vpop.f32.mrb[0].mxu0
        %v2626 = vpop.f32.mrb[0].mxu0
        %v2627 = vadd.f32 0.0, %v2626
        %v2628 = vpop.f32.mrb[0].mxu0
        %2629 = vmatprep.mubr.bf16.mxu0 %v2530
        %2630 = vmatmul.mubr.bf16.gmra.mrb[0].mxu0 %v2149
        %v2631 = vpop.f32.mrb[0].mxu0
        %v2632 = vadd.f32 0.0, %v2631
        %v2633 = vpop.f32.mrb[0].mxu0
        %v2634 = vpop.f32.mrb[0].mxu0
        %v2635 = vadd.f32 0.0, %v2634
        %v2636 = vpop.f32.mrb[0].mxu0
        %2637 = vmatprep.mubr.bf16.mxu0 %v2533
        %2638 = vmatmul.mubr.bf16.gmra.mrb[0].mxu0 %v2171
        %v2639 = vpop.f32.mrb[0].mxu0
        %v2640 = vadd.f32 0.0, %v2639
        %v2641 = vpop.f32.mrb[0].mxu0
        %v2642 = vpop.f32.mrb[0].mxu0
        %v2643 = vadd.f32 0.0, %v2642
        %v2644 = vpop.f32.mrb[0].mxu0
        %2645 = vmatprep.mubr.bf16.mxu0 %v2536
        %2646 = vmatmul.mubr.bf16.gmra.mrb[0].mxu0 %v2193
        %v2647 = vpop.f32.mrb[0].mxu0
        %v2648 = vadd.f32 0.0, %v2647
        %v2649 = vpop.f32.mrb[0].mxu0
        %v2650 = vpop.f32.mrb[0].mxu0
        %v2651 = vadd.f32 0.0, %v2650
        %v2652 = vpop.f32.mrb[0].mxu0
        %2653 = vmatprep.mubr.bf16.mxu0 %v2539
        %2654 = vmatmul.mubr.bf16.gmra.mrb[0].mxu0 %v2215
        %v2655 = vpop.f32.mrb[0].mxu0
        %v2656 = vadd.f32 0.0, %v2655
        %v2657 = vpop.f32.mrb[0].mxu0
        %v2658 = vpop.f32.mrb[0].mxu0
        %v2659 = vadd.f32 0.0, %v2658
        %v2660 = vpop.f32.mrb[0].mxu0
        %2661 = vmatprep.mubr.bf16.mxu0 %v2542
        %2662 = vmatmul.mubr.bf16.gmra.mrb[0].mxu0 %v2237
        %v2663 = vpop.f32.mrb[0].mxu0
        %v2664 = vadd.f32 0.0, %v2663
        %v2665 = vpop.f32.mrb[0].mxu0
        %v2666 = vpop.f32.mrb[0].mxu0
        %v2667 = vadd.f32 0.0, %v2666
        %v2668 = vpop.f32.mrb[0].mxu0
        %2669 = vmatprep.mubr.bf16.mxu0 %v2545
        %2670 = vmatmul.mubr.bf16.gmra.mrb[0].mxu0 %v2259
        %v2671 = vpop.f32.mrb[0].mxu0
        %v2672 = vadd.f32 0.0, %v2671
        %v2673 = vpop.f32.mrb[0].mxu0
        %v2674 = vpop.f32.mrb[0].mxu0
        %v2675 = vadd.f32 0.0, %v2674
        %v2676 = vpop.f32.mrb[0].mxu0
        %2677 = vmatprep.mubr.bf16.mxu0 %v2548
        %2678 = vmatmul.mubr.bf16.gmra.mrb[0].mxu0 %v2281
        %v2679 = vpop.f32.mrb[0].mxu0
        %v2680 = vadd.f32 0.0, %v2679
        %v2681 = vpop.f32.mrb[0].mxu0
        %v2682 = vpop.f32.mrb[0].mxu0
        %v2683 = vadd.f32 0.0, %v2682
        %v2684 = vpop.f32.mrb[0].mxu0
        %2685 = vmatprep.mubr.bf16.mxu0 %v2551
        %2686 = vmatmul.mubr.bf16.gmra.mrb[0].mxu0 %v2303
        %v2687 = vpop.f32.mrb[0].mxu0
        %v2688 = vadd.f32 0.0, %v2687
        %v2689 = vpop.f32.mrb[0].mxu0
        %v2690 = vpop.f32.mrb[0].mxu0
        %v2691 = vadd.f32 0.0, %v2690
        %v2692 = vpop.f32.mrb[0].mxu0
        %2693 = vmatprep.mubr.bf16.mxu0 %v2554
        %2694 = vmatmul.mubr.bf16.gmra.mrb[0].mxu0 %v2325
        %v2695 = vpop.f32.mrb[0].mxu0
        %v2696 = vadd.f32 0.0, %v2695
        %v2697 = vpop.f32.mrb[0].mxu0
        %v2698 = vpop.f32.mrb[0].mxu0
        %v2699 = vadd.f32 0.0, %v2698
        %v2700 = vpop.f32.mrb[0].mxu0
        %2701 = vmatprep.mubr.bf16.mxu0 %v2557
        %2702 = vmatmul.mubr.bf16.gmra.mrb[0].mxu0 %v2347
        %v2703 = vpop.f32.mrb[0].mxu0
        %v2704 = vadd.f32 0.0, %v2703
        %v2705 = vpop.f32.mrb[0].mxu0
        %v2706 = vpop.f32.mrb[0].mxu0
        %v2707 = vadd.f32 0.0, %v2706
        %v2708 = vpop.f32.mrb[0].mxu0
        %2709 = vmatprep.mubr.bf16.mxu0 %v2560
        %2710 = vmatmul.mubr.bf16.gmra.mrb[0].mxu0 %v2369
        %v2711 = vpop.f32.mrb[0].mxu0
        %v2712 = vadd.f32 0.0, %v2711
        %v2713 = vpop.f32.mrb[0].mxu0
        %v2714 = vpop.f32.mrb[0].mxu0
        %v2715 = vadd.f32 0.0, %v2714
        %v2716 = vpop.f32.mrb[0].mxu0
        %2717 = vmatprep.mubr.bf16.mxu0 %v2563
        %2718 = vmatmul.mubr.bf16.gmra.mrb[0].mxu0 %v2391
        %v2719 = vpop.f32.mrb[0].mxu0
        %v2720 = vadd.f32 0.0, %v2719
        %v2721 = vpop.f32.mrb[0].mxu0
        %v2722 = vpop.f32.mrb[0].mxu0
        %v2723 = vadd.f32 0.0, %v2722
        %v2724 = vpop.f32.mrb[0].mxu0
        %2725 = vdwg.mxu0
        %v2750 = vunpack.c.l.b16 %v1755
        %v2751 = vunpack.c.l.b16 %v1756
        %v2752 = vunpack.c.l.b16 %v1757
        %v2753 = vunpack.c.l.b16 %v1758
        %v2754 = vunpack.c.l.b16 %v1759
        %v2755 = vunpack.c.l.b16 %v1760
        %v2756 = vunpack.c.l.b16 %v1761
        %v2757 = vunpack.c.l.b16 %v1762
        %v2758 = vunpack.c.l.b16 %v1763
        %v2759 = vunpack.c.l.b16 %v1764
        %v2760 = vunpack.c.l.b16 %v1765
        %v2761 = vunpack.c.l.b16 %v1766
        %v2762 = vunpack.c.l.b16 %v1767
        %v2763 = vunpack.c.l.b16 %v1768
        %v2764 = vunpack.c.l.b16 %v1769
        %v2765 = vunpack.c.l.b16 %v1770
        %v2766 = vunpack.c.l.b16 %v1771
        %v2767 = vunpack.c.l.b16 %v1772
        %v2768 = vunpack.c.l.b16 %v1773
        %v2769 = vunpack.c.l.b16 %v1774
        %v2770 = vunpack.c.l.b16 %v1775
        %v2771 = vunpack.c.l.b16 %v1776
        %v2772 = vunpack.c.l.b16 %v1777
        %v2773 = vunpack.c.l.b16 %v1778
        %v2774 = vpack.c.b16 %v2751, %v2750
        %v2775 = vpack.c.b16 %v2753, %v2752
        %v2776 = vpack.c.b16 %v2755, %v2754
        %v2777 = vpack.c.b16 %v2757, %v2756
        %v2778 = vpack.c.b16 %v2759, %v2758
        %v2779 = vpack.c.b16 %v2761, %v2760
        %v2780 = vpack.c.b16 %v2763, %v2762
        %v2781 = vpack.c.b16 %v2765, %v2764
        %v2782 = vpack.c.b16 %v2767, %v2766
        %v2783 = vpack.c.b16 %v2769, %v2768
        %v2784 = vpack.c.b16 %v2771, %v2770
        %v2785 = vpack.c.b16 %v2773, %v2772
        %v2798 = vsel %vm1690, %v1674, 0
        %v2800 = vsel %vm1690, %v1675, 0
        %v2802 = vsel %vm1690, %v1676, 0
        %v2804 = vsel %vm1690, %v1677, 0
        %v2806 = vsel %vm1690, %v1678, 0
        %v2808 = vsel %vm1690, %v1679, 0
        %v2810 = vsel %vm1690, %v1680, 0
        %v2812 = vsel %vm1690, %v1681, 0
        %v2814 = vsel %vm1690, %v1682, 0
        %v2816 = vsel %vm1690, %v1683, 0
        %v2818 = vsel %vm1690, %v1684, 0
        %v2820 = vsel %vm1690, %v1685, 0
        %v2822 = vsel %vm1690, %v1686, 0
        %v2824 = vsel %vm1690, %v1687, 0
        %v2826 = vsel %vm1690, %v1688, 0
        %v2828 = vsel %vm1690, %v1689, 0
        %2830 = vmatprep.subr.bf16.mxu0 0
        %2831 = vmatpush1.bf16.msra.mxu0 %v2774
        %2832 = vmatprep.subr.bf16.mxu0 0
        %2833 = vmatpush1.bf16.msra.mxu0 %v2775
        %2834 = vmatprep.subr.bf16.mxu0 0
        %2835 = vmatpush1.bf16.msra.mxu0 %v2776
        %2836 = vmatprep.subr.bf16.mxu0 0
        %2837 = vmatpush1.bf16.msra.mxu0 %v2777
        %2838 = vmatprep.subr.bf16.mxu0 0
        %2839 = vmatpush1.bf16.msra.mxu0 %v2778
        %2840 = vmatprep.subr.bf16.mxu0 0
        %2841 = vmatpush1.bf16.msra.mxu0 %v2779
        %2842 = vmatprep.subr.bf16.mxu0 0
        %2843 = vmatpush1.bf16.msra.mxu0 %v2780
        %2844 = vmatprep.subr.bf16.mxu0 0
        %2845 = vmatpush1.bf16.msra.mxu0 %v2781
        %2846 = vmatprep.subr.bf16.mxu0 0
        %2847 = vmatpush1.bf16.msra.mxu0 %v2782
        %2848 = vmatprep.subr.bf16.mxu0 0
        %2849 = vmatpush1.bf16.msra.mxu0 %v2783
        %2850 = vmatprep.subr.bf16.mxu0 0
        %2851 = vmatpush1.bf16.msra.mxu0 %v2784
        %2852 = vmatprep.subr.bf16.mxu0 0
        %2853 = vmatpush1.bf16.msra.mxu0 %v2785
        %2854 = vmatprep.subr.bf16.mxu0 0
        %2855 = vmatpush1.bf16.msra.mxu0 0
        %2856 = vmatprep.subr.bf16.mxu0 0
        %2857 = vmatpush1.bf16.msra.mxu0 0
        %2858 = vmatprep.subr.bf16.mxu0 0
        %2859 = vmatpush1.bf16.msra.mxu0 0
        %2860 = vmatprep.subr.bf16.mxu0 0
        %2861 = vmatpush1.bf16.msra.mxu0 0
        %2862 = vmatprep.mubr.bf16.mxu0 %v2798
        %2863 = vmatmul.mubr.bf16.gmra.mrb[0].mxu0 %v1693
        %v2864 = vpop.f32.mrb[0].mxu0
        %v2865 = vadd.f32 %v2600, %v2864
        %v2866 = vpop.f32.mrb[0].mxu0
        %v2867 = vpop.f32.mrb[0].mxu0
        %v2868 = vadd.f32 %v2603, %v2867
        %v2869 = vpop.f32.mrb[0].mxu0
        %2870 = vmatprep.mubr.bf16.mxu0 %v2800
        %2871 = vmatmul.mubr.bf16.gmra.mrb[0].mxu0 %v1697
        %v2872 = vpop.f32.mrb[0].mxu0
        %v2873 = vadd.f32 %v2608, %v2872
        %v2874 = vpop.f32.mrb[0].mxu0
        %v2875 = vpop.f32.mrb[0].mxu0
        %v2876 = vadd.f32 %v2611, %v2875
        %v2877 = vpop.f32.mrb[0].mxu0
        %2878 = vmatprep.mubr.bf16.mxu0 %v2802
        %2879 = vmatmul.mubr.bf16.gmra.mrb[0].mxu0 %v1701
        %v2880 = vpop.f32.mrb[0].mxu0
        %v2881 = vadd.f32 %v2616, %v2880
        %v2882 = vpop.f32.mrb[0].mxu0
        %v2883 = vpop.f32.mrb[0].mxu0
        %v2884 = vadd.f32 %v2619, %v2883
        %v2885 = vpop.f32.mrb[0].mxu0
        %2886 = vmatprep.mubr.bf16.mxu0 %v2804
        %2887 = vmatmul.mubr.bf16.gmra.mrb[0].mxu0 %v1705
        %v2888 = vpop.f32.mrb[0].mxu0
        %v2889 = vadd.f32 %v2624, %v2888
        %v2890 = vpop.f32.mrb[0].mxu0
        %v2891 = vpop.f32.mrb[0].mxu0
        %v2892 = vadd.f32 %v2627, %v2891
        %v2893 = vpop.f32.mrb[0].mxu0
        %2894 = vmatprep.mubr.bf16.mxu0 %v2806
        %2895 = vmatmul.mubr.bf16.gmra.mrb[0].mxu0 %v1709
        %v2896 = vpop.f32.mrb[0].mxu0
        %v2897 = vadd.f32 %v2632, %v2896
        %v2898 = vpop.f32.mrb[0].mxu0
        %v2899 = vpop.f32.mrb[0].mxu0
        %v2900 = vadd.f32 %v2635, %v2899
        %v2901 = vpop.f32.mrb[0].mxu0
        %2902 = vmatprep.mubr.bf16.mxu0 %v2808
        %2903 = vmatmul.mubr.bf16.gmra.mrb[0].mxu0 %v1713
        %v2904 = vpop.f32.mrb[0].mxu0
        %v2905 = vadd.f32 %v2640, %v2904
        %v2906 = vpop.f32.mrb[0].mxu0
        %v2907 = vpop.f32.mrb[0].mxu0
        %v2908 = vadd.f32 %v2643, %v2907
        %v2909 = vpop.f32.mrb[0].mxu0
        %2910 = vmatprep.mubr.bf16.mxu0 %v2810
        %2911 = vmatmul.mubr.bf16.gmra.mrb[0].mxu0 %v1717
        %v2912 = vpop.f32.mrb[0].mxu0
        %v2913 = vadd.f32 %v2648, %v2912
        %v2914 = vpop.f32.mrb[0].mxu0
        %v2915 = vpop.f32.mrb[0].mxu0
        %v2916 = vadd.f32 %v2651, %v2915
        %v2917 = vpop.f32.mrb[0].mxu0
        %2918 = vmatprep.mubr.bf16.mxu0 %v2812
        %2919 = vmatmul.mubr.bf16.gmra.mrb[0].mxu0 %v1721
        %v2920 = vpop.f32.mrb[0].mxu0
        %v2921 = vadd.f32 %v2656, %v2920
        %v2922 = vpop.f32.mrb[0].mxu0
        %v2923 = vpop.f32.mrb[0].mxu0
        %v2924 = vadd.f32 %v2659, %v2923
        %v2925 = vpop.f32.mrb[0].mxu0
        %2926 = vmatprep.mubr.bf16.mxu0 %v2814
        %2927 = vmatmul.mubr.bf16.gmra.mrb[0].mxu0 %v1725
        %v2928 = vpop.f32.mrb[0].mxu0
        %v2929 = vadd.f32 %v2664, %v2928
        %v2930 = vpop.f32.mrb[0].mxu0
        %v2931 = vpop.f32.mrb[0].mxu0
        %v2932 = vadd.f32 %v2667, %v2931
        %v2933 = vpop.f32.mrb[0].mxu0
        %2934 = vmatprep.mubr.bf16.mxu0 %v2816
        %2935 = vmatmul.mubr.bf16.gmra.mrb[0].mxu0 %v1729
        %v2936 = vpop.f32.mrb[0].mxu0
        %v2937 = vadd.f32 %v2672, %v2936
        %v2938 = vpop.f32.mrb[0].mxu0
        %v2939 = vpop.f32.mrb[0].mxu0
        %v2940 = vadd.f32 %v2675, %v2939
        %v2941 = vpop.f32.mrb[0].mxu0
        %2942 = vmatprep.mubr.bf16.mxu0 %v2818
        %2943 = vmatmul.mubr.bf16.gmra.mrb[0].mxu0 %v1733
        %v2944 = vpop.f32.mrb[0].mxu0
        %v2945 = vadd.f32 %v2680, %v2944
        %v2946 = vpop.f32.mrb[0].mxu0
        %v2947 = vpop.f32.mrb[0].mxu0
        %v2948 = vadd.f32 %v2683, %v2947
        %v2949 = vpop.f32.mrb[0].mxu0
        %2950 = vmatprep.mubr.bf16.mxu0 %v2820
        %2951 = vmatmul.mubr.bf16.gmra.mrb[0].mxu0 %v1737
        %v2952 = vpop.f32.mrb[0].mxu0
        %v2953 = vadd.f32 %v2688, %v2952
        %v2954 = vpop.f32.mrb[0].mxu0
        %v2955 = vpop.f32.mrb[0].mxu0
        %v2956 = vadd.f32 %v2691, %v2955
        %v2957 = vpop.f32.mrb[0].mxu0
        %2958 = vmatprep.mubr.bf16.mxu0 %v2822
        %2959 = vmatmul.mubr.bf16.gmra.mrb[0].mxu0 %v1741
        %v2960 = vpop.f32.mrb[0].mxu0
        %v2961 = vadd.f32 %v2696, %v2960
        %v2962 = vpop.f32.mrb[0].mxu0
        %v2963 = vpop.f32.mrb[0].mxu0
        %v2964 = vadd.f32 %v2699, %v2963
        %v2965 = vpop.f32.mrb[0].mxu0
        %2966 = vmatprep.mubr.bf16.mxu0 %v2824
        %2967 = vmatmul.mubr.bf16.gmra.mrb[0].mxu0 %v1745
        %v2968 = vpop.f32.mrb[0].mxu0
        %v2969 = vadd.f32 %v2704, %v2968
        %v2970 = vpop.f32.mrb[0].mxu0
        %v2971 = vpop.f32.mrb[0].mxu0
        %v2972 = vadd.f32 %v2707, %v2971
        %v2973 = vpop.f32.mrb[0].mxu0
        %2974 = vmatprep.mubr.bf16.mxu0 %v2826
        %2975 = vmatmul.mubr.bf16.gmra.mrb[0].mxu0 %v1749
        %v2976 = vpop.f32.mrb[0].mxu0
        %v2977 = vadd.f32 %v2712, %v2976
        %v2978 = vpop.f32.mrb[0].mxu0
        %v2979 = vpop.f32.mrb[0].mxu0
        %v2980 = vadd.f32 %v2715, %v2979
        %v2981 = vpop.f32.mrb[0].mxu0
        %2982 = vmatprep.mubr.bf16.mxu0 %v2828
        %2983 = vmatmul.mubr.bf16.gmra.mrb[0].mxu0 %v1753
        %v2984 = vpop.f32.mrb[0].mxu0
        %v2985 = vadd.f32 %v2720, %v2984
        %v2986 = vpop.f32.mrb[0].mxu0
        %v2987 = vpop.f32.mrb[0].mxu0
        %v2988 = vadd.f32 %v2723, %v2987
        %v2989 = vpop.f32.mrb[0].mxu0
        %2990 = vdwg.mxu0
        %v2991 = vld [vmem:[#allocation2] sm:$0xe]
        %v2992 = vld [vmem:[#allocation2 + $0xc] sm:$0xe]
        %v2993 = vld [vmem:[#allocation2 + $0x18] sm:$0xe]
        %v2994 = vld [vmem:[#allocation2 + $0x24] sm:$0xe]
        %v2995 = vld [vmem:[#allocation2 + $0x30] sm:$0xe]
        %v2996 = vld [vmem:[#allocation2 + $0x3c] sm:$0xe]
        %v2997 = vld [vmem:[#allocation2 + $0x48] sm:$0xe]
        %v2998 = vld [vmem:[#allocation2 + $0x54] sm:$0xe]
        %v2999 = vld [vmem:[#allocation2 + $0x60] sm:$0xe]
        %v3000 = vld [vmem:[#allocation2 + $0x6c] sm:$0xe]
        %v3001 = vld [vmem:[#allocation2 + $0x78] sm:$0xe]
        %v3002 = vld [vmem:[#allocation2 + $0x84] sm:$0xe]
        %v3003 = vld [vmem:[#allocation2 + $0x90] sm:$0xe]
        %v3004 = vld [vmem:[#allocation2 + $0x9c] sm:$0xe]
        %v3005 = vld [vmem:[#allocation2 + $0xa8] sm:$0xe]
        %v3006 = vld [vmem:[#allocation2 + $0xb4] sm:$0xe]
        %v3007 = vld [vmem:[%s1264] sm:$0xe]
        %v3008 = vld [vmem:[%s1264 + $0xc] sm:$0xe]
        %v3009 = vld [vmem:[%s1264 + $0x18] sm:$0xe]
        %v3010 = vld [vmem:[%s1264 + $0x24] sm:$0xe]
        %v3011 = vld [vmem:[%s1264 + $0x30] sm:$0xe]
        %v3012 = vld [vmem:[%s1264 + $0x3c] sm:$0xe]
        %v3013 = vld [vmem:[%s1264 + $0x48] sm:$0xe]
        %v3014 = vld [vmem:[%s1264 + $0x54] sm:$0xe]
        %v3015 = vld [vmem:[%s1264 + $0x60] sm:$0xe]
        %v3016 = vld [vmem:[%s1264 + $0x6c] sm:$0xe]
        %v3017 = vld [vmem:[%s1264 + $0x78] sm:$0xe]
        %v3018 = vld [vmem:[%s1264 + $0x84] sm:$0xe]
        %v3019 = vld [vmem:[%s1264 + $0x90] sm:$0xe]
        %v3020 = vld [vmem:[%s1264 + $0x9c] sm:$0xe]
        %v3021 = vld [vmem:[%s1264 + $0xa8] sm:$0xe]
        %v3022 = vld [vmem:[%s1264 + $0xb4] sm:$0xe]
        %v3023 = vld [vmem:[%s1385] sm:$0xe]
        %v3024 = vld [vmem:[%s1385 + $0xc] sm:$0xe]
        %v3025 = vld [vmem:[%s1385 + $0x18] sm:$0xe]
        %v3026 = vld [vmem:[%s1385 + $0x24] sm:$0xe]
        %v3027 = vld [vmem:[%s1385 + $0x30] sm:$0xe]
        %v3028 = vld [vmem:[%s1385 + $0x3c] sm:$0xe]
        %v3029 = vld [vmem:[%s1385 + $0x48] sm:$0xe]
        %v3030 = vld [vmem:[%s1385 + $0x54] sm:$0xe]
        %v3031 = vld [vmem:[%s1385 + $0x60] sm:$0xe]
        %v3032 = vld [vmem:[%s1385 + $0x6c] sm:$0xe]
        %v3033 = vld [vmem:[%s1385 + $0x78] sm:$0xe]
        %v3034 = vld [vmem:[%s1385 + $0x84] sm:$0xe]
        %v3035 = vld [vmem:[%s1385 + $0x90] sm:$0xe]
        %v3036 = vld [vmem:[%s1385 + $0x9c] sm:$0xe]
        %v3037 = vld [vmem:[%s1385 + $0xa8] sm:$0xe]
        %v3038 = vld [vmem:[%s1385 + $0xb4] sm:$0xe]
        %v3055 = vunpack.c.l.b16 %v2991
        %v3056 = vunpack.c.l.b16 %v2992
        %v3057 = vunpack.c.l.b16 %v2993
        %v3058 = vunpack.c.l.b16 %v2994
        %v3059 = vunpack.c.l.b16 %v2995
        %v3060 = vunpack.c.l.b16 %v2996
        %v3061 = vunpack.c.l.b16 %v2997
        %v3062 = vunpack.c.l.b16 %v2998
        %v3063 = vunpack.c.l.b16 %v2999
        %v3064 = vunpack.c.l.b16 %v3000
        %v3065 = vunpack.c.l.b16 %v3001
        %v3066 = vunpack.c.l.b16 %v3002
        %v3067 = vunpack.c.l.b16 %v3003
        %v3068 = vunpack.c.l.b16 %v3004
        %v3069 = vunpack.c.l.b16 %v3005
        %v3070 = vunpack.c.l.b16 %v3006
        %v3071 = vpack.c.b16 %v1451, %v3055
        %v3072 = vpack.c.b16 %v1453, %v3056
        %v3073 = vpack.c.b16 %v1455, %v3057
        %v3074 = vpack.c.b16 %v1457, %v3058
        %v3075 = vpack.c.b16 %v1459, %v3059
        %v3076 = vpack.c.b16 %v1461, %v3060
        %v3077 = vpack.c.b16 %v1463, %v3061
        %v3078 = vpack.c.b16 %v1465, %v3062
        %v3079 = vpack.c.b16 %v1467, %v3063
        %v3080 = vpack.c.b16 %v1469, %v3064
        %v3081 = vpack.c.b16 %v1471, %v3065
        %v3082 = vpack.c.b16 %v1473, %v3066
        %v3083 = vpack.c.b16 %v1475, %v3067
        %v3084 = vpack.c.b16 %v1477, %v3068
        %v3085 = vpack.c.b16 %v1479, %v3069
        %v3086 = vpack.c.b16 %v1481, %v3070
        %v3103 = vunpack.c.l.b16 %v3007
        %v3104 = vunpack.c.l.b16 %v3008
        %v3105 = vunpack.c.l.b16 %v3009
        %v3106 = vunpack.c.l.b16 %v3010
        %v3107 = vunpack.c.l.b16 %v3011
        %v3108 = vunpack.c.l.b16 %v3012
        %v3109 = vunpack.c.l.b16 %v3013
        %v3110 = vunpack.c.l.b16 %v3014
        %v3111 = vunpack.c.l.b16 %v3015
        %v3112 = vunpack.c.l.b16 %v3016
        %v3113 = vunpack.c.l.b16 %v3017
        %v3114 = vunpack.c.l.b16 %v3018
        %v3115 = vunpack.c.l.b16 %v3019
        %v3116 = vunpack.c.l.b16 %v3020
        %v3117 = vunpack.c.l.b16 %v3021
        %v3118 = vunpack.c.l.b16 %v3022
        %v3119 = vpack.c.b16 %v1531, %v3103
        %v3120 = vpack.c.b16 %v1533, %v3104
        %v3121 = vpack.c.b16 %v1535, %v3105
        %v3122 = vpack.c.b16 %v1537, %v3106
        %v3123 = vpack.c.b16 %v1539, %v3107
        %v3124 = vpack.c.b16 %v1541, %v3108
        %v3125 = vpack.c.b16 %v1543, %v3109
        %v3126 = vpack.c.b16 %v1545, %v3110
        %v3127 = vpack.c.b16 %v1547, %v3111
        %v3128 = vpack.c.b16 %v1549, %v3112
        %v3129 = vpack.c.b16 %v1551, %v3113
        %v3130 = vpack.c.b16 %v1553, %v3114
        %v3131 = vpack.c.b16 %v1555, %v3115
        %v3132 = vpack.c.b16 %v1557, %v3116
        %v3133 = vpack.c.b16 %v1559, %v3117
        %v3134 = vpack.c.b16 %v1561, %v3118
        %3135 = vrot.lane.b32.xlu0 %v3119, 64
        %v3136 = vpop.permute.xlu0 %3135
        %3137 = vrot.lane.b32.xlu0 %v3120, 64
        %v3138 = vpop.permute.xlu0 %3137
        %3139 = vrot.lane.b32.xlu0 %v3121, 64
        %v3140 = vpop.permute.xlu0 %3139
        %3141 = vrot.lane.b32.xlu0 %v3122, 64
        %v3142 = vpop.permute.xlu0 %3141
        %3143 = vrot.lane.b32.xlu0 %v3123, 64
        %v3144 = vpop.permute.xlu0 %3143
        %3145 = vrot.lane.b32.xlu0 %v3124, 64
        %v3146 = vpop.permute.xlu0 %3145
        %3147 = vrot.lane.b32.xlu0 %v3125, 64
        %v3148 = vpop.permute.xlu0 %3147
        %3149 = vrot.lane.b32.xlu0 %v3126, 64
        %v3150 = vpop.permute.xlu0 %3149
        %3151 = vrot.lane.b32.xlu0 %v3127, 64
        %v3152 = vpop.permute.xlu0 %3151
        %3153 = vrot.lane.b32.xlu0 %v3128, 64
        %v3154 = vpop.permute.xlu0 %3153
        %3155 = vrot.lane.b32.xlu0 %v3129, 64
        %v3156 = vpop.permute.xlu0 %3155
        %3157 = vrot.lane.b32.xlu0 %v3130, 64
        %v3158 = vpop.permute.xlu0 %3157
        %3159 = vrot.lane.b32.xlu0 %v3131, 64
        %v3160 = vpop.permute.xlu0 %3159
        %3161 = vrot.lane.b32.xlu0 %v3132, 64
        %v3162 = vpop.permute.xlu0 %3161
        %3163 = vrot.lane.b32.xlu0 %v3133, 64
        %v3164 = vpop.permute.xlu0 %3163
        %3165 = vrot.lane.b32.xlu0 %v3134, 64
        %v3166 = vpop.permute.xlu0 %3165
        %v3183 = vunpack.c.l.b16 %v3023
        %v3184 = vunpack.c.l.b16 %v3024
        %v3185 = vunpack.c.l.b16 %v3025
        %v3186 = vunpack.c.l.b16 %v3026
        %v3187 = vunpack.c.l.b16 %v3027
        %v3188 = vunpack.c.l.b16 %v3028
        %v3189 = vunpack.c.l.b16 %v3029
        %v3190 = vunpack.c.l.b16 %v3030
        %v3191 = vunpack.c.l.b16 %v3031
        %v3192 = vunpack.c.l.b16 %v3032
        %v3193 = vunpack.c.l.b16 %v3033
        %v3194 = vunpack.c.l.b16 %v3034
        %v3195 = vunpack.c.l.b16 %v3035
        %v3196 = vunpack.c.l.b16 %v3036
        %v3197 = vunpack.c.l.b16 %v3037
        %v3198 = vunpack.c.l.b16 %v3038
        %v3199 = vpack.c.b16 %v1643, %v3183
        %v3200 = vpack.c.b16 %v1645, %v3184
        %v3201 = vpack.c.b16 %v1647, %v3185
        %v3202 = vpack.c.b16 %v1649, %v3186
        %v3203 = vpack.c.b16 %v1651, %v3187
        %v3204 = vpack.c.b16 %v1653, %v3188
        %v3205 = vpack.c.b16 %v1655, %v3189
        %v3206 = vpack.c.b16 %v1657, %v3190
        %v3207 = vpack.c.b16 %v1659, %v3191
        %v3208 = vpack.c.b16 %v1661, %v3192
        %v3209 = vpack.c.b16 %v1663, %v3193
        %v3210 = vpack.c.b16 %v1665, %v3194
        %v3211 = vpack.c.b16 %v1667, %v3195
        %v3212 = vpack.c.b16 %v1669, %v3196
        %v3213 = vpack.c.b16 %v1671, %v3197
        %v3214 = vpack.c.b16 %v1673, %v3198
        %v3217 = vsel %vm1690, %v3071, %v3136
        %v3220 = vsel %vm1690, %v3072, %v3138
        %v3223 = vsel %vm1690, %v3073, %v3140
        %v3226 = vsel %vm1690, %v3074, %v3142
        %v3229 = vsel %vm1690, %v3075, %v3144
        %v3232 = vsel %vm1690, %v3076, %v3146
        %v3235 = vsel %vm1690, %v3077, %v3148
        %v3238 = vsel %vm1690, %v3078, %v3150
        %v3241 = vsel %vm1690, %v3079, %v3152
        %v3244 = vsel %vm1690, %v3080, %v3154
        %v3247 = vsel %vm1690, %v3081, %v3156
        %v3250 = vsel %vm1690, %v3082, %v3158
        %v3253 = vsel %vm1690, %v3083, %v3160
        %v3256 = vsel %vm1690, %v3084, %v3162
        %v3259 = vsel %vm1690, %v3085, %v3164
        %v3262 = vsel %vm1690, %v3086, %v3166
        %vm3295 = vcmask 1046528
        %v3296 = vrot.slane %v3217, 1
        %v3297 = vrot.slane %v2005, 1
        %v3298 = vsel %vm3295, %v3296, %v3297
        %v3299 = vrot.slane %v3199, 1
        %v3300 = vrot.slane %v1987, 1
        %v3301 = vsel %vm3295, %v3299, %v3300
        %v3302 = vrot.slane %v3220, 1
        %v3303 = vrot.slane %v2008, 1
        %v3304 = vsel %vm3295, %v3302, %v3303
        %v3305 = vrot.slane %v3200, 1
        %v3306 = vrot.slane %v1988, 1
        %v3307 = vsel %vm3295, %v3305, %v3306
        %v3308 = vrot.slane %v3223, 1
        %v3309 = vrot.slane %v2011, 1
        %v3310 = vsel %vm3295, %v3308, %v3309
        %v3311 = vrot.slane %v3201, 1
        %v3312 = vrot.slane %v1989, 1
        %v3313 = vsel %vm3295, %v3311, %v3312
        %v3314 = vrot.slane %v3226, 1
        %v3315 = vrot.slane %v2014, 1
        %v3316 = vsel %vm3295, %v3314, %v3315
        %v3317 = vrot.slane %v3202, 1
        %v3318 = vrot.slane %v1990, 1
        %v3319 = vsel %vm3295, %v3317, %v3318
        %v3320 = vrot.slane %v3229, 1
        %v3321 = vrot.slane %v2017, 1
        %v3322 = vsel %vm3295, %v3320, %v3321
        %v3323 = vrot.slane %v3203, 1
        %v3324 = vrot.slane %v1991, 1
        %v3325 = vsel %vm3295, %v3323, %v3324
        %v3326 = vrot.slane %v3232, 1
        %v3327 = vrot.slane %v2020, 1
        %v3328 = vsel %vm3295, %v3326, %v3327
        %v3329 = vrot.slane %v3204, 1
        %v3330 = vrot.slane %v1992, 1
        %v3331 = vsel %vm3295, %v3329, %v3330
        %v3332 = vrot.slane %v3235, 1
        %v3333 = vrot.slane %v2023, 1
        %v3334 = vsel %vm3295, %v3332, %v3333
        %v3335 = vrot.slane %v3205, 1
        %v3336 = vrot.slane %v1993, 1
        %v3337 = vsel %vm3295, %v3335, %v3336
        %v3338 = vrot.slane %v3238, 1
        %v3339 = vrot.slane %v2026, 1
        %v3340 = vsel %vm3295, %v3338, %v3339
        %v3341 = vrot.slane %v3206, 1
        %v3342 = vrot.slane %v1994, 1
        %v3343 = vsel %vm3295, %v3341, %v3342
        %v3344 = vrot.slane %v3241, 1
        %v3345 = vrot.slane %v2029, 1
        %v3346 = vsel %vm3295, %v3344, %v3345
        %v3347 = vrot.slane %v3207, 1
        %v3348 = vrot.slane %v1995, 1
        %v3349 = vsel %vm3295, %v3347, %v3348
        %v3350 = vrot.slane %v3244, 1
        %v3351 = vrot.slane %v2032, 1
        %v3352 = vsel %vm3295, %v3350, %v3351
        %v3353 = vrot.slane %v3208, 1
        %v3354 = vrot.slane %v1996, 1
        %v3355 = vsel %vm3295, %v3353, %v3354
        %v3356 = vrot.slane %v3247, 1
        %v3357 = vrot.slane %v2035, 1
        %v3358 = vsel %vm3295, %v3356, %v3357
        %v3359 = vrot.slane %v3209, 1
        %v3360 = vrot.slane %v1997, 1
        %v3361 = vsel %vm3295, %v3359, %v3360
        %v3362 = vrot.slane %v3250, 1
        %v3363 = vrot.slane %v2038, 1
        %v3364 = vsel %vm3295, %v3362, %v3363
        %v3365 = vrot.slane %v3210, 1
        %v3366 = vrot.slane %v1998, 1
        %v3367 = vsel %vm3295, %v3365, %v3366
        %v3368 = vrot.slane %v3253, 1
        %v3369 = vrot.slane %v2041, 1
        %v3370 = vsel %vm3295, %v3368, %v3369
        %v3371 = vrot.slane %v3211, 1
        %v3372 = vrot.slane %v1999, 1
        %v3373 = vsel %vm3295, %v3371, %v3372
        %v3374 = vrot.slane %v3256, 1
        %v3375 = vrot.slane %v2044, 1
        %v3376 = vsel %vm3295, %v3374, %v3375
        %v3377 = vrot.slane %v3212, 1
        %v3378 = vrot.slane %v2000, 1
        %v3379 = vsel %vm3295, %v3377, %v3378
        %v3380 = vrot.slane %v3259, 1
        %v3381 = vrot.slane %v2047, 1
        %v3382 = vsel %vm3295, %v3380, %v3381
        %v3383 = vrot.slane %v3213, 1
        %v3384 = vrot.slane %v2001, 1
        %v3385 = vsel %vm3295, %v3383, %v3384
        %v3386 = vrot.slane %v3262, 1
        %v3387 = vrot.slane %v2050, 1
        %v3388 = vsel %vm3295, %v3386, %v3387
        %v3389 = vrot.slane %v3214, 1
        %v3390 = vrot.slane %v2002, 1
        %v3391 = vsel %vm3295, %v3389, %v3390
        %s3408 = scalar_lea.vmem %s4, 192
        %v3409 = vld [vmem:[%s3408] sm:$0xf]
        %v3410 = vld [vmem:[%s3408 + $0x4] sm:$0xf]
        %v3411 = vld [vmem:[%s3408 + $0x8] sm:$0xf]
        %v3412 = vld [vmem:[%s3408 + $0xc] sm:$0xf]
        %v3413 = vld [vmem:[%s3408 + $0x10] sm:$0xf]
        %v3414 = vld [vmem:[%s3408 + $0x14] sm:$0xf]
        %v3415 = vld [vmem:[%s3408 + $0x18] sm:$0xf]
        %v3416 = vld [vmem:[%s3408 + $0x1c] sm:$0xf]
        %v3417 = vld [vmem:[%s3408 + $0x20] sm:$0xf]
        %v3418 = vld [vmem:[%s3408 + $0x24] sm:$0xf]
        %v3419 = vld [vmem:[%s3408 + $0x28] sm:$0xf]
        %v3420 = vld [vmem:[%s3408 + $0x2c] sm:$0xf]
        %v3421 = vld [vmem:[%s3408 + $0x30] sm:$0xf]
        %v3422 = vld [vmem:[%s3408 + $0x34] sm:$0xf]
        %v3423 = vld [vmem:[%s3408 + $0x38] sm:$0xf]
        %v3424 = vld [vmem:[%s3408 + $0x3c] sm:$0xf]
        %v3425 = vld [vmem:[%s3408 + $0x40] sm:$0xf]
        %v3426 = vld [vmem:[%s3408 + $0x44] sm:$0xf]
        %v3427 = vld [vmem:[%s3408 + $0x48] sm:$0xf]
        %v3428 = vld [vmem:[%s3408 + $0x4c] sm:$0xf]
        %v3429 = vld [vmem:[%s3408 + $0x50] sm:$0xf]
        %v3430 = vld [vmem:[%s3408 + $0x54] sm:$0xf]
        %v3431 = vld [vmem:[%s3408 + $0x58] sm:$0xf]
        %v3432 = vld [vmem:[%s3408 + $0x5c] sm:$0xf]
        %v3457 = vunpack.c.l.b16 %v3409
        %v3458 = vunpack.c.l.b16 %v3410
        %v3459 = vunpack.c.l.b16 %v3411
        %v3460 = vunpack.c.l.b16 %v3412
        %v3461 = vunpack.c.l.b16 %v3413
        %v3462 = vunpack.c.l.b16 %v3414
        %v3463 = vunpack.c.l.b16 %v3415
        %v3464 = vunpack.c.l.b16 %v3416
        %v3465 = vunpack.c.l.b16 %v3417
        %v3466 = vunpack.c.l.b16 %v3418
        %v3467 = vunpack.c.l.b16 %v3419
        %v3468 = vunpack.c.l.b16 %v3420
        %v3469 = vunpack.c.l.b16 %v3421
        %v3470 = vunpack.c.l.b16 %v3422
        %v3471 = vunpack.c.l.b16 %v3423
        %v3472 = vunpack.c.l.b16 %v3424
        %v3473 = vunpack.c.l.b16 %v3425
        %v3474 = vunpack.c.l.b16 %v3426
        %v3475 = vunpack.c.l.b16 %v3427
        %v3476 = vunpack.c.l.b16 %v3428
        %v3477 = vunpack.c.l.b16 %v3429
        %v3478 = vunpack.c.l.b16 %v3430
        %v3479 = vunpack.c.l.b16 %v3431
        %v3480 = vunpack.c.l.b16 %v3432
        %v3481 = vpack.c.b16 %v3458, %v3457
        %v3482 = vpack.c.b16 %v3460, %v3459
        %v3483 = vpack.c.b16 %v3462, %v3461
        %v3484 = vpack.c.b16 %v3464, %v3463
        %v3485 = vpack.c.b16 %v3466, %v3465
        %v3486 = vpack.c.b16 %v3468, %v3467
        %v3487 = vpack.c.b16 %v3470, %v3469
        %v3488 = vpack.c.b16 %v3472, %v3471
        %v3489 = vpack.c.b16 %v3474, %v3473
        %v3490 = vpack.c.b16 %v3476, %v3475
        %v3491 = vpack.c.b16 %v3478, %v3477
        %v3492 = vpack.c.b16 %v3480, %v3479
        %v3506 = vsel %vm1690, %v3301, 0
        %v3509 = vsel %vm1690, %v3307, 0
        %v3512 = vsel %vm1690, %v3313, 0
        %v3515 = vsel %vm1690, %v3319, 0
        %v3518 = vsel %vm1690, %v3325, 0
        %v3521 = vsel %vm1690, %v3331, 0
        %v3524 = vsel %vm1690, %v3337, 0
        %v3527 = vsel %vm1690, %v3343, 0
        %v3530 = vsel %vm1690, %v3349, 0
        %v3533 = vsel %vm1690, %v3355, 0
        %v3536 = vsel %vm1690, %v3361, 0
        %v3539 = vsel %vm1690, %v3367, 0
        %v3542 = vsel %vm1690, %v3373, 0
        %v3545 = vsel %vm1690, %v3379, 0
        %v3548 = vsel %vm1690, %v3385, 0
        %v3551 = vsel %vm1690, %v3391, 0
        %3553 = vmatprep.subr.bf16.mxu0 0
        %3554 = vmatpush1.bf16.msra.mxu0 %v3481
        %3555 = vmatprep.subr.bf16.mxu0 0
        %3556 = vmatpush1.bf16.msra.mxu0 %v3482
        %3557 = vmatprep.subr.bf16.mxu0 0
        %3558 = vmatpush1.bf16.msra.mxu0 %v3483
        %3559 = vmatprep.subr.bf16.mxu0 0
        %3560 = vmatpush1.bf16.msra.mxu0 %v3484
        %3561 = vmatprep.subr.bf16.mxu0 0
        %3562 = vmatpush1.bf16.msra.mxu0 %v3485
        %3563 = vmatprep.subr.bf16.mxu0 0
        %3564 = vmatpush1.bf16.msra.mxu0 %v3486
        %3565 = vmatprep.subr.bf16.mxu0 0
        %3566 = vmatpush1.bf16.msra.mxu0 %v3487
        %3567 = vmatprep.subr.bf16.mxu0 0
        %3568 = vmatpush1.bf16.msra.mxu0 %v3488
        %3569 = vmatprep.subr.bf16.mxu0 0
        %3570 = vmatpush1.bf16.msra.mxu0 %v3489
        %3571 = vmatprep.subr.bf16.mxu0 0
        %3572 = vmatpush1.bf16.msra.mxu0 %v3490
        %3573 = vmatprep.subr.bf16.mxu0 0
        %3574 = vmatpush1.bf16.msra.mxu0 %v3491
        %3575 = vmatprep.subr.bf16.mxu0 0
        %3576 = vmatpush1.bf16.msra.mxu0 %v3492
        %3577 = vmatprep.subr.bf16.mxu0 0
        %3578 = vmatpush1.bf16.msra.mxu0 0
        %3579 = vmatprep.subr.bf16.mxu0 0
        %3580 = vmatpush1.bf16.msra.mxu0 0
        %3581 = vmatprep.subr.bf16.mxu0 0
        %3582 = vmatpush1.bf16.msra.mxu0 0
        %3583 = vmatprep.subr.bf16.mxu0 0
        %3584 = vmatpush1.bf16.msra.mxu0 0
        %3585 = vmatprep.mubr.bf16.mxu0 %v3506
        %3586 = vmatmul.mubr.bf16.gmra.mrb[0].mxu0 %v3298
        %v3587 = vpop.f32.mrb[0].mxu0
        %v3588 = vadd.f32 0.0, %v3587
        %v3589 = vpop.f32.mrb[0].mxu0
        %v3590 = vpop.f32.mrb[0].mxu0
        %v3591 = vadd.f32 0.0, %v3590
        %v3592 = vpop.f32.mrb[0].mxu0
        %3593 = vmatprep.mubr.bf16.mxu0 %v3509
        %3594 = vmatmul.mubr.bf16.gmra.mrb[0].mxu0 %v3304
        %v3595 = vpop.f32.mrb[0].mxu0
        %v3596 = vadd.f32 0.0, %v3595
        %v3597 = vpop.f32.mrb[0].mxu0
        %v3598 = vpop.f32.mrb[0].mxu0
        %v3599 = vadd.f32 0.0, %v3598
        %v3600 = vpop.f32.mrb[0].mxu0
        %3601 = vmatprep.mubr.bf16.mxu0 %v3512
        %3602 = vmatmul.mubr.bf16.gmra.mrb[0].mxu0 %v3310
        %v3603 = vpop.f32.mrb[0].mxu0
        %v3604 = vadd.f32 0.0, %v3603
        %v3605 = vpop.f32.mrb[0].mxu0
        %v3606 = vpop.f32.mrb[0].mxu0
        %v3607 = vadd.f32 0.0, %v3606
        %v3608 = vpop.f32.mrb[0].mxu0
        %3609 = vmatprep.mubr.bf16.mxu0 %v3515
        %3610 = vmatmul.mubr.bf16.gmra.mrb[0].mxu0 %v3316
        %v3611 = vpop.f32.mrb[0].mxu0
        %v3612 = vadd.f32 0.0, %v3611
        %v3613 = vpop.f32.mrb[0].mxu0
        %v3614 = vpop.f32.mrb[0].mxu0
        %v3615 = vadd.f32 0.0, %v3614
        %v3616 = vpop.f32.mrb[0].mxu0
        %3617 = vmatprep.mubr.bf16.mxu0 %v3518
        %3618 = vmatmul.mubr.bf16.gmra.mrb[0].mxu0 %v3322
        %v3619 = vpop.f32.mrb[0].mxu0
        %v3620 = vadd.f32 0.0, %v3619
        %v3621 = vpop.f32.mrb[0].mxu0
        %v3622 = vpop.f32.mrb[0].mxu0
        %v3623 = vadd.f32 0.0, %v3622
        %v3624 = vpop.f32.mrb[0].mxu0
        %3625 = vmatprep.mubr.bf16.mxu0 %v3521
        %3626 = vmatmul.mubr.bf16.gmra.mrb[0].mxu0 %v3328
        %v3627 = vpop.f32.mrb[0].mxu0
        %v3628 = vadd.f32 0.0, %v3627
        %v3629 = vpop.f32.mrb[0].mxu0
        %v3630 = vpop.f32.mrb[0].mxu0
        %v3631 = vadd.f32 0.0, %v3630
        %v3632 = vpop.f32.mrb[0].mxu0
        %3633 = vmatprep.mubr.bf16.mxu0 %v3524
        %3634 = vmatmul.mubr.bf16.gmra.mrb[0].mxu0 %v3334
        %v3635 = vpop.f32.mrb[0].mxu0
        %v3636 = vadd.f32 0.0, %v3635
        %v3637 = vpop.f32.mrb[0].mxu0
        %v3638 = vpop.f32.mrb[0].mxu0
        %v3639 = vadd.f32 0.0, %v3638
        %v3640 = vpop.f32.mrb[0].mxu0
        %3641 = vmatprep.mubr.bf16.mxu0 %v3527
        %3642 = vmatmul.mubr.bf16.gmra.mrb[0].mxu0 %v3340
        %v3643 = vpop.f32.mrb[0].mxu0
        %v3644 = vadd.f32 0.0, %v3643
        %v3645 = vpop.f32.mrb[0].mxu0
        %v3646 = vpop.f32.mrb[0].mxu0
        %v3647 = vadd.f32 0.0, %v3646
        %v3648 = vpop.f32.mrb[0].mxu0
        %3649 = vmatprep.mubr.bf16.mxu0 %v3530
        %3650 = vmatmul.mubr.bf16.gmra.mrb[0].mxu0 %v3346
        %v3651 = vpop.f32.mrb[0].mxu0
        %v3652 = vadd.f32 0.0, %v3651
        %v3653 = vpop.f32.mrb[0].mxu0
        %v3654 = vpop.f32.mrb[0].mxu0
        %v3655 = vadd.f32 0.0, %v3654
        %v3656 = vpop.f32.mrb[0].mxu0
        %3657 = vmatprep.mubr.bf16.mxu0 %v3533
        %3658 = vmatmul.mubr.bf16.gmra.mrb[0].mxu0 %v3352
        %v3659 = vpop.f32.mrb[0].mxu0
        %v3660 = vadd.f32 0.0, %v3659
        %v3661 = vpop.f32.mrb[0].mxu0
        %v3662 = vpop.f32.mrb[0].mxu0
        %v3663 = vadd.f32 0.0, %v3662
        %v3664 = vpop.f32.mrb[0].mxu0
        %3665 = vmatprep.mubr.bf16.mxu0 %v3536
        %3666 = vmatmul.mubr.bf16.gmra.mrb[0].mxu0 %v3358
        %v3667 = vpop.f32.mrb[0].mxu0
        %v3668 = vadd.f32 0.0, %v3667
        %v3669 = vpop.f32.mrb[0].mxu0
        %v3670 = vpop.f32.mrb[0].mxu0
        %v3671 = vadd.f32 0.0, %v3670
        %v3672 = vpop.f32.mrb[0].mxu0
        %3673 = vmatprep.mubr.bf16.mxu0 %v3539
        %3674 = vmatmul.mubr.bf16.gmra.mrb[0].mxu0 %v3364
        %v3675 = vpop.f32.mrb[0].mxu0
        %v3676 = vadd.f32 0.0, %v3675
        %v3677 = vpop.f32.mrb[0].mxu0
        %v3678 = vpop.f32.mrb[0].mxu0
        %v3679 = vadd.f32 0.0, %v3678
        %v3680 = vpop.f32.mrb[0].mxu0
        %3681 = vmatprep.mubr.bf16.mxu0 %v3542
        %3682 = vmatmul.mubr.bf16.gmra.mrb[0].mxu0 %v3370
        %v3683 = vpop.f32.mrb[0].mxu0
        %v3684 = vadd.f32 0.0, %v3683
        %v3685 = vpop.f32.mrb[0].mxu0
        %v3686 = vpop.f32.mrb[0].mxu0
        %v3687 = vadd.f32 0.0, %v3686
        %v3688 = vpop.f32.mrb[0].mxu0
        %3689 = vmatprep.mubr.bf16.mxu0 %v3545
        %3690 = vmatmul.mubr.bf16.gmra.mrb[0].mxu0 %v3376
        %v3691 = vpop.f32.mrb[0].mxu0
        %v3692 = vadd.f32 0.0, %v3691
        %v3693 = vpop.f32.mrb[0].mxu0
        %v3694 = vpop.f32.mrb[0].mxu0
        %v3695 = vadd.f32 0.0, %v3694
        %v3696 = vpop.f32.mrb[0].mxu0
        %3697 = vmatprep.mubr.bf16.mxu0 %v3548
        %3698 = vmatmul.mubr.bf16.gmra.mrb[0].mxu0 %v3382
        %v3699 = vpop.f32.mrb[0].mxu0
        %v3700 = vadd.f32 0.0, %v3699
        %v3701 = vpop.f32.mrb[0].mxu0
        %v3702 = vpop.f32.mrb[0].mxu0
        %v3703 = vadd.f32 0.0, %v3702
        %v3704 = vpop.f32.mrb[0].mxu0
        %3705 = vmatprep.mubr.bf16.mxu0 %v3551
        %3706 = vmatmul.mubr.bf16.gmra.mrb[0].mxu0 %v3388
        %v3707 = vpop.f32.mrb[0].mxu0
        %v3708 = vadd.f32 0.0, %v3707
        %v3709 = vpop.f32.mrb[0].mxu0
        %v3710 = vpop.f32.mrb[0].mxu0
        %v3711 = vadd.f32 0.0, %v3710
        %v3712 = vpop.f32.mrb[0].mxu0
        %3713 = vdwg.mxu0
        %v3714 = vadd.f32 %v2865, %v3588
        %v3715 = vadd.f32 %v2868, %v3591
        %v3716 = vadd.f32 %v2873, %v3596
        %v3717 = vadd.f32 %v2876, %v3599
        %v3718 = vadd.f32 %v2881, %v3604
        %v3719 = vadd.f32 %v2884, %v3607
        %v3720 = vadd.f32 %v2889, %v3612
        %v3721 = vadd.f32 %v2892, %v3615
        %v3722 = vadd.f32 %v2897, %v3620
        %v3723 = vadd.f32 %v2900, %v3623
        %v3724 = vadd.f32 %v2905, %v3628
        %v3725 = vadd.f32 %v2908, %v3631
        %v3726 = vadd.f32 %v2913, %v3636
        %v3727 = vadd.f32 %v2916, %v3639
        %v3728 = vadd.f32 %v2921, %v3644
        %v3729 = vadd.f32 %v2924, %v3647
        %v3730 = vadd.f32 %v2929, %v3652
        %v3731 = vadd.f32 %v2932, %v3655
        %v3732 = vadd.f32 %v2937, %v3660
        %v3733 = vadd.f32 %v2940, %v3663
        %v3734 = vadd.f32 %v2945, %v3668
        %v3735 = vadd.f32 %v2948, %v3671
        %v3736 = vadd.f32 %v2953, %v3676
        %v3737 = vadd.f32 %v2956, %v3679
        %v3738 = vadd.f32 %v2961, %v3684
        %v3739 = vadd.f32 %v2964, %v3687
        %v3740 = vadd.f32 %v2969, %v3692
        %v3741 = vadd.f32 %v2972, %v3695
        %v3742 = vadd.f32 %v2977, %v3700
        %v3743 = vadd.f32 %v2980, %v3703
        %v3744 = vadd.f32 %v2985, %v3708
        %v3745 = vadd.f32 %v2988, %v3711
        %v3746 = vld [vmem:[%s5] sm:$0x1]
        %v3748 = vlaneseq
        %v3749 = vshrl.u32 %v3748, 7
        %v3750 = vsub.s32 0, %v3749
        %v3751 = vrot.slane %v3746, %v3750
        %v3753 = vadd.f32 %v3714, %v3751
        %v3754 = vadd.f32 %v3715, %v3751
        %v3755 = vadd.f32 %v3716, %v3751
        %v3756 = vadd.f32 %v3717, %v3751
        %v3757 = vadd.f32 %v3718, %v3751
        %v3758 = vadd.f32 %v3719, %v3751
        %v3759 = vadd.f32 %v3720, %v3751
        %v3760 = vadd.f32 %v3721, %v3751
        %v3761 = vadd.f32 %v3722, %v3751
        %v3762 = vadd.f32 %v3723, %v3751
        %v3763 = vadd.f32 %v3724, %v3751
        %v3764 = vadd.f32 %v3725, %v3751
        %v3765 = vadd.f32 %v3726, %v3751
        %v3766 = vadd.f32 %v3727, %v3751
        %v3767 = vadd.f32 %v3728, %v3751
        %v3768 = vadd.f32 %v3729, %v3751
        %v3769 = vadd.f32 %v3730, %v3751
        %v3770 = vadd.f32 %v3731, %v3751
        %v3771 = vadd.f32 %v3732, %v3751
        %v3772 = vadd.f32 %v3733, %v3751
        %v3773 = vadd.f32 %v3734, %v3751
        %v3774 = vadd.f32 %v3735, %v3751
        %v3775 = vadd.f32 %v3736, %v3751
        %v3776 = vadd.f32 %v3737, %v3751
        %v3777 = vadd.f32 %v3738, %v3751
        %v3778 = vadd.f32 %v3739, %v3751
        %v3779 = vadd.f32 %v3740, %v3751
        %v3780 = vadd.f32 %v3741, %v3751
        %v3781 = vadd.f32 %v3742, %v3751
        %v3782 = vadd.f32 %v3743, %v3751
        %v3783 = vadd.f32 %v3744, %v3751
        %v3784 = vadd.f32 %v3745, %v3751
        %v3785 = vmax.f32 %v3753, %v3755
        %v3786 = vmax.f32 %v3754, %v3756
        %v3787 = vmax.f32 %v3757, %v3759
        %v3788 = vmax.f32 %v3758, %v3760
        %v3789 = vmax.f32 %v3761, %v3763
        %v3790 = vmax.f32 %v3762, %v3764
        %v3791 = vmax.f32 %v3765, %v3767
        %v3792 = vmax.f32 %v3766, %v3768
        %v3793 = vmax.f32 %v3769, %v3771
        %v3794 = vmax.f32 %v3770, %v3772
        %v3795 = vmax.f32 %v3773, %v3775
        %v3796 = vmax.f32 %v3774, %v3776
        %v3797 = vmax.f32 %v3777, %v3779
        %v3798 = vmax.f32 %v3778, %v3780
        %v3799 = vmax.f32 %v3781, %v3783
        %v3800 = vmax.f32 %v3782, %v3784
        %3801 = vst [vmem:[#allocation3] sm:$0xff] %v3785
        %3802 = vst [vmem:[#allocation3 + $0x8] sm:$0xff] %v3786
        %3803 = vst [vmem:[#allocation3 + $0x10] sm:$0xff] %v3787
        %3804 = vst [vmem:[#allocation3 + $0x18] sm:$0xff] %v3788
        %3805 = vst [vmem:[#allocation3 + $0x20] sm:$0xff] %v3789
        %3806 = vst [vmem:[#allocation3 + $0x28] sm:$0xff] %v3790
        %3807 = vst [vmem:[#allocation3 + $0x30] sm:$0xff] %v3791
        %3808 = vst [vmem:[#allocation3 + $0x38] sm:$0xff] %v3792
        %3809 = vst [vmem:[#allocation3 + $0x40] sm:$0xff] %v3793
        %3810 = vst [vmem:[#allocation3 + $0x48] sm:$0xff] %v3794
        %3811 = vst [vmem:[#allocation3 + $0x50] sm:$0xff] %v3795
        %3812 = vst [vmem:[#allocation3 + $0x58] sm:$0xff] %v3796
        %3813 = vst [vmem:[#allocation3 + $0x60] sm:$0xff] %v3797
        %3814 = vst [vmem:[#allocation3 + $0x68] sm:$0xff] %v3798
        %3815 = vst [vmem:[#allocation3 + $0x70] sm:$0xff] %v3799
        %3816 = vst [vmem:[#allocation3 + $0x78] sm:$0xff] %v3800
        %v3817 = vld [vmem:[#allocation3] ss:$2 sm:$0xff]
        %s3818 = scalar_lea.vmem [#allocation3], 16
        %v3819 = vld [vmem:[%s3818] ss:$2 sm:$0xff]
        %s3820 = scalar_lea.vmem [#allocation3], 32
        %v3821 = vld [vmem:[%s3820] ss:$2 sm:$0xff]
        %s3822 = scalar_lea.vmem [#allocation3], 48
        %v3823 = vld [vmem:[%s3822] ss:$2 sm:$0xff]
        %s3824 = scalar_lea.vmem [#allocation3], 64
        %v3825 = vld [vmem:[%s3824] ss:$2 sm:$0xff]
        %s3826 = scalar_lea.vmem [#allocation3], 80
        %v3827 = vld [vmem:[%s3826] ss:$2 sm:$0xff]
        %s3828 = scalar_lea.vmem [#allocation3], 96
        %v3829 = vld [vmem:[%s3828] ss:$2 sm:$0xff]
        %s3830 = scalar_lea.vmem [#allocation3], 112
        %v3831 = vld [vmem:[%s3830] ss:$2 sm:$0xff]
        %s3832 = scalar_lea.vmem [#allocation3], 1
        %v3833 = vld [vmem:[%s3832] ss:$2 sm:$0xff]
        %s3834 = scalar_lea.vmem [#allocation3], 17
        %v3835 = vld [vmem:[%s3834] ss:$2 sm:$0xff]
        %s3836 = scalar_lea.vmem [#allocation3], 33
        %v3837 = vld [vmem:[%s3836] ss:$2 sm:$0xff]
        %s3838 = scalar_lea.vmem [#allocation3], 49
        %v3839 = vld [vmem:[%s3838] ss:$2 sm:$0xff]
        %s3840 = scalar_lea.vmem [#allocation3], 65
        %v3841 = vld [vmem:[%s3840] ss:$2 sm:$0xff]
        %s3842 = scalar_lea.vmem [#allocation3], 81
        %v3843 = vld [vmem:[%s3842] ss:$2 sm:$0xff]
        %s3844 = scalar_lea.vmem [#allocation3], 97
        %v3845 = vld [vmem:[%s3844] ss:$2 sm:$0xff]
        %s3846 = scalar_lea.vmem [#allocation3], 113
        %v3847 = vld [vmem:[%s3846] ss:$2 sm:$0xff]
        %v3848 = vmax.f32 %v3817, %v3833
        %v3849 = vmax.f32 %v3819, %v3835
        %v3850 = vmax.f32 %v3821, %v3837
        %v3851 = vmax.f32 %v3823, %v3839
        %v3852 = vmax.f32 %v3825, %v3841
        %v3853 = vmax.f32 %v3827, %v3843
        %v3854 = vmax.f32 %v3829, %v3845
        %v3855 = vmax.f32 %v3831, %v3847
        %v3856 = vadd.f32 %v3848, %v3849
        %v3857 = vadd.f32 %v3856, %v3850
        %v3858 = vadd.f32 %v3857, %v3851
        %v3859 = vadd.f32 %v3858, %v3852
        %v3860 = vadd.f32 %v3859, %v3853
        %v3861 = vadd.f32 %v3860, %v3854
        %v3862 = vadd.f32 %v3861, %v3855
        %v3863 = vrot.slane %v3862, 4
        %v3864 = vadd.f32 %v3862, %v3863
        %v3865 = vrot.slane %v3864, 2
        %v3866 = vadd.f32 %v3864, %v3865
        %v3867 = vrot.slane %v3866, 1
        %v3868 = vadd.f32 %v3866, %v3867
        %v3869 = vmul.f32 %v3868, 0.015625
        %v3870 = vld [vmem:[%s6] sm:$0xff]
        %v3871 = vld [vmem:[%s6 + $0x8] sm:$0xff]
        %v3872 = vld [vmem:[%s6 + $0x10] sm:$0xff]
        %v3873 = vld [vmem:[%s6 + $0x18] sm:$0xff]
        %v3874 = vld [vmem:[%s6 + $0x20] sm:$0xff]
        %v3875 = vld [vmem:[%s6 + $0x28] sm:$0xff]
        %v3876 = vld [vmem:[%s6 + $0x30] sm:$0xff]
        %v3877 = vld [vmem:[%s6 + $0x38] sm:$0xff]
        %v3878 = vld [vmem:[%s6 + $0x40] sm:$0xff]
        %v3879 = vld [vmem:[%s6 + $0x48] sm:$0xff]
        %v3880 = vld [vmem:[%s6 + $0x50] sm:$0xff]
        %v3881 = vld [vmem:[%s6 + $0x58] sm:$0xff]
        %v3882 = vld [vmem:[%s6 + $0x60] sm:$0xff]
        %v3883 = vld [vmem:[%s6 + $0x68] sm:$0xff]
        %v3884 = vld [vmem:[%s6 + $0x70] sm:$0xff]
        %v3885 = vld [vmem:[%s6 + $0x78] sm:$0xff]
        %v3886 = vld [vmem:[%s7] sm:$0x1]
        %3887 = vmatprep.subr.mxu0 0.0
        %3888 = vmatpush1.msra.mxu0 %v3870
        %3889 = vmatprep.subr.mxu0 0.0
        %3890 = vmatpush1.msra.mxu0 %v3871
        %3891 = vmatprep.subr.mxu0 0.0
        %3892 = vmatpush1.msra.mxu0 %v3872
        %3893 = vmatprep.subr.mxu0 0.0
        %3894 = vmatpush1.msra.mxu0 %v3873
        %3895 = vmatprep.subr.mxu0 0.0
        %3896 = vmatpush1.msra.mxu0 %v3874
        %3897 = vmatprep.subr.mxu0 0.0
        %3898 = vmatpush1.msra.mxu0 %v3875
        %3899 = vmatprep.subr.mxu0 0.0
        %3900 = vmatpush1.msra.mxu0 %v3876
        %3901 = vmatprep.subr.mxu0 0.0
        %3902 = vmatpush1.msra.mxu0 %v3877
        %3903 = vmatprep.subr.mxu0 0.0
        %3904 = vmatpush1.msra.mxu0 %v3878
        %3905 = vmatprep.subr.mxu0 0.0
        %3906 = vmatpush1.msra.mxu0 %v3879
        %3907 = vmatprep.subr.mxu0 0.0
        %3908 = vmatpush1.msra.mxu0 %v3880
        %3909 = vmatprep.subr.mxu0 0.0
        %3910 = vmatpush1.msra.mxu0 %v3881
        %3911 = vmatprep.subr.mxu0 0.0
        %3912 = vmatpush1.msra.mxu0 %v3882
        %3913 = vmatprep.subr.mxu0 0.0
        %3914 = vmatpush1.msra.mxu0 %v3883
        %3915 = vmatprep.subr.mxu0 0.0
        %3916 = vmatpush1.msra.mxu0 %v3884
        %3917 = vmatprep.subr.mxu0 0.0
        %3918 = vmatpush1.msra.mxu0 %v3885
        %3919 = vmatprep.subr.mxu0 0.0
        %3920 = vmatpush1.msra.mxu0 0.0
        %3921 = vmatprep.subr.mxu0 0.0
        %3922 = vmatpush1.msra.mxu0 0.0
        %3923 = vmatprep.subr.mxu0 0.0
        %3924 = vmatpush1.msra.mxu0 0.0
        %3925 = vmatprep.subr.mxu0 0.0
        %3926 = vmatpush1.msra.mxu0 0.0
        %3927 = vmatprep.subr.mxu0 0.0
        %3928 = vmatpush1.msra.mxu0 0.0
        %3929 = vmatprep.subr.mxu0 0.0
        %3930 = vmatpush1.msra.mxu0 0.0
        %3931 = vmatprep.subr.mxu0 0.0
        %3932 = vmatpush1.msra.mxu0 0.0
        %3933 = vmatprep.subr.mxu0 0.0
        %3934 = vmatpush1.msra.mxu0 0.0
        %3935 = vmatprep.subr.mxu0 0.0
        %3936 = vmatpush1.msra.mxu0 0.0
        %3937 = vmatprep.subr.mxu0 0.0
        %3938 = vmatpush1.msra.mxu0 0.0
        %3939 = vmatprep.subr.mxu0 0.0
        %3940 = vmatpush1.msra.mxu0 0.0
        %3941 = vmatprep.subr.mxu0 0.0
        %3942 = vmatpush1.msra.mxu0 0.0
        %3943 = vmatprep.subr.mxu0 0.0
        %3944 = vmatpush1.msra.mxu0 0.0
        %3945 = vmatprep.subr.mxu0 0.0
        %3946 = vmatpush1.msra.mxu0 0.0
        %3947 = vmatprep.subr.mxu0 0.0
        %3948 = vmatpush1.msra.mxu0 0.0
        %3949 = vmatprep.subr.mxu0 0.0
        %3950 = vmatpush1.msra.mxu0 0.0
        %3951 = vmatprep.mubr.f32.mxu0 0.0
        %3952 = vmatmul.mubr.f32.gmra.mrb[0].mxu0 %v3869
        %v3953 = vpop.f32.mrb[0].mxu0
        %v3954 = vadd.f32 %v3886, %v3953
        %v3955 = vpop.f32.mrb[0].mxu0
        %3956 = vdwg.mxu0
        %v3957 = vmax.f32 %v3954, 0.0
        %v3958 = vld [vmem:[%s8] sm:$0xff]
        %v3959 = vld [vmem:[%s9] sm:$0x1]
        %vm3960 = vcmask 64512
        %v3962 = vsel %vm3960, %v3957, 0
        %3964 = vmatprep.subr.mxu0 0.0
        %3965 = vmatpush1.msra.mxu0 %v3958
        %3966 = vmatprep.subr.mxu0 0.0
        %3967 = vmatpush1.msra.mxu0 0.0
        %3968 = vmatprep.subr.mxu0 0.0
        %3969 = vmatpush1.msra.mxu0 0.0
        %3970 = vmatprep.subr.mxu0 0.0
        %3971 = vmatpush1.msra.mxu0 0.0
        %3972 = vmatprep.subr.mxu0 0.0
        %3973 = vmatpush1.msra.mxu0 0.0
        %3974 = vmatprep.subr.mxu0 0.0
        %3975 = vmatpush1.msra.mxu0 0.0
        %3976 = vmatprep.subr.mxu0 0.0
        %3977 = vmatpush1.msra.mxu0 0.0
        %3978 = vmatprep.subr.mxu0 0.0
        %3979 = vmatpush1.msra.mxu0 0.0
        %3980 = vmatprep.subr.mxu0 0.0
        %3981 = vmatpush1.msra.mxu0 0.0
        %3982 = vmatprep.subr.mxu0 0.0
        %3983 = vmatpush1.msra.mxu0 0.0
        %3984 = vmatprep.subr.mxu0 0.0
        %3985 = vmatpush1.msra.mxu0 0.0
        %3986 = vmatprep.subr.mxu0 0.0
        %3987 = vmatpush1.msra.mxu0 0.0
        %3988 = vmatprep.subr.mxu0 0.0
        %3989 = vmatpush1.msra.mxu0 0.0
        %3990 = vmatprep.subr.mxu0 0.0
        %3991 = vmatpush1.msra.mxu0 0.0
        %3992 = vmatprep.subr.mxu0 0.0
        %3993 = vmatpush1.msra.mxu0 0.0
        %3994 = vmatprep.subr.mxu0 0.0
        %3995 = vmatpush1.msra.mxu0 0.0
        %3996 = vmatprep.subr.mxu0 0.0
        %3997 = vmatpush1.msra.mxu0 0.0
        %3998 = vmatprep.subr.mxu0 0.0
        %3999 = vmatpush1.msra.mxu0 0.0
        %4000 = vmatprep.subr.mxu0 0.0
        %4001 = vmatpush1.msra.mxu0 0.0
        %4002 = vmatprep.subr.mxu0 0.0
        %4003 = vmatpush1.msra.mxu0 0.0
        %4004 = vmatprep.subr.mxu0 0.0
        %4005 = vmatpush1.msra.mxu0 0.0
        %4006 = vmatprep.subr.mxu0 0.0
        %4007 = vmatpush1.msra.mxu0 0.0
        %4008 = vmatprep.subr.mxu0 0.0
        %4009 = vmatpush1.msra.mxu0 0.0
        %4010 = vmatprep.subr.mxu0 0.0
        %4011 = vmatpush1.msra.mxu0 0.0
        %4012 = vmatprep.subr.mxu0 0.0
        %4013 = vmatpush1.msra.mxu0 0.0
        %4014 = vmatprep.subr.mxu0 0.0
        %4015 = vmatpush1.msra.mxu0 0.0
        %4016 = vmatprep.subr.mxu0 0.0
        %4017 = vmatpush1.msra.mxu0 0.0
        %4018 = vmatprep.subr.mxu0 0.0
        %4019 = vmatpush1.msra.mxu0 0.0
        %4020 = vmatprep.subr.mxu0 0.0
        %4021 = vmatpush1.msra.mxu0 0.0
        %4022 = vmatprep.subr.mxu0 0.0
        %4023 = vmatpush1.msra.mxu0 0.0
        %4024 = vmatprep.subr.mxu0 0.0
        %4025 = vmatpush1.msra.mxu0 0.0
        %4026 = vmatprep.subr.mxu0 0.0
        %4027 = vmatpush1.msra.mxu0 0.0
        %4028 = vmatprep.mubr.f32.mxu0 0.0
        %4029 = vmatmul.mubr.f32.gmra.mrb[0].mxu0 %v3962
        %v4030 = vpop.f32.mrb[0].mxu0
        %v4031 = vadd.f32 %v3959, %v4030
        %v4032 = vpop.f32.mrb[0].mxu0
        %4033 = vdwg.mxu0
        %v4034 = vxor.u32 %v4031, 2147483648
        %v4035 = vmul.f32 %v4034, 1.442695
        %v4036 = vpow.pop %v4035
        %v4037 = vadd.f32 %v4036, 1.0
        %v4038 = vrcp.pop %v4037
        %v4039 = vmul.f32 1.0, %v4038
        %v4040 = vlaneseq
        %v4041 = vshrl.u32 %v4040, 7
        %v4042 = vsub.s32 0, %v4041
        %v4043 = vrot.slane %v4039, %v4042
        %v4044 = vmul.f32 %v3848, %v4043
        %v4045 = vmul.f32 %v3849, %v4043
        %v4046 = vmul.f32 %v3850, %v4043
        %v4047 = vmul.f32 %v3851, %v4043
        %v4048 = vmul.f32 %v3852, %v4043
        %v4049 = vmul.f32 %v3853, %v4043
        %v4050 = vmul.f32 %v3854, %v4043
        %v4051 = vmul.f32 %v3855, %v4043
        %4052 = vst [vmem:[%s353] sm:$0xff] %v4044
        %4053 = vst [vmem:[%s353 + $0x8] sm:$0xff] %v4045
        %4054 = vst [vmem:[%s353 + $0x10] sm:$0xff] %v4046
        %4055 = vst [vmem:[%s353 + $0x18] sm:$0xff] %v4047
        %4056 = vst [vmem:[%s353 + $0x20] sm:$0xff] %v4048
        %4057 = vst [vmem:[%s353 + $0x28] sm:$0xff] %v4049
        %4058 = vst [vmem:[%s353 + $0x30] sm:$0xff] %v4050
        %4059 = vst [vmem:[%s353 + $0x38] sm:$0xff] %v4051
        %s4060 = sand.u32 %s248, 1
        %s4061 = scalar_lea.sflag [#allocation6], %s4060
        %s4062 = sand.u32 %s248, 1
        %s4063 = smul.addr %s4062, 64
        %s4064 = scalar_lea.vmem [#allocation5], %s4063
        // Predicated region
        $region61: #{tpu_custom_call.1} parent=59 // pred_check
          %p4065 = pneg %p258
        $region62: #{tpu_custom_call.1} parent=59 // pred_check_branch
          %4067 = sbr.rel (%p4065) target = $region64
        $region63: #{tpu_custom_call.1} parent=59 // pred_region
          %s4069 = ssub.s32 1024, 1024
          %4070 = vsyncadd %s4061, %s4069
          %s4071 = smul.addr %s25, 8
          %s4072 = smul.addr %s4071, 128
          %s4073 = scalar_lea.hbm %s10, %s4072
          %s4074 = sshll.u32 %s4064, 4
          %s4075 = int_to_ptr.vmem [resolvable:$true] %s4074
          %4080 = dma.vmem_to_hbm [thread:$0]  %s4075, 1024, %s4073, %s4061, 128, 128, 8
        $region64: #{tpu_custom_call.1} parent=59 // pred_fallthru
          _
      $region60: #{tpu_custom_call.1} parent=5 // pred_fallthru
        _
      %p4081 = scmp.le.s32.totalorder 2, %s20
      // Predicated region
      $region65: #{tpu_custom_call.1} parent=5 // pred_check
        %p4082 = pneg %p4081
      $region66: #{tpu_custom_call.1} parent=5 // pred_check_branch
        %4084 = sbr.rel (%p4082) target = $region68
      $region67: #{tpu_custom_call.1} parent=5 // pred_region
        %s4085 = ssub.s32 %s20, 2
        // Predicated region
        $region69: #{tpu_custom_call.1} parent=67 // pred_check
          %p4086 = pneg %p264
        $region70: #{tpu_custom_call.1} parent=67 // pred_check_branch
          %4088 = sbr.rel (%p4086) target = $region72
        $region71: #{tpu_custom_call.1} parent=67 // pred_region
          %s4089 = sand.u32 %s249, 1
          %s4090 = scalar_lea.sflag [#allocation6], %s4089
          %s4091 = sand.u32 %s249, 1
          %s4092 = smul.addr %s4091, 64
          %s4093 = scalar_lea.vmem [#allocation5], %s4092
          %4094 = dma.done %s4090, 1024
        $region72: #{tpu_custom_call.1} parent=67 // pred_fallthru
          _
      $region68: #{tpu_custom_call.1} parent=5 // pred_fallthru
        _
    $region6: #{tpu_custom_call.1} parent=1 // loop_footer
      %s24 = sadd.s32 1, %s20
    $region7: #{tpu_custom_call.1} parent=1 // loop_footer_branch
      %19 = sbr.rel target = $region3
    $region8: #{tpu_custom_call.1} parent=1 // loop_exit
      _
    %4095 = vsyncpa [#allocation6], 1
    %s4096 = scalar_lea.sflag [#allocation6], 1
    %4097 = vsyncpa %s4096, 1

</llo_original>
